<compile_context>
chip_gen: v6e
topology: v6e:2x2x1
jax: 0.10.0
libtpu: 0.0.40
codegen_flags: <defaults>
</compile_context>

<pallas_src>
import functools

import jax
import jax.numpy as jnp
from jax.experimental import pallas as pl
from jax.experimental.pallas import tpu as pltpu

EPS = 1e-5
LANE = 128
STAT_ROWS = 8          # sublane-aligned stats block; rows 0..3 used


def _round_up(n, m):
    return (n + m - 1) // m * m


def _pad_axis(a, axis, size):
    pads = [(0, 0)] * a.ndim
    pads[axis] = (0, size - a.shape[axis])
    return jnp.pad(a, pads)


def _vmem_limit_bytes():
    # v5e/v6e (128 MiB physical) -> 64 MiB scoped; v7x (64 MiB) -> 48 MiB cap.
    try:
        cap = getattr(pltpu.get_tpu_info(), "vmem_capacity_bytes", None)
        if cap is None:
            return 48 * 1024 * 1024
        return min(64 * 1024 * 1024, int(cap) * 3 // 4)
    except Exception:
        return 48 * 1024 * 1024


_VMEM_LIMIT = None


def _cparams():
    global _VMEM_LIMIT
    if _VMEM_LIMIT is None:
        _VMEM_LIMIT = _vmem_limit_bytes()
    return pltpu.CompilerParams(
        dimension_semantics=("parallel",),
        vmem_limit_bytes=_VMEM_LIMIT,
    )


def _resident(shape):
    """BlockSpec for an operand held resident in VMEM for the whole grid
    (constant index map, single buffer -> no wasted double-buffer copy)."""
    return pl.BlockSpec(shape, lambda i: (0,) * len(shape),
                        pipeline_mode=pl.Buffered(1))


# ---------------------------------------------------------------------------
# Pallas kernels
# ---------------------------------------------------------------------------
def _conv3x3_stats_kernel(*args, stride, nb, ho, wo, with_proj):
    """Pass-1 of a 3x3 conv: 9 shifted matmuls into an f32 VMEM accumulator,
    bf16 y out, per-block sum / sum-of-squares (plus fused shortcut stats)."""
    n_x = 1 if stride == 1 else 4
    x_refs = args[:n_x]
    if with_proj:
        w_ref, xs_ref, ws_ref, y_ref, st_ref, acc_ref = args[n_x:]
    else:
        w_ref, y_ref, st_ref, acc_ref = args[n_x:]
    cin = x_refs[0].shape[-1]
    cout = w_ref.shape[-1]
    rows = nb * ho * wo

    acc_ref[...] = jnp.zeros_like(acc_ref)
    for dy in range(3):
        for dx in range(3):
            if stride == 1:
                slab = x_refs[0][:, dy:dy + ho, dx:dx + wo, :]
            else:  # stride 2: read from the matching space-to-depth phase
                ph = x_refs[2 * (dy % 2) + (dx % 2)]
                slab = ph[:, dy // 2:dy // 2 + ho, dx // 2:dx // 2 + wo, :]
            acc_ref[...] += jnp.dot(slab.reshape(rows, cin), w_ref[dy, dx],
                                    preferred_element_type=jnp.float32)

    acc = acc_ref[...]
    y_ref[...] = acc.reshape(nb, ho * wo, cout).astype(y_ref.dtype)
    # Write only the stats rows we need (rows 4..7 / 2..7 stay untouched).
    st_ref[0, 0:1, :] = jnp.sum(acc, axis=0, keepdims=True)
    st_ref[0, 1:2, :] = jnp.sum(acc * acc, axis=0, keepdims=True)

    if with_proj:
        ys = jnp.dot(xs_ref[...].reshape(rows, xs_ref.shape[-1]), ws_ref[...],
                     preferred_element_type=jnp.float32)
        st_ref[0, 2:3, :] = jnp.sum(ys, axis=0, keepdims=True)
        st_ref[0, 3:4, :] = jnp.sum(ys * ys, axis=0, keepdims=True)


def _bn_relu_pad_kernel(y_ref, sc_ref, sh_ref, o_ref, *, nb, ho, wo):
    """out1 = relu(y1 * scale + shift), written into a zero-padded NHWC image
    (bf16) so conv2 can consume it directly (no separate pad pass)."""
    cp = y_ref.shape[-1]
    val = y_ref[...].astype(jnp.float32) * sc_ref[...] + sh_ref[...]
    val = jnp.maximum(val, 0.0).astype(o_ref.dtype)
    o_ref[...] = jnp.zeros((nb, ho + 2, wo + 2, cp), o_ref.dtype)
    o_ref[:, 1:1 + ho, 1:1 + wo, :] = val.reshape(nb, ho, wo, cp)


def _epilogue_proj_kernel(y_ref, xs_ref, ws_ref, sc2_ref, sh2_ref,
                          scs_ref, shs_ref, o_ref):
    """out = relu(BN2(y2) + BN_s(xs @ Ws)); shortcut matmul recomputed in-tile."""
    nb, ms, cp = y_ref.shape
    main = y_ref[...].astype(jnp.float32) * sc2_ref[...] + sh2_ref[...]
    ys = jnp.dot(xs_ref[...].reshape(nb * ms, xs_ref.shape[-1]), ws_ref[...],
                 preferred_element_type=jnp.float32).reshape(nb, ms, cp)
    short = ys * scs_ref[...] + shs_ref[...]
    o_ref[...] = jnp.maximum(main + short, 0.0).astype(o_ref.dtype)


def _epilogue_id_kernel(y_ref, r_ref, sc_ref, sh_ref, o_ref):
    """out = relu(BN2(y2) + identity residual (bf16))."""
    main = y_ref[...].astype(jnp.float32) * sc_ref[...] + sh_ref[...]
    o_ref[...] = jnp.maximum(main + r_ref[...].astype(jnp.float32),
                             0.0).astype(o_ref.dtype)


# ---------------------------------------------------------------------------
# pallas_call wrappers (1-D per-sample-block grid)
# ---------------------------------------------------------------------------
def conv3x3_stats(x_imgs, w, *, stride, nb, ho, wo, xs=None, ws=None):
    n = x_imgs[0].shape[0]
    nblk = n // nb
    cout = w.shape[-1]
    cin = w.shape[2]
    with_proj = xs is not None
    rows = nb * ho * wo

    in_specs = [pl.BlockSpec((nb,) + xi.shape[1:], lambda i: (i, 0, 0, 0))
                for xi in x_imgs]
    args = list(x_imgs)
    in_specs.append(_resident(w.shape))
    args.append(w)
    if with_proj:
        in_specs.append(pl.BlockSpec((nb, ho * wo, xs.shape[-1]),
                                     lambda i: (i, 0, 0)))
        args.append(xs)
        in_specs.append(_resident(ws.shape))
        args.append(ws)

    flops = 2 * n * ho * wo * cout * (9 * cin + (xs.shape[-1] if with_proj else 0))
    bytes_acc = sum(int(xi.size) for xi in x_imgs) * 2 + int(w.size) * 2 \
        + n * ho * wo * cout * 2
    if with_proj:
        bytes_acc += int(xs.size) * 2 + int(ws.size) * 2

    kern = functools.partial(_conv3x3_stats_kernel, stride=stride, nb=nb,
                             ho=ho, wo=wo, with_proj=with_proj)
    y, st = pl.pallas_call(
        kern,
        out_shape=(jax.ShapeDtypeStruct((n, ho * wo, cout), jnp.bfloat16),
                   jax.ShapeDtypeStruct((nblk, STAT_ROWS, cout), jnp.float32)),
        grid=(nblk,),
        in_specs=in_specs,
        out_specs=(pl.BlockSpec((nb, ho * wo, cout), lambda i: (i, 0, 0)),
                   pl.BlockSpec((1, STAT_ROWS, cout), lambda i: (i, 0, 0))),
        scratch_shapes=[pltpu.VMEM((rows, cout), jnp.float32)],
        compiler_params=_cparams(),
        cost_estimate=pl.CostEstimate(flops=flops, transcendentals=0,
                                      bytes_accessed=bytes_acc),
    )(*args)

    s = jnp.sum(st[:, 0, :], axis=0)
    q = jnp.sum(st[:, 1, :], axis=0)
    if with_proj:
        ss = jnp.sum(st[:, 2, :], axis=0)
        qs = jnp.sum(st[:, 3, :], axis=0)
        return y, s, q, ss, qs
    return y, s, q


def bn_relu_pad(y, scale, shift, *, nb, ho, wo):
    n, ms, cp = y.shape
    nblk = n // nb
    return pl.pallas_call(
        functools.partial(_bn_relu_pad_kernel, nb=nb, ho=ho, wo=wo),
        out_shape=jax.ShapeDtypeStruct((n, ho + 2, wo + 2, cp), jnp.bfloat16),
        grid=(nblk,),
        in_specs=[pl.BlockSpec((nb, ms, cp), lambda i: (i, 0, 0)),
                  _resident((1, cp)), _resident((1, cp))],
        out_specs=pl.BlockSpec((nb, ho + 2, wo + 2, cp), lambda i: (i, 0, 0, 0)),
        compiler_params=_cparams(),
        cost_estimate=pl.CostEstimate(
            flops=3 * n * ms * cp, transcendentals=0,
            bytes_accessed=n * ms * cp * 2 + n * (ho + 2) * (wo + 2) * cp * 2),
    )(y, scale, shift)


def epilogue_proj(y2, xs, ws, sc2, sh2, scs, shs, *, nb):
    n, ms, cp = y2.shape
    cin = xs.shape[-1]
    nblk = n // nb
    return pl.pallas_call(
        _epilogue_proj_kernel,
        out_shape=jax.ShapeDtypeStruct((n, ms, cp), jnp.bfloat16),
        grid=(nblk,),
        in_specs=[pl.BlockSpec((nb, ms, cp), lambda i: (i, 0, 0)),
                  pl.BlockSpec((nb, ms, cin), lambda i: (i, 0, 0)),
                  _resident(ws.shape),
                  _resident((1, cp)), _resident((1, cp)),
                  _resident((1, cp)), _resident((1, cp))],
        out_specs=pl.BlockSpec((nb, ms, cp), lambda i: (i, 0, 0)),
        compiler_params=_cparams(),
        cost_estimate=pl.CostEstimate(
            flops=2 * n * ms * cin * cp + 6 * n * ms * cp, transcendentals=0,
            bytes_accessed=(n * ms * (2 * cp + cin) + cin * cp) * 2),
    )(y2, xs, ws, sc2, sh2, scs, shs)


def epilogue_identity(y2, res, sc2, sh2, *, nb):
    n, ms, cp = y2.shape
    nblk = n // nb
    return pl.pallas_call(
        _epilogue_id_kernel,
        out_shape=jax.ShapeDtypeStruct((n, ms, cp), jnp.bfloat16),
        grid=(nblk,),
        in_specs=[pl.BlockSpec((nb, ms, cp), lambda i: (i, 0, 0)),
                  pl.BlockSpec((nb, ms, cp), lambda i: (i, 0, 0)),
                  _resident((1, cp)), _resident((1, cp))],
        out_specs=pl.BlockSpec((nb, ms, cp), lambda i: (i, 0, 0)),
        compiler_params=_cparams(),
        cost_estimate=pl.CostEstimate(
            flops=4 * n * ms * cp, transcendentals=0,
            bytes_accessed=n * ms * cp * 6),
    )(y2, res, sc2, sh2)


# ---------------------------------------------------------------------------
# JAX-side glue (weight layout, BN coefficients, phase images)
# ---------------------------------------------------------------------------
def _weight_3x3(w_oihw, cinp, coutp):
    """(Cout, Cin, 3, 3) -> (3, 3, Cin_pad, Cout_pad), bf16."""
    w = jnp.transpose(w_oihw, (2, 3, 1, 0))
    w = jnp.pad(w, ((0, 0), (0, 0),
                    (0, cinp - w.shape[2]), (0, coutp - w.shape[3])))
    return w.astype(jnp.bfloat16)


def _weight_1x1(w_oihw, cinp, coutp):
    w = jnp.transpose(w_oihw[:, :, 0, 0], (1, 0))
    w = jnp.pad(w, ((0, cinp - w.shape[0]), (0, coutp - w.shape[1])))
    return w.astype(jnp.bfloat16)


def _bn_affine(sums, ssqs, count, gamma, beta, cpad):
    """Fold batch-stat BN into per-channel scale/shift (f32)."""
    mean = sums / count
    var = jnp.maximum(ssqs / count - mean * mean, 0.0)
    g = _pad_axis(gamma.astype(jnp.float32), 0, cpad)
    b = _pad_axis(beta.astype(jnp.float32), 0, cpad)
    scale = g * jax.lax.rsqrt(var + EPS)
    shift = b - mean * scale
    return scale.reshape(1, cpad), shift.reshape(1, cpad)


def _phase_images(xpad, ho, wo):
    """Space-to-depth phases of the zero-padded image for the stride-2 conv:
    phase[py,px][n, a, b, :] == xpad[n, 2a+py, 2b+px, :], each (N, ho+1, wo+1, C).
    Lets the kernel use only contiguous (unstrided) slices."""
    phases = []
    for py in range(2):
        for px in range(2):
            p = xpad[:, py::2, px::2, :][:, :ho + 1, :wo + 1, :]
            p = jnp.pad(p, ((0, 0), (0, ho + 1 - p.shape[1]),
                            (0, wo + 1 - p.shape[2]), (0, 0)))
            phases.append(p)
    return phases


def _pick_nb(n, ms, row_target=1024):
    """Samples per grid block: big tiles for HBM efficiency, but >= 2 grid
    steps so the 'parallel' axis can shard across v7x's two TensorCores."""
    nb = 1
    for cand in range(1, n + 1):
        if n % cand == 0 and cand * ms <= max(row_target, ms) \
                and n // cand >= min(n, 2):
            nb = cand
    return nb


# ---------------------------------------------------------------------------
# BasicBlock forward
# ---------------------------------------------------------------------------
def basic_block_forward(x_nchw, params, stride):
    x = jnp.transpose(x_nchw, (0, 2, 3, 1)).astype(jnp.float32)   # NCHW -> NHWC
    N, H, W, cin = x.shape
    planes = params["w1"].shape[0]
    cinp = _round_up(cin, LANE)
    cp = _round_up(planes, LANE)
    ho = (H - 1) // stride + 1
    wo = (W - 1) // stride + 1
    ms = ho * wo
    nb = _pick_nb(N, ms)

    x_bf = _pad_axis(x.astype(jnp.bfloat16), 3, cinp)             # (N,H,W,cinp)
    xpad = jnp.pad(x_bf, ((0, 0), (1, 1), (1, 1), (0, 0)))        # zero border

    # ---- conv1 (3x3, stride) + bn1 + relu -> zero-padded conv2 input ----
    w1 = _weight_3x3(params["w1"], cinp, cp)
    x_imgs = [xpad] if stride == 1 else _phase_images(xpad, ho, wo)
    y1, s1, q1 = conv3x3_stats(x_imgs, w1, stride=stride, nb=nb, ho=ho, wo=wo)
    sc1, sh1 = _bn_affine(s1, q1, N * ms, params["g1"], params["b1"], cp)
    out1_pad = bn_relu_pad(y1, sc1, sh1, nb=nb, ho=ho, wo=wo)

    # ---- conv2 (3x3, stride 1) + bn2 + shortcut + add + relu ----
    w2 = _weight_3x3(params["w2"], cp, cp)
    use_proj = (stride != 1) or (cin != planes)
    if use_proj:
        xs = x_bf[:, ::stride, ::stride, :][:, :ho, :wo, :].reshape(N, ms, cinp)
        ws = _weight_1x1(params["ws"], cinp, cp)
        y2, s2, q2, ss, qs = conv3x3_stats([out1_pad], w2, stride=1, nb=nb,
                                           ho=ho, wo=wo, xs=xs, ws=ws)
        sc2, sh2 = _bn_affine(s2, q2, N * ms, params["g2"], params["b2"], cp)
        scs, shs = _bn_affine(ss, qs, N * ms, params["gs"], params["bs"], cp)
        out = epilogue_proj(y2, xs, ws, sc2, sh2, scs, shs, nb=nb)
    else:
        y2, s2, q2 = conv3x3_stats([out1_pad], w2, stride=1, nb=nb, ho=ho, wo=wo)
        sc2, sh2 = _bn_affine(s2, q2, N * ms, params["g2"], params["b2"], cp)
        res = x_bf.reshape(N, ms, cinp)      # identity: cin==planes, stride==1
        out = epilogue_identity(y2, res, sc2, sh2, nb=nb)

    out_img = out[:, :, :planes].reshape(N, ho, wo, planes)
    return jnp.transpose(out_img, (0, 3, 1, 2)).astype(jnp.float32)


# ---------------------------------------------------------------------------
# Pure-JAX f32 reference (lax.conv), training-mode BN
# ---------------------------------------------------------------------------
def _ref_conv(x, w, stride, pad):
    return jax.lax.conv_general_dilated(
        x, w, (stride, stride), [(pad, pad), (pad, pad)],
        dimension_numbers=("NCHW", "OIHW", "NCHW"))


def _ref_bn(x, g, b):
    m = jnp.mean(x, axis=(0, 2, 3), keepdims=True)
    v = jnp.mean(jnp.square(x - m), axis=(0, 2, 3), keepdims=True)
    return (x - m) * jax.lax.rsqrt(v + EPS) * g.reshape(1, -1, 1, 1) \
        + b.reshape(1, -1, 1, 1)


def ref_forward(x_nchw, params, stride):
    planes = params["w1"].shape[0]
    out = jax.nn.relu(_ref_bn(_ref_conv(x_nchw, params["w1"], stride, 1),
                              params["g1"], params["b1"]))
    out = _ref_bn(_ref_conv(out, params["w2"], 1, 1), params["g2"], params["b2"])
    if stride != 1 or x_nchw.shape[1] != planes:
        sc = _ref_bn(_ref_conv(x_nchw, params["ws"], stride, 0),
                     params["gs"], params["bs"])
    else:
        sc = x_nchw
    return jax.nn.relu(out + sc)


# ---------------------------------------------------------------------------
if __name__ == "__main__":
    def make_params(key, in_planes, planes, with_proj):
        ks = jax.random.split(key, 10)
        p = {
            "w1": 0.1 * jax.random.normal(ks[0], (planes, in_planes, 3, 3), jnp.float32),
            "g1": 1.0 + 0.1 * jax.random.normal(ks[1], (planes,), jnp.float32),
            "b1": 0.1 * jax.random.normal(ks[2], (planes,), jnp.float32),
            "w2": 0.1 * jax.random.normal(ks[3], (planes, planes, 3, 3), jnp.float32),
            "g2": 1.0 + 0.1 * jax.random.normal(ks[4], (planes,), jnp.float32),
            "b2": 0.1 * jax.random.normal(ks[5], (planes,), jnp.float32),
        }
        if with_proj:
            p["ws"] = 0.1 * jax.random.normal(ks[6], (planes, in_planes, 1, 1), jnp.float32)
            p["gs"] = 1.0 + 0.1 * jax.random.normal(ks[7], (planes,), jnp.float32)
            p["bs"] = 0.1 * jax.random.normal(ks[8], (planes,), jnp.float32)
        return p, ks[9]

    # Tolerance reflects bf16 MXU operands and bf16 intermediates
    # (all accumulation / BN math is f32).
    ATOL = RTOL = 4e-2

    def check(N, in_planes, planes, H, W, stride, seed):
        params, xkey = make_params(jax.random.PRNGKey(seed), in_planes, planes,
                                   stride != 1 or in_planes != planes)
        x = jax.random.normal(xkey, (N, in_planes, H, W), jnp.float32)
        out = jax.block_until_ready(basic_block_forward(x, params, stride))
        ref = jax.block_until_ready(ref_forward(x, params, stride))
        assert out.shape == ref.shape, (out.shape, ref.shape)
        assert bool(jnp.allclose(out, ref, atol=ATOL, rtol=RTOL)), \
            float(jnp.max(jnp.abs(out - ref)))

    # 1) projection shortcut via channel change (in_planes != planes), stride 1
    check(N=2, in_planes=4, planes=8, H=16, W=16, stride=1, seed=0)
    # 2) identity shortcut (in_planes == planes, stride 1)
    check(N=2, in_planes=8, planes=8, H=16, W=16, stride=1, seed=1)
    # 3) projection shortcut via stride 2 (spatial downsampling)
    check(N=2, in_planes=8, planes=8, H=16, W=16, stride=2, seed=2)

    print("KERNEL_OK")
</pallas_src>

<mosaic_0001>
module attributes {stable_mosaic.version = 11 : i64} {
  func.func @_conv3x3_stats_kernel(%arg0: i32, %arg1: memref<1x18x18x128xbf16, #tpu.memory_space<vmem>>, %arg2: memref<3x3x128x128xbf16, #tpu.memory_space<vmem>>, %arg3: memref<1x256x128xbf16, #tpu.memory_space<vmem>>, %arg4: memref<1x8x128xf32, #tpu.memory_space<vmem>>, %arg5: memref<256x128xf32, #tpu.memory_space<vmem>>) attributes {dimension_semantics = [#tpu.dimension_semantics<parallel>], iteration_bounds = array<i64: 2>, scalar_prefetch = 0 : i64, scratch_operands = 1 : i64, tpu.core_type = #tpu.core_type<tc>, window_params = [{transform_indices = @transform_0, window_bounds = array<i64: 1, 18, 18, 128>}, {pipeline_mode = #tpu.pipeline_mode<synchronous>, transform_indices = @transform_1, window_bounds = array<i64: 3, 3, 128, 128>}, {transform_indices = @transform_2, window_bounds = array<i64: 1, 256, 128>}, {transform_indices = @transform_3, window_bounds = array<i64: 1, 8, 128>}]} {
    %cst = arith.constant 0.000000e+00 : f32
    %0 = vector.broadcast %cst : f32 to vector<256x128xf32>
    %c0 = arith.constant 0 : index
    %c0_0 = arith.constant 0 : index
    %1 = vector.load %arg5[%c0, %c0_0] : memref<256x128xf32, #tpu.memory_space<vmem>>, vector<256x128xf32>
    tpu.vector_store %arg5[%c0, %c0_0], %0 {strides = array<i32>} : memref<256x128xf32, #tpu.memory_space<vmem>>, vector<256x128xf32>,
    %c0_1 = arith.constant 0 : index
    %c0_2 = arith.constant 0 : index
    %c0_3 = arith.constant 0 : index
    %c0_4 = arith.constant 0 : index
    %2 = vector.load %arg1[%c0_1, %c0_2, %c0_3, %c0_4] : memref<1x18x18x128xbf16, #tpu.memory_space<vmem>>, vector<1x16x16x128xbf16>
    %c0_5 = arith.constant 0 : index
    %c0_6 = arith.constant 0 : index
    %3 = vector.load %arg5[%c0_5, %c0_6] : memref<256x128xf32, #tpu.memory_space<vmem>>, vector<256x128xf32>
    %4 = vector.shape_cast %2 : vector<1x16x16x128xbf16> to vector<256x128xbf16>
    %c0_7 = arith.constant 0 : index
    %c0_8 = arith.constant 0 : index
    %c0_9 = arith.constant 0 : index
    %c0_10 = arith.constant 0 : index
    %5 = vector.load %arg2[%c0_7, %c0_8, %c0_9, %c0_10] : memref<3x3x128x128xbf16, #tpu.memory_space<vmem>>, vector<1x1x128x128xbf16>
    %6 = vector.shape_cast %5 : vector<1x1x128x128xbf16> to vector<128x128xbf16>
    %cst_11 = arith.constant dense<0.000000e+00> : vector<256x128xf32>
    %7 = tpu.matmul %4, %6, %cst_11 {dimension_numbers = #tpu.dot_dimension_numbers<[1], [0], [0], [1], [0, 0, 1, 1], [], []>} : vector<256x128xbf16>, vector<128x128xbf16>, vector<256x128xf32> -> vector<256x128xf32>
    %8 = arith.addf %3, %7 : vector<256x128xf32>
    %c0_12 = arith.constant 0 : index
    %c0_13 = arith.constant 0 : index
    %9 = vector.load %arg5[%c0_12, %c0_13] : memref<256x128xf32, #tpu.memory_space<vmem>>, vector<256x128xf32>
    tpu.vector_store %arg5[%c0_12, %c0_13], %8 {strides = array<i32>} : memref<256x128xf32, #tpu.memory_space<vmem>>, vector<256x128xf32>,
    %c0_14 = arith.constant 0 : index
    %c0_15 = arith.constant 0 : index
    %c1 = arith.constant 1 : index
    %c0_16 = arith.constant 0 : index
    %10 = vector.load %arg1[%c0_14, %c0_15, %c1, %c0_16] : memref<1x18x18x128xbf16, #tpu.memory_space<vmem>>, vector<1x16x16x128xbf16>
    %c0_17 = arith.constant 0 : index
    %c0_18 = arith.constant 0 : index
    %11 = vector.load %arg5[%c0_17, %c0_18] : memref<256x128xf32, #tpu.memory_space<vmem>>, vector<256x128xf32>
    %12 = vector.shape_cast %10 : vector<1x16x16x128xbf16> to vector<256x128xbf16>
    %c0_19 = arith.constant 0 : index
    %c1_20 = arith.constant 1 : index
    %c0_21 = arith.constant 0 : index
    %c0_22 = arith.constant 0 : index
    %13 = vector.load %arg2[%c0_19, %c1_20, %c0_21, %c0_22] : memref<3x3x128x128xbf16, #tpu.memory_space<vmem>>, vector<1x1x128x128xbf16>
    %14 = vector.shape_cast %13 : vector<1x1x128x128xbf16> to vector<128x128xbf16>
    %cst_23 = arith.constant dense<0.000000e+00> : vector<256x128xf32>
    %15 = tpu.matmul %12, %14, %cst_23 {dimension_numbers = #tpu.dot_dimension_numbers<[1], [0], [0], [1], [0, 0, 1, 1], [], []>} : vector<256x128xbf16>, vector<128x128xbf16>, vector<256x128xf32> -> vector<256x128xf32>
    %16 = arith.addf %11, %15 : vector<256x128xf32>
    %c0_24 = arith.constant 0 : index
    %c0_25 = arith.constant 0 : index
    %17 = vector.load %arg5[%c0_24, %c0_25] : memref<256x128xf32, #tpu.memory_space<vmem>>, vector<256x128xf32>
    tpu.vector_store %arg5[%c0_24, %c0_25], %16 {strides = array<i32>} : memref<256x128xf32, #tpu.memory_space<vmem>>, vector<256x128xf32>,
    %c0_26 = arith.constant 0 : index
    %c0_27 = arith.constant 0 : index
    %c2 = arith.constant 2 : index
    %c0_28 = arith.constant 0 : index
    %18 = vector.load %arg1[%c0_26, %c0_27, %c2, %c0_28] : memref<1x18x18x128xbf16, #tpu.memory_space<vmem>>, vector<1x16x16x128xbf16>
    %c0_29 = arith.constant 0 : index
    %c0_30 = arith.constant 0 : index
    %19 = vector.load %arg5[%c0_29, %c0_30] : memref<256x128xf32, #tpu.memory_space<vmem>>, vector<256x128xf32>
    %20 = vector.shape_cast %18 : vector<1x16x16x128xbf16> to vector<256x128xbf16>
    %c0_31 = arith.constant 0 : index
    %c2_32 = arith.constant 2 : index
    %c0_33 = arith.constant 0 : index
    %c0_34 = arith.constant 0 : index
    %21 = vector.load %arg2[%c0_31, %c2_32, %c0_33, %c0_34] : memref<3x3x128x128xbf16, #tpu.memory_space<vmem>>, vector<1x1x128x128xbf16>
    %22 = vector.shape_cast %21 : vector<1x1x128x128xbf16> to vector<128x128xbf16>
    %cst_35 = arith.constant dense<0.000000e+00> : vector<256x128xf32>
    %23 = tpu.matmul %20, %22, %cst_35 {dimension_numbers = #tpu.dot_dimension_numbers<[1], [0], [0], [1], [0, 0, 1, 1], [], []>} : vector<256x128xbf16>, vector<128x128xbf16>, vector<256x128xf32> -> vector<256x128xf32>
    %24 = arith.addf %19, %23 : vector<256x128xf32>
    %c0_36 = arith.constant 0 : index
    %c0_37 = arith.constant 0 : index
    %25 = vector.load %arg5[%c0_36, %c0_37] : memref<256x128xf32, #tpu.memory_space<vmem>>, vector<256x128xf32>
    tpu.vector_store %arg5[%c0_36, %c0_37], %24 {strides = array<i32>} : memref<256x128xf32, #tpu.memory_space<vmem>>, vector<256x128xf32>,
    %c0_38 = arith.constant 0 : index
    %c1_39 = arith.constant 1 : index
    %c0_40 = arith.constant 0 : index
    %c0_41 = arith.constant 0 : index
    %26 = vector.load %arg1[%c0_38, %c1_39, %c0_40, %c0_41] : memref<1x18x18x128xbf16, #tpu.memory_space<vmem>>, vector<1x16x16x128xbf16>
    %c0_42 = arith.constant 0 : index
    %c0_43 = arith.constant 0 : index
    %27 = vector.load %arg5[%c0_42, %c0_43] : memref<256x128xf32, #tpu.memory_space<vmem>>, vector<256x128xf32>
    %28 = vector.shape_cast %26 : vector<1x16x16x128xbf16> to vector<256x128xbf16>
    %c1_44 = arith.constant 1 : index
    %c0_45 = arith.constant 0 : index
    %c0_46 = arith.constant 0 : index
    %c0_47 = arith.constant 0 : index
    %29 = vector.load %arg2[%c1_44, %c0_45, %c0_46, %c0_47] : memref<3x3x128x128xbf16, #tpu.memory_space<vmem>>, vector<1x1x128x128xbf16>
    %30 = vector.shape_cast %29 : vector<1x1x128x128xbf16> to vector<128x128xbf16>
    %cst_48 = arith.constant dense<0.000000e+00> : vector<256x128xf32>
    %31 = tpu.matmul %28, %30, %cst_48 {dimension_numbers = #tpu.dot_dimension_numbers<[1], [0], [0], [1], [0, 0, 1, 1], [], []>} : vector<256x128xbf16>, vector<128x128xbf16>, vector<256x128xf32> -> vector<256x128xf32>
    %32 = arith.addf %27, %31 : vector<256x128xf32>
    %c0_49 = arith.constant 0 : index
    %c0_50 = arith.constant 0 : index
    %33 = vector.load %arg5[%c0_49, %c0_50] : memref<256x128xf32, #tpu.memory_space<vmem>>, vector<256x128xf32>
    tpu.vector_store %arg5[%c0_49, %c0_50], %32 {strides = array<i32>} : memref<256x128xf32, #tpu.memory_space<vmem>>, vector<256x128xf32>,
    %c0_51 = arith.constant 0 : index
    %c1_52 = arith.constant 1 : index
    %c1_53 = arith.constant 1 : index
    %c0_54 = arith.constant 0 : index
    %34 = vector.load %arg1[%c0_51, %c1_52, %c1_53, %c0_54] : memref<1x18x18x128xbf16, #tpu.memory_space<vmem>>, vector<1x16x16x128xbf16>
    %c0_55 = arith.constant 0 : index
    %c0_56 = arith.constant 0 : index
    %35 = vector.load %arg5[%c0_55, %c0_56] : memref<256x128xf32, #tpu.memory_space<vmem>>, vector<256x128xf32>
    %36 = vector.shape_cast %34 : vector<1x16x16x128xbf16> to vector<256x128xbf16>
    %c1_57 = arith.constant 1 : index
    %c1_58 = arith.constant 1 : index
    %c0_59 = arith.constant 0 : index
    %c0_60 = arith.constant 0 : index
    %37 = vector.load %arg2[%c1_57, %c1_58, %c0_59, %c0_60] : memref<3x3x128x128xbf16, #tpu.memory_space<vmem>>, vector<1x1x128x128xbf16>
    %38 = vector.shape_cast %37 : vector<1x1x128x128xbf16> to vector<128x128xbf16>
    %cst_61 = arith.constant dense<0.000000e+00> : vector<256x128xf32>
    %39 = tpu.matmul %36, %38, %cst_61 {dimension_numbers = #tpu.dot_dimension_numbers<[1], [0], [0], [1], [0, 0, 1, 1], [], []>} : vector<256x128xbf16>, vector<128x128xbf16>, vector<256x128xf32> -> vector<256x128xf32>
    %40 = arith.addf %35, %39 : vector<256x128xf32>
    %c0_62 = arith.constant 0 : index
    %c0_63 = arith.constant 0 : index
    %41 = vector.load %arg5[%c0_62, %c0_63] : memref<256x128xf32, #tpu.memory_space<vmem>>, vector<256x128xf32>
    tpu.vector_store %arg5[%c0_62, %c0_63], %40 {strides = array<i32>} : memref<256x128xf32, #tpu.memory_space<vmem>>, vector<256x128xf32>,
    %c0_64 = arith.constant 0 : index
    %c1_65 = arith.constant 1 : index
    %c2_66 = arith.constant 2 : index
    %c0_67 = arith.constant 0 : index
    %42 = vector.load %arg1[%c0_64, %c1_65, %c2_66, %c0_67] : memref<1x18x18x128xbf16, #tpu.memory_space<vmem>>, vector<1x16x16x128xbf16>
    %c0_68 = arith.constant 0 : index
    %c0_69 = arith.constant 0 : index
    %43 = vector.load %arg5[%c0_68, %c0_69] : memref<256x128xf32, #tpu.memory_space<vmem>>, vector<256x128xf32>
    %44 = vector.shape_cast %42 : vector<1x16x16x128xbf16> to vector<256x128xbf16>
    %c1_70 = arith.constant 1 : index
    %c2_71 = arith.constant 2 : index
    %c0_72 = arith.constant 0 : index
    %c0_73 = arith.constant 0 : index
    %45 = vector.load %arg2[%c1_70, %c2_71, %c0_72, %c0_73] : memref<3x3x128x128xbf16, #tpu.memory_space<vmem>>, vector<1x1x128x128xbf16>
    %46 = vector.shape_cast %45 : vector<1x1x128x128xbf16> to vector<128x128xbf16>
    %cst_74 = arith.constant dense<0.000000e+00> : vector<256x128xf32>
    %47 = tpu.matmul %44, %46, %cst_74 {dimension_numbers = #tpu.dot_dimension_numbers<[1], [0], [0], [1], [0, 0, 1, 1], [], []>} : vector<256x128xbf16>, vector<128x128xbf16>, vector<256x128xf32> -> vector<256x128xf32>
    %48 = arith.addf %43, %47 : vector<256x128xf32>
    %c0_75 = arith.constant 0 : index
    %c0_76 = arith.constant 0 : index
    %49 = vector.load %arg5[%c0_75, %c0_76] : memref<256x128xf32, #tpu.memory_space<vmem>>, vector<256x128xf32>
    tpu.vector_store %arg5[%c0_75, %c0_76], %48 {strides = array<i32>} : memref<256x128xf32, #tpu.memory_space<vmem>>, vector<256x128xf32>,
    %c0_77 = arith.constant 0 : index
    %c2_78 = arith.constant 2 : index
    %c0_79 = arith.constant 0 : index
    %c0_80 = arith.constant 0 : index
    %50 = vector.load %arg1[%c0_77, %c2_78, %c0_79, %c0_80] : memref<1x18x18x128xbf16, #tpu.memory_space<vmem>>, vector<1x16x16x128xbf16>
    %c0_81 = arith.constant 0 : index
    %c0_82 = arith.constant 0 : index
    %51 = vector.load %arg5[%c0_81, %c0_82] : memref<256x128xf32, #tpu.memory_space<vmem>>, vector<256x128xf32>
    %52 = vector.shape_cast %50 : vector<1x16x16x128xbf16> to vector<256x128xbf16>
    %c2_83 = arith.constant 2 : index
    %c0_84 = arith.constant 0 : index
    %c0_85 = arith.constant 0 : index
    %c0_86 = arith.constant 0 : index
    %53 = vector.load %arg2[%c2_83, %c0_84, %c0_85, %c0_86] : memref<3x3x128x128xbf16, #tpu.memory_space<vmem>>, vector<1x1x128x128xbf16>
    %54 = vector.shape_cast %53 : vector<1x1x128x128xbf16> to vector<128x128xbf16>
    %cst_87 = arith.constant dense<0.000000e+00> : vector<256x128xf32>
    %55 = tpu.matmul %52, %54, %cst_87 {dimension_numbers = #tpu.dot_dimension_numbers<[1], [0], [0], [1], [0, 0, 1, 1], [], []>} : vector<256x128xbf16>, vector<128x128xbf16>, vector<256x128xf32> -> vector<256x128xf32>
    %56 = arith.addf %51, %55 : vector<256x128xf32>
    %c0_88 = arith.constant 0 : index
    %c0_89 = arith.constant 0 : index
    %57 = vector.load %arg5[%c0_88, %c0_89] : memref<256x128xf32, #tpu.memory_space<vmem>>, vector<256x128xf32>
    tpu.vector_store %arg5[%c0_88, %c0_89], %56 {strides = array<i32>} : memref<256x128xf32, #tpu.memory_space<vmem>>, vector<256x128xf32>,
    %c0_90 = arith.constant 0 : index
    %c2_91 = arith.constant 2 : index
    %c1_92 = arith.constant 1 : index
    %c0_93 = arith.constant 0 : index
    %58 = vector.load %arg1[%c0_90, %c2_91, %c1_92, %c0_93] : memref<1x18x18x128xbf16, #tpu.memory_space<vmem>>, vector<1x16x16x128xbf16>
    %c0_94 = arith.constant 0 : index
    %c0_95 = arith.constant 0 : index
    %59 = vector.load %arg5[%c0_94, %c0_95] : memref<256x128xf32, #tpu.memory_space<vmem>>, vector<256x128xf32>
    %60 = vector.shape_cast %58 : vector<1x16x16x128xbf16> to vector<256x128xbf16>
    %c2_96 = arith.constant 2 : index
    %c1_97 = arith.constant 1 : index
    %c0_98 = arith.constant 0 : index
    %c0_99 = arith.constant 0 : index
    %61 = vector.load %arg2[%c2_96, %c1_97, %c0_98, %c0_99] : memref<3x3x128x128xbf16, #tpu.memory_space<vmem>>, vector<1x1x128x128xbf16>
    %62 = vector.shape_cast %61 : vector<1x1x128x128xbf16> to vector<128x128xbf16>
    %cst_100 = arith.constant dense<0.000000e+00> : vector<256x128xf32>
    %63 = tpu.matmul %60, %62, %cst_100 {dimension_numbers = #tpu.dot_dimension_numbers<[1], [0], [0], [1], [0, 0, 1, 1], [], []>} : vector<256x128xbf16>, vector<128x128xbf16>, vector<256x128xf32> -> vector<256x128xf32>
    %64 = arith.addf %59, %63 : vector<256x128xf32>
    %c0_101 = arith.constant 0 : index
    %c0_102 = arith.constant 0 : index
    %65 = vector.load %arg5[%c0_101, %c0_102] : memref<256x128xf32, #tpu.memory_space<vmem>>, vector<256x128xf32>
    tpu.vector_store %arg5[%c0_101, %c0_102], %64 {strides = array<i32>} : memref<256x128xf32, #tpu.memory_space<vmem>>, vector<256x128xf32>,
    %c0_103 = arith.constant 0 : index
    %c2_104 = arith.constant 2 : index
    %c2_105 = arith.constant 2 : index
    %c0_106 = arith.constant 0 : index
    %66 = vector.load %arg1[%c0_103, %c2_104, %c2_105, %c0_106] : memref<1x18x18x128xbf16, #tpu.memory_space<vmem>>, vector<1x16x16x128xbf16>
    %c0_107 = arith.constant 0 : index
    %c0_108 = arith.constant 0 : index
    %67 = vector.load %arg5[%c0_107, %c0_108] : memref<256x128xf32, #tpu.memory_space<vmem>>, vector<256x128xf32>
    %68 = vector.shape_cast %66 : vector<1x16x16x128xbf16> to vector<256x128xbf16>
    %c2_109 = arith.constant 2 : index
    %c2_110 = arith.constant 2 : index
    %c0_111 = arith.constant 0 : index
    %c0_112 = arith.constant 0 : index
    %69 = vector.load %arg2[%c2_109, %c2_110, %c0_111, %c0_112] : memref<3x3x128x128xbf16, #tpu.memory_space<vmem>>, vector<1x1x128x128xbf16>
    %70 = vector.shape_cast %69 : vector<1x1x128x128xbf16> to vector<128x128xbf16>
    %cst_113 = arith.constant dense<0.000000e+00> : vector<256x128xf32>
    %71 = tpu.matmul %68, %70, %cst_113 {dimension_numbers = #tpu.dot_dimension_numbers<[1], [0], [0], [1], [0, 0, 1, 1], [], []>} : vector<256x128xbf16>, vector<128x128xbf16>, vector<256x128xf32> -> vector<256x128xf32>
    %72 = arith.addf %67, %71 : vector<256x128xf32>
    %c0_114 = arith.constant 0 : index
    %c0_115 = arith.constant 0 : index
    %73 = vector.load %arg5[%c0_114, %c0_115] : memref<256x128xf32, #tpu.memory_space<vmem>>, vector<256x128xf32>
    tpu.vector_store %arg5[%c0_114, %c0_115], %72 {strides = array<i32>} : memref<256x128xf32, #tpu.memory_space<vmem>>, vector<256x128xf32>,
    %c0_116 = arith.constant 0 : index
    %c0_117 = arith.constant 0 : index
    %74 = vector.load %arg5[%c0_116, %c0_117] : memref<256x128xf32, #tpu.memory_space<vmem>>, vector<256x128xf32>
    %75 = vector.shape_cast %74 : vector<256x128xf32> to vector<1x256x128xf32>
    %76 = arith.truncf %75 : vector<1x256x128xf32> to vector<1x256x128xbf16>
    %c0_118 = arith.constant 0 : index
    %c0_119 = arith.constant 0 : index
    %c0_120 = arith.constant 0 : index
    %77 = vector.load %arg3[%c0_118, %c0_119, %c0_120] : memref<1x256x128xbf16, #tpu.memory_space<vmem>>, vector<1x256x128xbf16>
    tpu.vector_store %arg3[%c0_118, %c0_119, %c0_120], %76 {strides = array<i32>} : memref<1x256x128xbf16, #tpu.memory_space<vmem>>, vector<1x256x128xbf16>,
    %cst_121 = arith.constant dense<0.000000e+00> : vector<128xf32>
    %78 = vector.multi_reduction <add>, %74, %cst_121 [0] : vector<256x128xf32> to vector<128xf32>
    %79 = vector.shape_cast %78 : vector<128xf32> to vector<1x128xf32>
    %c0_122 = arith.constant 0 : index
    %c0_123 = arith.constant 0 : index
    %c0_124 = arith.constant 0 : index
    %80 = vector.load %arg4[%c0_122, %c0_123, %c0_124] : memref<1x8x128xf32, #tpu.memory_space<vmem>>, vector<1x1x128xf32>
    %81 = vector.shape_cast %80 : vector<1x1x128xf32> to vector<1x128xf32>
    %82 = vector.shape_cast %79 : vector<1x128xf32> to vector<1x1x128xf32>
    tpu.vector_store %arg4[%c0_122, %c0_123, %c0_124], %82 {strides = array<i32>} : memref<1x8x128xf32, #tpu.memory_space<vmem>>, vector<1x1x128xf32>,
    %83 = arith.mulf %74, %74 : vector<256x128xf32>
    %cst_125 = arith.constant dense<0.000000e+00> : vector<128xf32>
    %84 = vector.multi_reduction <add>, %83, %cst_125 [0] : vector<256x128xf32> to vector<128xf32>
    %85 = vector.shape_cast %84 : vector<128xf32> to vector<1x128xf32>
    %c0_126 = arith.constant 0 : index
    %c1_127 = arith.constant 1 : index
    %c0_128 = arith.constant 0 : index
    %86 = vector.load %arg4[%c0_126, %c1_127, %c0_128] : memref<1x8x128xf32, #tpu.memory_space<vmem>>, vector<1x1x128xf32>
    %87 = vector.shape_cast %86 : vector<1x1x128xf32> to vector<1x128xf32>
    %88 = vector.shape_cast %85 : vector<1x128xf32> to vector<1x1x128xf32>
    tpu.vector_store %arg4[%c0_126, %c1_127, %c0_128], %88 {strides = array<i32>} : memref<1x8x128xf32, #tpu.memory_space<vmem>>, vector<1x1x128xf32>,
    return
  }
  func.func @transform_0(%arg0: i32) -> (i32, i32, i32, i32) {
    %c0_i32 = arith.constant 0 : i32
    %c0_i32_0 = arith.constant 0 : i32
    %c0_i32_1 = arith.constant 0 : i32
    %c0_i32_2 = arith.constant 0 : i32
    return %arg0, %c0_i32, %c0_i32_0, %c0_i32_1 : i32, i32, i32, i32
  }
  func.func @transform_1(%arg0: i32) -> (i32, i32, i32, i32) {
    %c0_i32 = arith.constant 0 : i32
    %c0_i32_0 = arith.constant 0 : i32
    %c0_i32_1 = arith.constant 0 : i32
    %c0_i32_2 = arith.constant 0 : i32
    %c0_i32_3 = arith.constant 0 : i32
    return %c0_i32, %c0_i32_0, %c0_i32_1, %c0_i32_2 : i32, i32, i32, i32
  }
  func.func @transform_2(%arg0: i32) -> (i32, i32, i32) {
    %c0_i32 = arith.constant 0 : i32
    %c0_i32_0 = arith.constant 0 : i32
    %c0_i32_1 = arith.constant 0 : i32
    return %arg0, %c0_i32, %c0_i32_0 : i32, i32, i32
  }
  func.func @transform_3(%arg0: i32) -> (i32, i32, i32) {
    %c0_i32 = arith.constant 0 : i32
    %c0_i32_0 = arith.constant 0 : i32
    %c0_i32_1 = arith.constant 0 : i32
    return %arg0, %c0_i32, %c0_i32_0 : i32, i32, i32
  }
}

</mosaic_0001>

<llo_original>
// kernel: tpu_custom_call.1
$region0: #{tpu_custom_call.1}
  #allocation0 [shape = 'u32[]', space=smem, size = 0x4, offset = 0x4, fixed_abs, tag = 'smem constant byte address 0x4 - core index']
  #allocation1 [shape = 'u32[144,128]{1,0:T(1,128)}', space=vmem, size = 0x12000, scoped, tag = 'internal scratch']
  #allocation2 [shape = 'f32[256,128]{1,0:T(8,128)}', space=vmem, size = 0x20000, scoped, tag = 'scratch operand']
  %s0 = inlined_call_operand.vmem [shape: bf16[2,18,18,128], index: 0, kind: input, shape index: {}]
  %s1 = inlined_call_operand.vmem [shape: bf16[3,3,128,128], index: 1, kind: input, shape index: {}]
  %s2 = inlined_call_operand.hbm [shape: bf16[2,256,128], index: 2, kind: output, shape index: {0}]
  %s3 = inlined_call_operand.hbm [shape: f32[2,8,128], index: 3, kind: output, shape index: {1}]
  %4 = xla_tuple %s2, %s3
  %s5 = sld [smem:[#allocation0]]
  $region49: #{tpu_custom_call.1} parent=0
    _
  %s7 = ssub.s32 1, %s5
  %s8 = scalar_select 0, %s7, %s5
  $region1: #{tpu_custom_call.1} parent=0
    #allocation3 [shape = 'u8[131072]{0}', space=vmem, size = 0x20000, scoped, tag = 'output window, operand 0']
    #allocation4 [shape = 's32[2]{0}', space=sflag, size = 0x8, scoped, tag = 'scoped memory for tpu_custom_call.1']
    #allocation5 [shape = 'u8[8192]{0}', space=vmem, size = 0x2000, scoped, tag = 'output window, operand 1']
    #allocation6 [shape = 's32[2]{0}', space=sflag, size = 0x8, scoped, tag = 'scoped memory for tpu_custom_call.1']
    %9 = vsyncpa [#allocation4], 0
    %s10 = scalar_lea.sflag [#allocation4], 1
    %11 = vsyncpa %s10, 0
    %12 = vsyncpa [#allocation6], 0
    %s13 = scalar_lea.sflag [#allocation6], 1
    %14 = vsyncpa %s13, 0
    loop: start=0, step=1, limit=4
    $region2: #{tpu_custom_call.1} parent=1 // loop_pre_header
      _
    $region3: #{tpu_custom_call.1} parent=1 // loop_header
      %s16 = sphi 0, %s20
      %p17 = scmp.ge.s32.totalorder %s16, 4
      %s26 = sphi 0, %s28
      %s29 = sphi 0, %s26
      %s30 = sphi 0, %s29
      %s46 = sphi 0, %s30
      %s50 = sphi 0, %s50
      %s52 = sphi 0, %s50
      %s53 = sphi 0, %s52
      %s67 = sphi 0, %s53
      %s73 = sphi 0, %s75
      %s76 = sphi 0, %s73
      %s77 = sphi 0, %s76
      %s93 = sphi 0, %s77
      %s99 = sphi 0, %s101
      %s102 = sphi 0, %s99
      %s103 = sphi 0, %s102
      %s119 = sphi 0, %s103
    $region4: #{tpu_custom_call.1} parent=1 // loop_header_branch
      %19 = sbr.rel (%p17) target = $region8
    $region5: #{tpu_custom_call.1} parent=1 // loop_body
      %s21 = ssub.s32 %s16, 1
      %s22 = ssub.s32 %s16, 2
      %s23 = sadd.s32 %s16, 1
      %s24 = ssub.s32 %s16, %s23
      %p25 = scmp.eq.s32.totalorder %s24, 0
      %s27 = sadd.s32 %s26, 1
      %s28 = scalar_select %p25, %s26, %s27
      %p31 = pneg %p25
      %p32 = scmp.eq.s32.totalorder %s16, 1
      %p33 = por %p31, %p32
      %p34 = scmp.ne.s32.totalorder %s26, %s29
      %p35 = scmp.eq.s32.totalorder %s16, 0
      %p36 = por %p34, %p35
      %p37 = scmp.ne.s32.totalorder %s26, %s29
      %p38 = scmp.eq.s32.totalorder %s21, 1
      %p39 = por %p37, %p38
      %p40 = scmp.ne.s32.totalorder %s29, %s30
      %p41 = scmp.eq.s32.totalorder %s21, 0
      %p42 = por %p40, %p41
      %p43 = scmp.ne.s32.totalorder %s29, %s30
      %p44 = scmp.eq.s32.totalorder %s22, 1
      %p45 = por %p43, %p44
      %p47 = scmp.ne.s32.totalorder %s30, %s46
      %p48 = scmp.eq.s32.totalorder %s22, 0
      %p49 = por %p47, %p48
      %s51 = sadd.s32 %s50, 1
      %p54 = scmp.eq.s32.totalorder %s16, 1
      %p55 = scmp.ne.s32.totalorder %s50, %s52
      %p56 = scmp.eq.s32.totalorder %s16, 0
      %p57 = por %p55, %p56
      %p58 = scmp.ne.s32.totalorder %s50, %s52
      %p59 = scmp.eq.s32.totalorder %s21, 1
      %p60 = por %p58, %p59
      %p61 = scmp.ne.s32.totalorder %s52, %s53
      %p62 = scmp.eq.s32.totalorder %s21, 0
      %p63 = por %p61, %p62
      %p64 = scmp.ne.s32.totalorder %s52, %s53
      %p65 = scmp.eq.s32.totalorder %s22, 1
      %p66 = por %p64, %p65
      %p68 = scmp.ne.s32.totalorder %s53, %s67
      %p69 = scmp.eq.s32.totalorder %s22, 0
      %p70 = por %p68, %p69
      %s71 = ssub.s32 %s16, %s23
      %p72 = scmp.eq.s32.totalorder %s71, 0
      %s74 = sadd.s32 %s73, 1
      %s75 = scalar_select %p72, %s73, %s74
      %p78 = pneg %p72
      %p79 = scmp.eq.s32.totalorder %s16, 1
      %p80 = por %p78, %p79
      %p81 = scmp.ne.s32.totalorder %s73, %s76
      %p82 = scmp.eq.s32.totalorder %s16, 0
      %p83 = por %p81, %p82
      %p84 = scmp.ne.s32.totalorder %s73, %s76
      %p85 = scmp.eq.s32.totalorder %s21, 1
      %p86 = por %p84, %p85
      %p87 = scmp.ne.s32.totalorder %s76, %s77
      %p88 = scmp.eq.s32.totalorder %s21, 0
      %p89 = por %p87, %p88
      %p90 = scmp.ne.s32.totalorder %s76, %s77
      %p91 = scmp.eq.s32.totalorder %s22, 1
      %p92 = por %p90, %p91
      %p94 = scmp.ne.s32.totalorder %s77, %s93
      %p95 = scmp.eq.s32.totalorder %s22, 0
      %p96 = por %p94, %p95
      %s97 = ssub.s32 %s16, %s23
      %p98 = scmp.eq.s32.totalorder %s97, 0
      %s100 = sadd.s32 %s99, 1
      %s101 = scalar_select %p98, %s99, %s100
      %p104 = pneg %p98
      %p105 = scmp.eq.s32.totalorder %s16, 1
      %p106 = por %p104, %p105
      %p107 = scmp.ne.s32.totalorder %s99, %s102
      %p108 = scmp.eq.s32.totalorder %s16, 0
      %p109 = por %p107, %p108
      %p110 = scmp.ne.s32.totalorder %s99, %s102
      %p111 = scmp.eq.s32.totalorder %s21, 1
      %p112 = por %p110, %p111
      %p113 = scmp.ne.s32.totalorder %s102, %s103
      %p114 = scmp.eq.s32.totalorder %s21, 0
      %p115 = por %p113, %p114
      %p116 = scmp.ne.s32.totalorder %s102, %s103
      %p117 = scmp.eq.s32.totalorder %s22, 1
      %p118 = por %p116, %p117
      %p120 = scmp.ne.s32.totalorder %s103, %s119
      %p121 = scmp.eq.s32.totalorder %s22, 0
      %p122 = por %p120, %p121
      %p123 = scmp.le.s32.totalorder 1, %s16
      %p124 = scmp.lt.s32.totalorder %s16, 3
      %p125 = pnand %p123, %p124
      %p126 = pneg %p125
      // Predicated region
      $region9: #{tpu_custom_call.1} parent=5 // pred_check
        _
      $region10: #{tpu_custom_call.1} parent=5 // pred_check_branch
        %128 = sbr.rel (%p125) target = $region12
      $region11: #{tpu_custom_call.1} parent=5 // pred_region
        %s129 = ssub.s32 %s16, 1
        // Predicated region
        $region13: #{tpu_custom_call.1} parent=11 // pred_check
          %p130 = pneg %p63
        $region14: #{tpu_custom_call.1} parent=11 // pred_check_branch
          %132 = sbr.rel (%p130) target = $region16
        $region15: #{tpu_custom_call.1} parent=11 // pred_region
          _
        $region16: #{tpu_custom_call.1} parent=11 // pred_fallthru
          _
      $region12: #{tpu_custom_call.1} parent=5 // pred_fallthru
        _
      %p133 = scmp.lt.s32.totalorder %s16, 2
      // Predicated region
      $region17: #{tpu_custom_call.1} parent=5 // pred_check
        %p134 = pneg %p133
      $region18: #{tpu_custom_call.1} parent=5 // pred_check_branch
        %136 = sbr.rel (%p134) target = $region20
      $region19: #{tpu_custom_call.1} parent=5 // pred_region
        // Predicated region
        $region21: #{tpu_custom_call.1} parent=19 // pred_check
          %p137 = pneg %p36
        $region22: #{tpu_custom_call.1} parent=19 // pred_check_branch
          %139 = sbr.rel (%p137) target = $region24
        $region23: #{tpu_custom_call.1} parent=19 // pred_region
          %p140 = scmp.lt.s32.totalorder %s16, 1
          %s141 = scalar_select %p140, %s16, 1
          %s142 = smul.addr %s141, 54
          %s143 = smul.addr %s142, 4
          %s144 = scalar_lea.vmem %s0, %s143
        $region24: #{tpu_custom_call.1} parent=19 // pred_fallthru
          _
      $region20: #{tpu_custom_call.1} parent=5 // pred_fallthru
        _
      %p145 = scmp.le.s32.totalorder 1, %s16
      %p146 = scmp.lt.s32.totalorder %s16, 3
      %p147 = pnand %p145, %p146
      %p148 = pneg %p147
      // Predicated region
      $region25: #{tpu_custom_call.1} parent=5 // pred_check
        _
      $region26: #{tpu_custom_call.1} parent=5 // pred_check_branch
        %150 = sbr.rel (%p147) target = $region28
      $region27: #{tpu_custom_call.1} parent=5 // pred_region
        %s151 = ssub.s32 %s16, 1
        %p152 = scmp.lt.s32.totalorder %s21, 1
        %s153 = scalar_select %p152, %s21, 1
        %s154 = smul.addr %s153, 54
        %s155 = smul.addr %s154, 4
        %s156 = scalar_lea.vmem %s0, %s155
        %p157 = pneg %p42
        %p158 = pneg %p39
        %p159 = pneg %p63
        %p160 = pneg %p60
        %p161 = pneg %p89
        %p162 = pneg %p86
        %s163 = sand.u32 %s76, 1
        %s164 = scalar_lea.sflag [#allocation4], %s163
        %s165 = sand.u32 %s76, 1
        %s166 = smul.addr %s165, 128
        %s167 = scalar_lea.vmem [#allocation3], %s166
        %p168 = pneg %p115
        %p169 = pneg %p112
        %s170 = sand.u32 %s102, 1
        %s171 = scalar_lea.sflag [#allocation6], %s170
        %s172 = sand.u32 %s102, 1
        %s173 = smul.addr %s172, 8
        %s174 = scalar_lea.vmem [#allocation5], %s173
        %p175 = scmp.lt.s32.totalorder %s21, 1
        %s176 = scalar_select %p175, %s21, 1
        %s177 = smul.addr %s176, 54
        %s178 = smul.addr %s177, 4
        %s179 = scalar_lea.vmem %s0, %s178
        %181 = vst [vmem:[#allocation2] sm:$0xff] 0.0
        %182 = vst [vmem:[#allocation2 + $0x8] sm:$0xff] 0.0
        %183 = vst [vmem:[#allocation2 + $0x10] sm:$0xff] 0.0
        %184 = vst [vmem:[#allocation2 + $0x18] sm:$0xff] 0.0
        %185 = vst [vmem:[#allocation2 + $0x20] sm:$0xff] 0.0
        %186 = vst [vmem:[#allocation2 + $0x28] sm:$0xff] 0.0
        %187 = vst [vmem:[#allocation2 + $0x30] sm:$0xff] 0.0
        %188 = vst [vmem:[#allocation2 + $0x38] sm:$0xff] 0.0
        %189 = vst [vmem:[#allocation2 + $0x40] sm:$0xff] 0.0
        %190 = vst [vmem:[#allocation2 + $0x48] sm:$0xff] 0.0
        %191 = vst [vmem:[#allocation2 + $0x50] sm:$0xff] 0.0
        %192 = vst [vmem:[#allocation2 + $0x58] sm:$0xff] 0.0
        %193 = vst [vmem:[#allocation2 + $0x60] sm:$0xff] 0.0
        %194 = vst [vmem:[#allocation2 + $0x68] sm:$0xff] 0.0
        %195 = vst [vmem:[#allocation2 + $0x70] sm:$0xff] 0.0
        %196 = vst [vmem:[#allocation2 + $0x78] sm:$0xff] 0.0
        %197 = vst [vmem:[#allocation2 + $0x80] sm:$0xff] 0.0
        %198 = vst [vmem:[#allocation2 + $0x88] sm:$0xff] 0.0
        %199 = vst [vmem:[#allocation2 + $0x90] sm:$0xff] 0.0
        %200 = vst [vmem:[#allocation2 + $0x98] sm:$0xff] 0.0
        %201 = vst [vmem:[#allocation2 + $0xa0] sm:$0xff] 0.0
        %202 = vst [vmem:[#allocation2 + $0xa8] sm:$0xff] 0.0
        %203 = vst [vmem:[#allocation2 + $0xb0] sm:$0xff] 0.0
        %204 = vst [vmem:[#allocation2 + $0xb8] sm:$0xff] 0.0
        %205 = vst [vmem:[#allocation2 + $0xc0] sm:$0xff] 0.0
        %206 = vst [vmem:[#allocation2 + $0xc8] sm:$0xff] 0.0
        %207 = vst [vmem:[#allocation2 + $0xd0] sm:$0xff] 0.0
        %208 = vst [vmem:[#allocation2 + $0xd8] sm:$0xff] 0.0
        %209 = vst [vmem:[#allocation2 + $0xe0] sm:$0xff] 0.0
        %210 = vst [vmem:[#allocation2 + $0xe8] sm:$0xff] 0.0
        %211 = vst [vmem:[#allocation2 + $0xf0] sm:$0xff] 0.0
        %212 = vst [vmem:[#allocation2 + $0xf8] sm:$0xff] 0.0
        %v213 = vld [vmem:[%s179] sm:$0xf]
        %v214 = vld [vmem:[%s179 + $0x4] sm:$0xf]
        %v215 = vld [vmem:[%s179 + $0xc] sm:$0xf]
        %v216 = vld [vmem:[%s179 + $0x10] sm:$0xf]
        %v217 = vld [vmem:[%s179 + $0x18] sm:$0xf]
        %v218 = vld [vmem:[%s179 + $0x1c] sm:$0xf]
        %v219 = vld [vmem:[%s179 + $0x24] sm:$0xf]
        %v220 = vld [vmem:[%s179 + $0x28] sm:$0xf]
        %v221 = vld [vmem:[%s179 + $0x30] sm:$0xf]
        %v222 = vld [vmem:[%s179 + $0x34] sm:$0xf]
        %v223 = vld [vmem:[%s179 + $0x3c] sm:$0xf]
        %v224 = vld [vmem:[%s179 + $0x40] sm:$0xf]
        %v225 = vld [vmem:[%s179 + $0x48] sm:$0xf]
        %v226 = vld [vmem:[%s179 + $0x4c] sm:$0xf]
        %v227 = vld [vmem:[%s179 + $0x54] sm:$0xf]
        %v228 = vld [vmem:[%s179 + $0x58] sm:$0xf]
        %v229 = vld [vmem:[%s179 + $0x60] sm:$0xf]
        %v230 = vld [vmem:[%s179 + $0x64] sm:$0xf]
        %v231 = vld [vmem:[%s179 + $0x6c] sm:$0xf]
        %v232 = vld [vmem:[%s179 + $0x70] sm:$0xf]
        %v233 = vld [vmem:[%s179 + $0x78] sm:$0xf]
        %v234 = vld [vmem:[%s179 + $0x7c] sm:$0xf]
        %v235 = vld [vmem:[%s179 + $0x84] sm:$0xf]
        %v236 = vld [vmem:[%s179 + $0x88] sm:$0xf]
        %v237 = vld [vmem:[%s179 + $0x90] sm:$0xf]
        %v238 = vld [vmem:[%s179 + $0x94] sm:$0xf]
        %v239 = vld [vmem:[%s179 + $0x9c] sm:$0xf]
        %v240 = vld [vmem:[%s179 + $0xa0] sm:$0xf]
        %v241 = vld [vmem:[%s179 + $0xa8] sm:$0xf]
        %v242 = vld [vmem:[%s179 + $0xac] sm:$0xf]
        %v243 = vld [vmem:[%s179 + $0xb4] sm:$0xf]
        %v244 = vld [vmem:[%s179 + $0xb8] sm:$0xf]
        %v245 = vld [vmem:[#allocation2] sm:$0xff]
        %v246 = vld [vmem:[#allocation2 + $0x8] sm:$0xff]
        %v247 = vld [vmem:[#allocation2 + $0x10] sm:$0xff]
        %v248 = vld [vmem:[#allocation2 + $0x18] sm:$0xff]
        %v249 = vld [vmem:[#allocation2 + $0x20] sm:$0xff]
        %v250 = vld [vmem:[#allocation2 + $0x28] sm:$0xff]
        %v251 = vld [vmem:[#allocation2 + $0x30] sm:$0xff]
        %v252 = vld [vmem:[#allocation2 + $0x38] sm:$0xff]
        %v253 = vld [vmem:[#allocation2 + $0x40] sm:$0xff]
        %v254 = vld [vmem:[#allocation2 + $0x48] sm:$0xff]
        %v255 = vld [vmem:[#allocation2 + $0x50] sm:$0xff]
        %v256 = vld [vmem:[#allocation2 + $0x58] sm:$0xff]
        %v257 = vld [vmem:[#allocation2 + $0x60] sm:$0xff]
        %v258 = vld [vmem:[#allocation2 + $0x68] sm:$0xff]
        %v259 = vld [vmem:[#allocation2 + $0x70] sm:$0xff]
        %v260 = vld [vmem:[#allocation2 + $0x78] sm:$0xff]
        %v261 = vld [vmem:[#allocation2 + $0x80] sm:$0xff]
        %v262 = vld [vmem:[#allocation2 + $0x88] sm:$0xff]
        %v263 = vld [vmem:[#allocation2 + $0x90] sm:$0xff]
        %v264 = vld [vmem:[#allocation2 + $0x98] sm:$0xff]
        %v265 = vld [vmem:[#allocation2 + $0xa0] sm:$0xff]
        %v266 = vld [vmem:[#allocation2 + $0xa8] sm:$0xff]
        %v267 = vld [vmem:[#allocation2 + $0xb0] sm:$0xff]
        %v268 = vld [vmem:[#allocation2 + $0xb8] sm:$0xff]
        %v269 = vld [vmem:[#allocation2 + $0xc0] sm:$0xff]
        %v270 = vld [vmem:[#allocation2 + $0xc8] sm:$0xff]
        %v271 = vld [vmem:[#allocation2 + $0xd0] sm:$0xff]
        %v272 = vld [vmem:[#allocation2 + $0xd8] sm:$0xff]
        %v273 = vld [vmem:[#allocation2 + $0xe0] sm:$0xff]
        %v274 = vld [vmem:[#allocation2 + $0xe8] sm:$0xff]
        %v275 = vld [vmem:[#allocation2 + $0xf0] sm:$0xff]
        %v276 = vld [vmem:[#allocation2 + $0xf8] sm:$0xff]
        %v277 = vld [vmem:[%s1] sm:$0xf]
        %v278 = vld [vmem:[%s1 + $0x4] sm:$0xf]
        %v279 = vld [vmem:[%s1 + $0x8] sm:$0xf]
        %v280 = vld [vmem:[%s1 + $0xc] sm:$0xf]
        %v281 = vld [vmem:[%s1 + $0x10] sm:$0xf]
        %v282 = vld [vmem:[%s1 + $0x14] sm:$0xf]
        %v283 = vld [vmem:[%s1 + $0x18] sm:$0xf]
        %v284 = vld [vmem:[%s1 + $0x1c] sm:$0xf]
        %v285 = vld [vmem:[%s1 + $0x20] sm:$0xf]
        %v286 = vld [vmem:[%s1 + $0x24] sm:$0xf]
        %v287 = vld [vmem:[%s1 + $0x28] sm:$0xf]
        %v288 = vld [vmem:[%s1 + $0x2c] sm:$0xf]
        %v289 = vld [vmem:[%s1 + $0x30] sm:$0xf]
        %v290 = vld [vmem:[%s1 + $0x34] sm:$0xf]
        %v291 = vld [vmem:[%s1 + $0x38] sm:$0xf]
        %v292 = vld [vmem:[%s1 + $0x3c] sm:$0xf]
        %v325 = vunpack.c.l.b16 %v213
        %v326 = vunpack.c.l.b16 %v214
        %v327 = vunpack.c.l.b16 %v215
        %v328 = vunpack.c.l.b16 %v216
        %v329 = vunpack.c.l.b16 %v217
        %v330 = vunpack.c.l.b16 %v218
        %v331 = vunpack.c.l.b16 %v219
        %v332 = vunpack.c.l.b16 %v220
        %v333 = vunpack.c.l.b16 %v221
        %v334 = vunpack.c.l.b16 %v222
        %v335 = vunpack.c.l.b16 %v223
        %v336 = vunpack.c.l.b16 %v224
        %v337 = vunpack.c.l.b16 %v225
        %v338 = vunpack.c.l.b16 %v226
        %v339 = vunpack.c.l.b16 %v227
        %v340 = vunpack.c.l.b16 %v228
        %v341 = vunpack.c.l.b16 %v229
        %v342 = vunpack.c.l.b16 %v230
        %v343 = vunpack.c.l.b16 %v231
        %v344 = vunpack.c.l.b16 %v232
        %v345 = vunpack.c.l.b16 %v233
        %v346 = vunpack.c.l.b16 %v234
        %v347 = vunpack.c.l.b16 %v235
        %v348 = vunpack.c.l.b16 %v236
        %v349 = vunpack.c.l.b16 %v237
        %v350 = vunpack.c.l.b16 %v238
        %v351 = vunpack.c.l.b16 %v239
        %v352 = vunpack.c.l.b16 %v240
        %v353 = vunpack.c.l.b16 %v241
        %v354 = vunpack.c.l.b16 %v242
        %v355 = vunpack.c.l.b16 %v243
        %v356 = vunpack.c.l.b16 %v244
        %v357 = vpack.c.b16 %v326, %v325
        %v358 = vpack.c.b16 %v328, %v327
        %v359 = vpack.c.b16 %v330, %v329
        %v360 = vpack.c.b16 %v332, %v331
        %v361 = vpack.c.b16 %v334, %v333
        %v362 = vpack.c.b16 %v336, %v335
        %v363 = vpack.c.b16 %v338, %v337
        %v364 = vpack.c.b16 %v340, %v339
        %v365 = vpack.c.b16 %v342, %v341
        %v366 = vpack.c.b16 %v344, %v343
        %v367 = vpack.c.b16 %v346, %v345
        %v368 = vpack.c.b16 %v348, %v347
        %v369 = vpack.c.b16 %v350, %v349
        %v370 = vpack.c.b16 %v352, %v351
        %v371 = vpack.c.b16 %v354, %v353
        %v372 = vpack.c.b16 %v356, %v355
        %v405 = vunpack.c.l.b16 %v277
        %v406 = vunpack.c.l.b16 %v278
        %v407 = vunpack.c.l.b16 %v279
        %v408 = vunpack.c.l.b16 %v280
        %v409 = vunpack.c.l.b16 %v281
        %v410 = vunpack.c.l.b16 %v282
        %v411 = vunpack.c.l.b16 %v283
        %v412 = vunpack.c.l.b16 %v284
        %v413 = vunpack.c.l.b16 %v285
        %v414 = vunpack.c.l.b16 %v286
        %v415 = vunpack.c.l.b16 %v287
        %v416 = vunpack.c.l.b16 %v288
        %v417 = vunpack.c.l.b16 %v289
        %v418 = vunpack.c.l.b16 %v290
        %v419 = vunpack.c.l.b16 %v291
        %v420 = vunpack.c.l.b16 %v292
        %v421 = vpack.c.b16 %v406, %v405
        %v422 = vpack.c.b16 %v408, %v407
        %v423 = vpack.c.b16 %v410, %v409
        %v424 = vpack.c.b16 %v412, %v411
        %v425 = vpack.c.b16 %v414, %v413
        %v426 = vpack.c.b16 %v416, %v415
        %v427 = vpack.c.b16 %v418, %v417
        %v428 = vpack.c.b16 %v420, %v419
        %437 = vmatprep.subr.bf16.mxu0 0
        %438 = vmatpush1.bf16.msra.mxu0 %v428
        %439 = vmatprep.subr.bf16.mxu0 0
        %440 = vmatpush1.bf16.msra.mxu0 %v427
        %441 = vmatprep.subr.bf16.mxu0 0
        %442 = vmatpush1.bf16.msra.mxu0 %v426
        %443 = vmatprep.subr.bf16.mxu0 0
        %444 = vmatpush1.bf16.msra.mxu0 %v425
        %445 = vmatprep.subr.bf16.mxu0 0
        %446 = vmatpush1.bf16.msra.mxu0 %v424
        %447 = vmatprep.subr.bf16.mxu0 0
        %448 = vmatpush1.bf16.msra.mxu0 %v423
        %449 = vmatprep.subr.bf16.mxu0 0
        %450 = vmatpush1.bf16.msra.mxu0 %v422
        %451 = vmatprep.subr.bf16.mxu0 0
        %452 = vmatpush1.bf16.msra.mxu0 %v421
        %453 = vmatprep.subr.bf16.mxu0 0
        %454 = vmatpush2.bf16.msra.mxu0 0
        %455 = vmatprep.subr.bf16.mxu0 0
        %456 = vmatpush2.bf16.msra.mxu0 0
        %457 = vmatprep.subr.bf16.mxu0 0
        %458 = vmatpush2.bf16.msra.mxu0 0
        %459 = vmatprep.subr.bf16.mxu0 0
        %460 = vmatpush2.bf16.msra.mxu0 0
        %461 = vmatprep.subr.bf16.mxu0 0
        %462 = vmatpush2.bf16.msra.mxu0 0
        %463 = vmatprep.subr.bf16.mxu0 0
        %464 = vmatpush2.bf16.msra.mxu0 0
        %465 = vmatprep.subr.bf16.mxu0 0
        %466 = vmatpush2.bf16.msra.mxu0 0
        %467 = vmatprep.subr.bf16.mxu0 0
        %468 = vmatpush2.bf16.msra.mxu0 0
        %469 = vmatprep.mubr.bf16.mxu0 0
        %470 = vmatmul.mubr.bf16.gmra.mxu0 %v357
        %v471 = vpop.f32.mrf.mxu0
        %v472 = vadd.f32 0.0, %v471
        %v473 = vpop.f32.mrf.mxu0
        %v474 = vpop.f32.mrf.mxu0
        %v475 = vadd.f32 0.0, %v474
        %v476 = vpop.f32.mrf.mxu0
        %477 = vmatprep.mubr.bf16.mxu0 0
        %478 = vmatmul.mubr.bf16.gmra.mxu0 %v358
        %v479 = vpop.f32.mrf.mxu0
        %v480 = vadd.f32 0.0, %v479
        %v481 = vpop.f32.mrf.mxu0
        %v482 = vpop.f32.mrf.mxu0
        %v483 = vadd.f32 0.0, %v482
        %v484 = vpop.f32.mrf.mxu0
        %485 = vmatprep.mubr.bf16.mxu0 0
        %486 = vmatmul.mubr.bf16.gmra.mxu0 %v359
        %v487 = vpop.f32.mrf.mxu0
        %v488 = vadd.f32 0.0, %v487
        %v489 = vpop.f32.mrf.mxu0
        %v490 = vpop.f32.mrf.mxu0
        %v491 = vadd.f32 0.0, %v490
        %v492 = vpop.f32.mrf.mxu0
        %493 = vmatprep.mubr.bf16.mxu0 0
        %494 = vmatmul.mubr.bf16.gmra.mxu0 %v360
        %v495 = vpop.f32.mrf.mxu0
        %v496 = vadd.f32 0.0, %v495
        %v497 = vpop.f32.mrf.mxu0
        %v498 = vpop.f32.mrf.mxu0
        %v499 = vadd.f32 0.0, %v498
        %v500 = vpop.f32.mrf.mxu0
        %501 = vmatprep.mubr.bf16.mxu0 0
        %502 = vmatmul.mubr.bf16.gmra.mxu0 %v361
        %v503 = vpop.f32.mrf.mxu0
        %v504 = vadd.f32 0.0, %v503
        %v505 = vpop.f32.mrf.mxu0
        %v506 = vpop.f32.mrf.mxu0
        %v507 = vadd.f32 0.0, %v506
        %v508 = vpop.f32.mrf.mxu0
        %509 = vmatprep.mubr.bf16.mxu0 0
        %510 = vmatmul.mubr.bf16.gmra.mxu0 %v362
        %v511 = vpop.f32.mrf.mxu0
        %v512 = vadd.f32 0.0, %v511
        %v513 = vpop.f32.mrf.mxu0
        %v514 = vpop.f32.mrf.mxu0
        %v515 = vadd.f32 0.0, %v514
        %v516 = vpop.f32.mrf.mxu0
        %517 = vmatprep.mubr.bf16.mxu0 0
        %518 = vmatmul.mubr.bf16.gmra.mxu0 %v363
        %v519 = vpop.f32.mrf.mxu0
        %v520 = vadd.f32 0.0, %v519
        %v521 = vpop.f32.mrf.mxu0
        %v522 = vpop.f32.mrf.mxu0
        %v523 = vadd.f32 0.0, %v522
        %v524 = vpop.f32.mrf.mxu0
        %525 = vmatprep.mubr.bf16.mxu0 0
        %526 = vmatmul.mubr.bf16.gmra.mxu0 %v364
        %v527 = vpop.f32.mrf.mxu0
        %v528 = vadd.f32 0.0, %v527
        %v529 = vpop.f32.mrf.mxu0
        %v530 = vpop.f32.mrf.mxu0
        %v531 = vadd.f32 0.0, %v530
        %v532 = vpop.f32.mrf.mxu0
        %533 = vmatprep.mubr.bf16.mxu0 0
        %534 = vmatmul.mubr.bf16.gmra.mxu0 %v365
        %v535 = vpop.f32.mrf.mxu0
        %v536 = vadd.f32 0.0, %v535
        %v537 = vpop.f32.mrf.mxu0
        %v538 = vpop.f32.mrf.mxu0
        %v539 = vadd.f32 0.0, %v538
        %v540 = vpop.f32.mrf.mxu0
        %541 = vmatprep.mubr.bf16.mxu0 0
        %542 = vmatmul.mubr.bf16.gmra.mxu0 %v366
        %v543 = vpop.f32.mrf.mxu0
        %v544 = vadd.f32 0.0, %v543
        %v545 = vpop.f32.mrf.mxu0
        %v546 = vpop.f32.mrf.mxu0
        %v547 = vadd.f32 0.0, %v546
        %v548 = vpop.f32.mrf.mxu0
        %549 = vmatprep.mubr.bf16.mxu0 0
        %550 = vmatmul.mubr.bf16.gmra.mxu0 %v367
        %v551 = vpop.f32.mrf.mxu0
        %v552 = vadd.f32 0.0, %v551
        %v553 = vpop.f32.mrf.mxu0
        %v554 = vpop.f32.mrf.mxu0
        %v555 = vadd.f32 0.0, %v554
        %v556 = vpop.f32.mrf.mxu0
        %557 = vmatprep.mubr.bf16.mxu0 0
        %558 = vmatmul.mubr.bf16.gmra.mxu0 %v368
        %v559 = vpop.f32.mrf.mxu0
        %v560 = vadd.f32 0.0, %v559
        %v561 = vpop.f32.mrf.mxu0
        %v562 = vpop.f32.mrf.mxu0
        %v563 = vadd.f32 0.0, %v562
        %v564 = vpop.f32.mrf.mxu0
        %565 = vmatprep.mubr.bf16.mxu0 0
        %566 = vmatmul.mubr.bf16.gmra.mxu0 %v369
        %v567 = vpop.f32.mrf.mxu0
        %v568 = vadd.f32 0.0, %v567
        %v569 = vpop.f32.mrf.mxu0
        %v570 = vpop.f32.mrf.mxu0
        %v571 = vadd.f32 0.0, %v570
        %v572 = vpop.f32.mrf.mxu0
        %573 = vmatprep.mubr.bf16.mxu0 0
        %574 = vmatmul.mubr.bf16.gmra.mxu0 %v370
        %v575 = vpop.f32.mrf.mxu0
        %v576 = vadd.f32 0.0, %v575
        %v577 = vpop.f32.mrf.mxu0
        %v578 = vpop.f32.mrf.mxu0
        %v579 = vadd.f32 0.0, %v578
        %v580 = vpop.f32.mrf.mxu0
        %581 = vmatprep.mubr.bf16.mxu0 0
        %582 = vmatmul.mubr.bf16.gmra.mxu0 %v371
        %v583 = vpop.f32.mrf.mxu0
        %v584 = vadd.f32 0.0, %v583
        %v585 = vpop.f32.mrf.mxu0
        %v586 = vpop.f32.mrf.mxu0
        %v587 = vadd.f32 0.0, %v586
        %v588 = vpop.f32.mrf.mxu0
        %589 = vmatprep.mubr.bf16.mxu0 0
        %590 = vmatmul.mubr.bf16.gmra.mxu0 %v372
        %v591 = vpop.f32.mrf.mxu0
        %v592 = vadd.f32 0.0, %v591
        %v593 = vpop.f32.mrf.mxu0
        %v594 = vpop.f32.mrf.mxu0
        %v595 = vadd.f32 0.0, %v594
        %v596 = vpop.f32.mrf.mxu0
        %597 = vdwg.mxu0
        %v598 = vadd.f32 %v245, %v472
        %v599 = vadd.f32 %v246, %v475
        %v600 = vadd.f32 %v247, %v480
        %v601 = vadd.f32 %v248, %v483
        %v602 = vadd.f32 %v249, %v488
        %v603 = vadd.f32 %v250, %v491
        %v604 = vadd.f32 %v251, %v496
        %v605 = vadd.f32 %v252, %v499
        %v606 = vadd.f32 %v253, %v504
        %v607 = vadd.f32 %v254, %v507
        %v608 = vadd.f32 %v255, %v512
        %v609 = vadd.f32 %v256, %v515
        %v610 = vadd.f32 %v257, %v520
        %v611 = vadd.f32 %v258, %v523
        %v612 = vadd.f32 %v259, %v528
        %v613 = vadd.f32 %v260, %v531
        %v614 = vadd.f32 %v261, %v536
        %v615 = vadd.f32 %v262, %v539
        %v616 = vadd.f32 %v263, %v544
        %v617 = vadd.f32 %v264, %v547
        %v618 = vadd.f32 %v265, %v552
        %v619 = vadd.f32 %v266, %v555
        %v620 = vadd.f32 %v267, %v560
        %v621 = vadd.f32 %v268, %v563
        %v622 = vadd.f32 %v269, %v568
        %v623 = vadd.f32 %v270, %v571
        %v624 = vadd.f32 %v271, %v576
        %v625 = vadd.f32 %v272, %v579
        %v626 = vadd.f32 %v273, %v584
        %v627 = vadd.f32 %v274, %v587
        %v628 = vadd.f32 %v275, %v592
        %v629 = vadd.f32 %v276, %v595
        %630 = vst [vmem:[#allocation2] sm:$0xff] %v598
        %631 = vst [vmem:[#allocation2 + $0x8] sm:$0xff] %v599
        %632 = vst [vmem:[#allocation2 + $0x10] sm:$0xff] %v600
        %633 = vst [vmem:[#allocation2 + $0x18] sm:$0xff] %v601
        %634 = vst [vmem:[#allocation2 + $0x20] sm:$0xff] %v602
        %635 = vst [vmem:[#allocation2 + $0x28] sm:$0xff] %v603
        %636 = vst [vmem:[#allocation2 + $0x30] sm:$0xff] %v604
        %637 = vst [vmem:[#allocation2 + $0x38] sm:$0xff] %v605
        %638 = vst [vmem:[#allocation2 + $0x40] sm:$0xff] %v606
        %639 = vst [vmem:[#allocation2 + $0x48] sm:$0xff] %v607
        %640 = vst [vmem:[#allocation2 + $0x50] sm:$0xff] %v608
        %641 = vst [vmem:[#allocation2 + $0x58] sm:$0xff] %v609
        %642 = vst [vmem:[#allocation2 + $0x60] sm:$0xff] %v610
        %643 = vst [vmem:[#allocation2 + $0x68] sm:$0xff] %v611
        %644 = vst [vmem:[#allocation2 + $0x70] sm:$0xff] %v612
        %645 = vst [vmem:[#allocation2 + $0x78] sm:$0xff] %v613
        %646 = vst [vmem:[#allocation2 + $0x80] sm:$0xff] %v614
        %647 = vst [vmem:[#allocation2 + $0x88] sm:$0xff] %v615
        %648 = vst [vmem:[#allocation2 + $0x90] sm:$0xff] %v616
        %649 = vst [vmem:[#allocation2 + $0x98] sm:$0xff] %v617
        %650 = vst [vmem:[#allocation2 + $0xa0] sm:$0xff] %v618
        %651 = vst [vmem:[#allocation2 + $0xa8] sm:$0xff] %v619
        %652 = vst [vmem:[#allocation2 + $0xb0] sm:$0xff] %v620
        %653 = vst [vmem:[#allocation2 + $0xb8] sm:$0xff] %v621
        %654 = vst [vmem:[#allocation2 + $0xc0] sm:$0xff] %v622
        %655 = vst [vmem:[#allocation2 + $0xc8] sm:$0xff] %v623
        %656 = vst [vmem:[#allocation2 + $0xd0] sm:$0xff] %v624
        %657 = vst [vmem:[#allocation2 + $0xd8] sm:$0xff] %v625
        %658 = vst [vmem:[#allocation2 + $0xe0] sm:$0xff] %v626
        %659 = vst [vmem:[#allocation2 + $0xe8] sm:$0xff] %v627
        %660 = vst [vmem:[#allocation2 + $0xf0] sm:$0xff] %v628
        %661 = vst [vmem:[#allocation2 + $0xf8] sm:$0xff] %v629
        %v662 = vld [vmem:[%s179] sm:$0xf]
        %v663 = vld [vmem:[%s179 + $0x4] sm:$0xf]
        %v664 = vld [vmem:[%s179 + $0x8] sm:$0x1]
        %v665 = vld [vmem:[%s179 + $0xc] sm:$0xf]
        %v666 = vld [vmem:[%s179 + $0x10] sm:$0xf]
        %v667 = vld [vmem:[%s179 + $0x14] sm:$0x1]
        %v668 = vld [vmem:[%s179 + $0x18] sm:$0xf]
        %v669 = vld [vmem:[%s179 + $0x1c] sm:$0xf]
        %v670 = vld [vmem:[%s179 + $0x20] sm:$0x1]
        %v671 = vld [vmem:[%s179 + $0x24] sm:$0xf]
        %v672 = vld [vmem:[%s179 + $0x28] sm:$0xf]
        %v673 = vld [vmem:[%s179 + $0x2c] sm:$0x1]
        %v674 = vld [vmem:[%s179 + $0x30] sm:$0xf]
        %v675 = vld [vmem:[%s179 + $0x34] sm:$0xf]
        %v676 = vld [vmem:[%s179 + $0x38] sm:$0x1]
        %v677 = vld [vmem:[%s179 + $0x3c] sm:$0xf]
        %v678 = vld [vmem:[%s179 + $0x40] sm:$0xf]
        %v679 = vld [vmem:[%s179 + $0x44] sm:$0x1]
        %v680 = vld [vmem:[%s179 + $0x48] sm:$0xf]
        %v681 = vld [vmem:[%s179 + $0x4c] sm:$0xf]
        %v682 = vld [vmem:[%s179 + $0x50] sm:$0x1]
        %v683 = vld [vmem:[%s179 + $0x54] sm:$0xf]
        %v684 = vld [vmem:[%s179 + $0x58] sm:$0xf]
        %v685 = vld [vmem:[%s179 + $0x5c] sm:$0x1]
        %v686 = vld [vmem:[%s179 + $0x60] sm:$0xf]
        %v687 = vld [vmem:[%s179 + $0x64] sm:$0xf]
        %v688 = vld [vmem:[%s179 + $0x68] sm:$0x1]
        %v689 = vld [vmem:[%s179 + $0x6c] sm:$0xf]
        %v690 = vld [vmem:[%s179 + $0x70] sm:$0xf]
        %v691 = vld [vmem:[%s179 + $0x74] sm:$0x1]
        %v692 = vld [vmem:[%s179 + $0x78] sm:$0xf]
        %v693 = vld [vmem:[%s179 + $0x7c] sm:$0xf]
        %v694 = vld [vmem:[%s179 + $0x80] sm:$0x1]
        %v695 = vld [vmem:[%s179 + $0x84] sm:$0xf]
        %v696 = vld [vmem:[%s179 + $0x88] sm:$0xf]
        %v697 = vld [vmem:[%s179 + $0x8c] sm:$0x1]
        %v698 = vld [vmem:[%s179 + $0x90] sm:$0xf]
        %v699 = vld [vmem:[%s179 + $0x94] sm:$0xf]
        %v700 = vld [vmem:[%s179 + $0x98] sm:$0x1]
        %v701 = vld [vmem:[%s179 + $0x9c] sm:$0xf]
        %v702 = vld [vmem:[%s179 + $0xa0] sm:$0xf]
        %v703 = vld [vmem:[%s179 + $0xa4] sm:$0x1]
        %v704 = vld [vmem:[%s179 + $0xa8] sm:$0xf]
        %v705 = vld [vmem:[%s179 + $0xac] sm:$0xf]
        %v706 = vld [vmem:[%s179 + $0xb0] sm:$0x1]
        %v707 = vld [vmem:[%s179 + $0xb4] sm:$0xf]
        %v708 = vld [vmem:[%s179 + $0xb8] sm:$0xf]
        %v709 = vld [vmem:[%s179 + $0xbc] sm:$0x1]
        %v710 = vld [vmem:[#allocation2] sm:$0xff]
        %v711 = vld [vmem:[#allocation2 + $0x8] sm:$0xff]
        %v712 = vld [vmem:[#allocation2 + $0x10] sm:$0xff]
        %v713 = vld [vmem:[#allocation2 + $0x18] sm:$0xff]
        %v714 = vld [vmem:[#allocation2 + $0x20] sm:$0xff]
        %v715 = vld [vmem:[#allocation2 + $0x28] sm:$0xff]
        %v716 = vld [vmem:[#allocation2 + $0x30] sm:$0xff]
        %v717 = vld [vmem:[#allocation2 + $0x38] sm:$0xff]
        %v718 = vld [vmem:[#allocation2 + $0x40] sm:$0xff]
        %v719 = vld [vmem:[#allocation2 + $0x48] sm:$0xff]
        %v720 = vld [vmem:[#allocation2 + $0x50] sm:$0xff]
        %v721 = vld [vmem:[#allocation2 + $0x58] sm:$0xff]
        %v722 = vld [vmem:[#allocation2 + $0x60] sm:$0xff]
        %v723 = vld [vmem:[#allocation2 + $0x68] sm:$0xff]
        %v724 = vld [vmem:[#allocation2 + $0x70] sm:$0xff]
        %v725 = vld [vmem:[#allocation2 + $0x78] sm:$0xff]
        %v726 = vld [vmem:[#allocation2 + $0x80] sm:$0xff]
        %v727 = vld [vmem:[#allocation2 + $0x88] sm:$0xff]
        %v728 = vld [vmem:[#allocation2 + $0x90] sm:$0xff]
        %v729 = vld [vmem:[#allocation2 + $0x98] sm:$0xff]
        %v730 = vld [vmem:[#allocation2 + $0xa0] sm:$0xff]
        %v731 = vld [vmem:[#allocation2 + $0xa8] sm:$0xff]
        %v732 = vld [vmem:[#allocation2 + $0xb0] sm:$0xff]
        %v733 = vld [vmem:[#allocation2 + $0xb8] sm:$0xff]
        %v734 = vld [vmem:[#allocation2 + $0xc0] sm:$0xff]
        %v735 = vld [vmem:[#allocation2 + $0xc8] sm:$0xff]
        %v736 = vld [vmem:[#allocation2 + $0xd0] sm:$0xff]
        %v737 = vld [vmem:[#allocation2 + $0xd8] sm:$0xff]
        %v738 = vld [vmem:[#allocation2 + $0xe0] sm:$0xff]
        %v739 = vld [vmem:[#allocation2 + $0xe8] sm:$0xff]
        %v740 = vld [vmem:[#allocation2 + $0xf0] sm:$0xff]
        %v741 = vld [vmem:[#allocation2 + $0xf8] sm:$0xff]
        %vm742 = vsmask.f32 3328
        %vm743 = vsmask.f32 7440
        %vm744 = vmor %vm742, %vm743
        %v746 = vshrl.u32 %v662, 16
        %v748 = vrot.slane %v746, 4
        %v749 = vshll.u32 %v662, 16
        %v751 = vrot.slane %v749, 5
        %v752 = vor.u32 %v748, %v751
        %v753 = vrot.slane %v752, 4
        %v755 = vshll.u32 %v663, 16
        %v757 = vrot.slane %v755, 5
        %v758 = vsel %vm744, %v753, %v757
        %v759 = vshrl.u32 %v663, 16
        %v761 = vrot.slane %v759, 4
        %v762 = vor.u32 %v761, %v757
        %v763 = vrot.slane %v762, 4
        %v765 = vshll.u32 %v664, 16
        %v767 = vrot.slane %v765, 5
        %v768 = vsel %vm744, %v763, %v767
        %v770 = vshrl.u32 %v665, 16
        %v772 = vrot.slane %v770, 4
        %v773 = vshll.u32 %v665, 16
        %v775 = vrot.slane %v773, 5
        %v776 = vor.u32 %v772, %v775
        %v777 = vrot.slane %v776, 4
        %v779 = vshll.u32 %v666, 16
        %v781 = vrot.slane %v779, 5
        %v782 = vsel %vm744, %v777, %v781
        %v783 = vshrl.u32 %v666, 16
        %v785 = vrot.slane %v783, 4
        %v786 = vor.u32 %v785, %v781
        %v787 = vrot.slane %v786, 4
        %v789 = vshll.u32 %v667, 16
        %v791 = vrot.slane %v789, 5
        %v792 = vsel %vm744, %v787, %v791
        %v794 = vshrl.u32 %v668, 16
        %v796 = vrot.slane %v794, 4
        %v797 = vshll.u32 %v668, 16
        %v799 = vrot.slane %v797, 5
        %v800 = vor.u32 %v796, %v799
        %v801 = vrot.slane %v800, 4
        %v803 = vshll.u32 %v669, 16
        %v805 = vrot.slane %v803, 5
        %v806 = vsel %vm744, %v801, %v805
        %v807 = vshrl.u32 %v669, 16
        %v809 = vrot.slane %v807, 4
        %v810 = vor.u32 %v809, %v805
        %v811 = vrot.slane %v810, 4
        %v813 = vshll.u32 %v670, 16
        %v815 = vrot.slane %v813, 5
        %v816 = vsel %vm744, %v811, %v815
        %v818 = vshrl.u32 %v671, 16
        %v820 = vrot.slane %v818, 4
        %v821 = vshll.u32 %v671, 16
        %v823 = vrot.slane %v821, 5
        %v824 = vor.u32 %v820, %v823
        %v825 = vrot.slane %v824, 4
        %v827 = vshll.u32 %v672, 16
        %v829 = vrot.slane %v827, 5
        %v830 = vsel %vm744, %v825, %v829
        %v831 = vshrl.u32 %v672, 16
        %v833 = vrot.slane %v831, 4
        %v834 = vor.u32 %v833, %v829
        %v835 = vrot.slane %v834, 4
        %v837 = vshll.u32 %v673, 16
        %v839 = vrot.slane %v837, 5
        %v840 = vsel %vm744, %v835, %v839
        %v842 = vshrl.u32 %v674, 16
        %v844 = vrot.slane %v842, 4
        %v845 = vshll.u32 %v674, 16
        %v847 = vrot.slane %v845, 5
        %v848 = vor.u32 %v844, %v847
        %v849 = vrot.slane %v848, 4
        %v851 = vshll.u32 %v675, 16
        %v853 = vrot.slane %v851, 5
        %v854 = vsel %vm744, %v849, %v853
        %v855 = vshrl.u32 %v675, 16
        %v857 = vrot.slane %v855, 4
        %v858 = vor.u32 %v857, %v853
        %v859 = vrot.slane %v858, 4
        %v861 = vshll.u32 %v676, 16
        %v863 = vrot.slane %v861, 5
        %v864 = vsel %vm744, %v859, %v863
        %v866 = vshrl.u32 %v677, 16
        %v868 = vrot.slane %v866, 4
        %v869 = vshll.u32 %v677, 16
        %v871 = vrot.slane %v869, 5
        %v872 = vor.u32 %v868, %v871
        %v873 = vrot.slane %v872, 4
        %v875 = vshll.u32 %v678, 16
        %v877 = vrot.slane %v875, 5
        %v878 = vsel %vm744, %v873, %v877
        %v879 = vshrl.u32 %v678, 16
        %v881 = vrot.slane %v879, 4
        %v882 = vor.u32 %v881, %v877
        %v883 = vrot.slane %v882, 4
        %v885 = vshll.u32 %v679, 16
        %v887 = vrot.slane %v885, 5
        %v888 = vsel %vm744, %v883, %v887
        %v890 = vshrl.u32 %v680, 16
        %v892 = vrot.slane %v890, 4
        %v893 = vshll.u32 %v680, 16
        %v895 = vrot.slane %v893, 5
        %v896 = vor.u32 %v892, %v895
        %v897 = vrot.slane %v896, 4
        %v899 = vshll.u32 %v681, 16
        %v901 = vrot.slane %v899, 5
        %v902 = vsel %vm744, %v897, %v901
        %v903 = vshrl.u32 %v681, 16
        %v905 = vrot.slane %v903, 4
        %v906 = vor.u32 %v905, %v901
        %v907 = vrot.slane %v906, 4
        %v909 = vshll.u32 %v682, 16
        %v911 = vrot.slane %v909, 5
        %v912 = vsel %vm744, %v907, %v911
        %v914 = vshrl.u32 %v683, 16
        %v916 = vrot.slane %v914, 4
        %v917 = vshll.u32 %v683, 16
        %v919 = vrot.slane %v917, 5
        %v920 = vor.u32 %v916, %v919
        %v921 = vrot.slane %v920, 4
        %v923 = vshll.u32 %v684, 16
        %v925 = vrot.slane %v923, 5
        %v926 = vsel %vm744, %v921, %v925
        %v927 = vshrl.u32 %v684, 16
        %v929 = vrot.slane %v927, 4
        %v930 = vor.u32 %v929, %v925
        %v931 = vrot.slane %v930, 4
        %v933 = vshll.u32 %v685, 16
        %v935 = vrot.slane %v933, 5
        %v936 = vsel %vm744, %v931, %v935
        %v938 = vshrl.u32 %v686, 16
        %v940 = vrot.slane %v938, 4
        %v941 = vshll.u32 %v686, 16
        %v943 = vrot.slane %v941, 5
        %v944 = vor.u32 %v940, %v943
        %v945 = vrot.slane %v944, 4
        %v947 = vshll.u32 %v687, 16
        %v949 = vrot.slane %v947, 5
        %v950 = vsel %vm744, %v945, %v949
        %v951 = vshrl.u32 %v687, 16
        %v953 = vrot.slane %v951, 4
        %v954 = vor.u32 %v953, %v949
        %v955 = vrot.slane %v954, 4
        %v957 = vshll.u32 %v688, 16
        %v959 = vrot.slane %v957, 5
        %v960 = vsel %vm744, %v955, %v959
        %v962 = vshrl.u32 %v689, 16
        %v964 = vrot.slane %v962, 4
        %v965 = vshll.u32 %v689, 16
        %v967 = vrot.slane %v965, 5
        %v968 = vor.u32 %v964, %v967
        %v969 = vrot.slane %v968, 4
        %v971 = vshll.u32 %v690, 16
        %v973 = vrot.slane %v971, 5
        %v974 = vsel %vm744, %v969, %v973
        %v975 = vshrl.u32 %v690, 16
        %v977 = vrot.slane %v975, 4
        %v978 = vor.u32 %v977, %v973
        %v979 = vrot.slane %v978, 4
        %v981 = vshll.u32 %v691, 16
        %v983 = vrot.slane %v981, 5
        %v984 = vsel %vm744, %v979, %v983
        %v986 = vshrl.u32 %v692, 16
        %v988 = vrot.slane %v986, 4
        %v989 = vshll.u32 %v692, 16
        %v991 = vrot.slane %v989, 5
        %v992 = vor.u32 %v988, %v991
        %v993 = vrot.slane %v992, 4
        %v995 = vshll.u32 %v693, 16
        %v997 = vrot.slane %v995, 5
        %v998 = vsel %vm744, %v993, %v997
        %v999 = vshrl.u32 %v693, 16
        %v1001 = vrot.slane %v999, 4
        %v1002 = vor.u32 %v1001, %v997
        %v1003 = vrot.slane %v1002, 4
        %v1005 = vshll.u32 %v694, 16
        %v1007 = vrot.slane %v1005, 5
        %v1008 = vsel %vm744, %v1003, %v1007
        %v1010 = vshrl.u32 %v695, 16
        %v1012 = vrot.slane %v1010, 4
        %v1013 = vshll.u32 %v695, 16
        %v1015 = vrot.slane %v1013, 5
        %v1016 = vor.u32 %v1012, %v1015
        %v1017 = vrot.slane %v1016, 4
        %v1019 = vshll.u32 %v696, 16
        %v1021 = vrot.slane %v1019, 5
        %v1022 = vsel %vm744, %v1017, %v1021
        %v1023 = vshrl.u32 %v696, 16
        %v1025 = vrot.slane %v1023, 4
        %v1026 = vor.u32 %v1025, %v1021
        %v1027 = vrot.slane %v1026, 4
        %v1029 = vshll.u32 %v697, 16
        %v1031 = vrot.slane %v1029, 5
        %v1032 = vsel %vm744, %v1027, %v1031
        %v1034 = vshrl.u32 %v698, 16
        %v1036 = vrot.slane %v1034, 4
        %v1037 = vshll.u32 %v698, 16
        %v1039 = vrot.slane %v1037, 5
        %v1040 = vor.u32 %v1036, %v1039
        %v1041 = vrot.slane %v1040, 4
        %v1043 = vshll.u32 %v699, 16
        %v1045 = vrot.slane %v1043, 5
        %v1046 = vsel %vm744, %v1041, %v1045
        %v1047 = vshrl.u32 %v699, 16
        %v1049 = vrot.slane %v1047, 4
        %v1050 = vor.u32 %v1049, %v1045
        %v1051 = vrot.slane %v1050, 4
        %v1053 = vshll.u32 %v700, 16
        %v1055 = vrot.slane %v1053, 5
        %v1056 = vsel %vm744, %v1051, %v1055
        %v1058 = vshrl.u32 %v701, 16
        %v1060 = vrot.slane %v1058, 4
        %v1061 = vshll.u32 %v701, 16
        %v1063 = vrot.slane %v1061, 5
        %v1064 = vor.u32 %v1060, %v1063
        %v1065 = vrot.slane %v1064, 4
        %v1067 = vshll.u32 %v702, 16
        %v1069 = vrot.slane %v1067, 5
        %v1070 = vsel %vm744, %v1065, %v1069
        %v1071 = vshrl.u32 %v702, 16
        %v1073 = vrot.slane %v1071, 4
        %v1074 = vor.u32 %v1073, %v1069
        %v1075 = vrot.slane %v1074, 4
        %v1077 = vshll.u32 %v703, 16
        %v1079 = vrot.slane %v1077, 5
        %v1080 = vsel %vm744, %v1075, %v1079
        %v1082 = vshrl.u32 %v704, 16
        %v1084 = vrot.slane %v1082, 4
        %v1085 = vshll.u32 %v704, 16
        %v1087 = vrot.slane %v1085, 5
        %v1088 = vor.u32 %v1084, %v1087
        %v1089 = vrot.slane %v1088, 4
        %v1091 = vshll.u32 %v705, 16
        %v1093 = vrot.slane %v1091, 5
        %v1094 = vsel %vm744, %v1089, %v1093
        %v1095 = vshrl.u32 %v705, 16
        %v1097 = vrot.slane %v1095, 4
        %v1098 = vor.u32 %v1097, %v1093
        %v1099 = vrot.slane %v1098, 4
        %v1101 = vshll.u32 %v706, 16
        %v1103 = vrot.slane %v1101, 5
        %v1104 = vsel %vm744, %v1099, %v1103
        %v1106 = vshrl.u32 %v707, 16
        %v1108 = vrot.slane %v1106, 4
        %v1109 = vshll.u32 %v707, 16
        %v1111 = vrot.slane %v1109, 5
        %v1112 = vor.u32 %v1108, %v1111
        %v1113 = vrot.slane %v1112, 4
        %v1115 = vshll.u32 %v708, 16
        %v1117 = vrot.slane %v1115, 5
        %v1118 = vsel %vm744, %v1113, %v1117
        %v1119 = vshrl.u32 %v708, 16
        %v1121 = vrot.slane %v1119, 4
        %v1122 = vor.u32 %v1121, %v1117
        %v1123 = vrot.slane %v1122, 4
        %v1125 = vshll.u32 %v709, 16
        %v1127 = vrot.slane %v1125, 5
        %v1128 = vsel %vm744, %v1123, %v1127
        %s1129 = scalar_lea.vmem %s1, 64
        %v1130 = vld [vmem:[%s1129] sm:$0xf]
        %v1131 = vld [vmem:[%s1129 + $0x4] sm:$0xf]
        %v1132 = vld [vmem:[%s1129 + $0x8] sm:$0xf]
        %v1133 = vld [vmem:[%s1129 + $0xc] sm:$0xf]
        %v1134 = vld [vmem:[%s1129 + $0x10] sm:$0xf]
        %v1135 = vld [vmem:[%s1129 + $0x14] sm:$0xf]
        %v1136 = vld [vmem:[%s1129 + $0x18] sm:$0xf]
        %v1137 = vld [vmem:[%s1129 + $0x1c] sm:$0xf]
        %v1138 = vld [vmem:[%s1129 + $0x20] sm:$0xf]
        %v1139 = vld [vmem:[%s1129 + $0x24] sm:$0xf]
        %v1140 = vld [vmem:[%s1129 + $0x28] sm:$0xf]
        %v1141 = vld [vmem:[%s1129 + $0x2c] sm:$0xf]
        %v1142 = vld [vmem:[%s1129 + $0x30] sm:$0xf]
        %v1143 = vld [vmem:[%s1129 + $0x34] sm:$0xf]
        %v1144 = vld [vmem:[%s1129 + $0x38] sm:$0xf]
        %v1145 = vld [vmem:[%s1129 + $0x3c] sm:$0xf]
        %v1146 = vunpack.c.l.b16 %v758
        %v1147 = vunpack.c.l.b16 %v768
        %v1148 = vunpack.c.l.b16 %v782
        %v1149 = vunpack.c.l.b16 %v792
        %v1150 = vunpack.c.l.b16 %v806
        %v1151 = vunpack.c.l.b16 %v816
        %v1152 = vunpack.c.l.b16 %v830
        %v1153 = vunpack.c.l.b16 %v840
        %v1154 = vunpack.c.l.b16 %v854
        %v1155 = vunpack.c.l.b16 %v864
        %v1156 = vunpack.c.l.b16 %v878
        %v1157 = vunpack.c.l.b16 %v888
        %v1158 = vunpack.c.l.b16 %v902
        %v1159 = vunpack.c.l.b16 %v912
        %v1160 = vunpack.c.l.b16 %v926
        %v1161 = vunpack.c.l.b16 %v936
        %v1162 = vunpack.c.l.b16 %v950
        %v1163 = vunpack.c.l.b16 %v960
        %v1164 = vunpack.c.l.b16 %v974
        %v1165 = vunpack.c.l.b16 %v984
        %v1166 = vunpack.c.l.b16 %v998
        %v1167 = vunpack.c.l.b16 %v1008
        %v1168 = vunpack.c.l.b16 %v1022
        %v1169 = vunpack.c.l.b16 %v1032
        %v1170 = vunpack.c.l.b16 %v1046
        %v1171 = vunpack.c.l.b16 %v1056
        %v1172 = vunpack.c.l.b16 %v1070
        %v1173 = vunpack.c.l.b16 %v1080
        %v1174 = vunpack.c.l.b16 %v1094
        %v1175 = vunpack.c.l.b16 %v1104
        %v1176 = vunpack.c.l.b16 %v1118
        %v1177 = vunpack.c.l.b16 %v1128
        %v1178 = vpack.c.b16 %v1147, %v1146
        %v1179 = vpack.c.b16 %v1149, %v1148
        %v1180 = vpack.c.b16 %v1151, %v1150
        %v1181 = vpack.c.b16 %v1153, %v1152
        %v1182 = vpack.c.b16 %v1155, %v1154
        %v1183 = vpack.c.b16 %v1157, %v1156
        %v1184 = vpack.c.b16 %v1159, %v1158
        %v1185 = vpack.c.b16 %v1161, %v1160
        %v1186 = vpack.c.b16 %v1163, %v1162
        %v1187 = vpack.c.b16 %v1165, %v1164
        %v1188 = vpack.c.b16 %v1167, %v1166
        %v1189 = vpack.c.b16 %v1169, %v1168
        %v1190 = vpack.c.b16 %v1171, %v1170
        %v1191 = vpack.c.b16 %v1173, %v1172
        %v1192 = vpack.c.b16 %v1175, %v1174
        %v1193 = vpack.c.b16 %v1177, %v1176
        %v1226 = vunpack.c.l.b16 %v1130
        %v1227 = vunpack.c.l.b16 %v1131
        %v1228 = vunpack.c.l.b16 %v1132
        %v1229 = vunpack.c.l.b16 %v1133
        %v1230 = vunpack.c.l.b16 %v1134
        %v1231 = vunpack.c.l.b16 %v1135
        %v1232 = vunpack.c.l.b16 %v1136
        %v1233 = vunpack.c.l.b16 %v1137
        %v1234 = vunpack.c.l.b16 %v1138
        %v1235 = vunpack.c.l.b16 %v1139
        %v1236 = vunpack.c.l.b16 %v1140
        %v1237 = vunpack.c.l.b16 %v1141
        %v1238 = vunpack.c.l.b16 %v1142
        %v1239 = vunpack.c.l.b16 %v1143
        %v1240 = vunpack.c.l.b16 %v1144
        %v1241 = vunpack.c.l.b16 %v1145
        %v1242 = vpack.c.b16 %v1227, %v1226
        %v1243 = vpack.c.b16 %v1229, %v1228
        %v1244 = vpack.c.b16 %v1231, %v1230
        %v1245 = vpack.c.b16 %v1233, %v1232
        %v1246 = vpack.c.b16 %v1235, %v1234
        %v1247 = vpack.c.b16 %v1237, %v1236
        %v1248 = vpack.c.b16 %v1239, %v1238
        %v1249 = vpack.c.b16 %v1241, %v1240
        %1258 = vmatprep.subr.bf16.mxu0 0
        %1259 = vmatpush1.bf16.msra.mxu0 %v1249
        %1260 = vmatprep.subr.bf16.mxu0 0
        %1261 = vmatpush1.bf16.msra.mxu0 %v1248
        %1262 = vmatprep.subr.bf16.mxu0 0
        %1263 = vmatpush1.bf16.msra.mxu0 %v1247
        %1264 = vmatprep.subr.bf16.mxu0 0
        %1265 = vmatpush1.bf16.msra.mxu0 %v1246
        %1266 = vmatprep.subr.bf16.mxu0 0
        %1267 = vmatpush1.bf16.msra.mxu0 %v1245
        %1268 = vmatprep.subr.bf16.mxu0 0
        %1269 = vmatpush1.bf16.msra.mxu0 %v1244
        %1270 = vmatprep.subr.bf16.mxu0 0
        %1271 = vmatpush1.bf16.msra.mxu0 %v1243
        %1272 = vmatprep.subr.bf16.mxu0 0
        %1273 = vmatpush1.bf16.msra.mxu0 %v1242
        %1274 = vmatprep.subr.bf16.mxu0 0
        %1275 = vmatpush2.bf16.msra.mxu0 0
        %1276 = vmatprep.subr.bf16.mxu0 0
        %1277 = vmatpush2.bf16.msra.mxu0 0
        %1278 = vmatprep.subr.bf16.mxu0 0
        %1279 = vmatpush2.bf16.msra.mxu0 0
        %1280 = vmatprep.subr.bf16.mxu0 0
        %1281 = vmatpush2.bf16.msra.mxu0 0
        %1282 = vmatprep.subr.bf16.mxu0 0
        %1283 = vmatpush2.bf16.msra.mxu0 0
        %1284 = vmatprep.subr.bf16.mxu0 0
        %1285 = vmatpush2.bf16.msra.mxu0 0
        %1286 = vmatprep.subr.bf16.mxu0 0
        %1287 = vmatpush2.bf16.msra.mxu0 0
        %1288 = vmatprep.subr.bf16.mxu0 0
        %1289 = vmatpush2.bf16.msra.mxu0 0
        %1290 = vmatprep.mubr.bf16.mxu0 0
        %1291 = vmatmul.mubr.bf16.gmra.mxu0 %v1178
        %v1292 = vpop.f32.mrf.mxu0
        %v1293 = vadd.f32 0.0, %v1292
        %v1294 = vpop.f32.mrf.mxu0
        %v1295 = vpop.f32.mrf.mxu0
        %v1296 = vadd.f32 0.0, %v1295
        %v1297 = vpop.f32.mrf.mxu0
        %1298 = vmatprep.mubr.bf16.mxu0 0
        %1299 = vmatmul.mubr.bf16.gmra.mxu0 %v1179
        %v1300 = vpop.f32.mrf.mxu0
        %v1301 = vadd.f32 0.0, %v1300
        %v1302 = vpop.f32.mrf.mxu0
        %v1303 = vpop.f32.mrf.mxu0
        %v1304 = vadd.f32 0.0, %v1303
        %v1305 = vpop.f32.mrf.mxu0
        %1306 = vmatprep.mubr.bf16.mxu0 0
        %1307 = vmatmul.mubr.bf16.gmra.mxu0 %v1180
        %v1308 = vpop.f32.mrf.mxu0
        %v1309 = vadd.f32 0.0, %v1308
        %v1310 = vpop.f32.mrf.mxu0
        %v1311 = vpop.f32.mrf.mxu0
        %v1312 = vadd.f32 0.0, %v1311
        %v1313 = vpop.f32.mrf.mxu0
        %1314 = vmatprep.mubr.bf16.mxu0 0
        %1315 = vmatmul.mubr.bf16.gmra.mxu0 %v1181
        %v1316 = vpop.f32.mrf.mxu0
        %v1317 = vadd.f32 0.0, %v1316
        %v1318 = vpop.f32.mrf.mxu0
        %v1319 = vpop.f32.mrf.mxu0
        %v1320 = vadd.f32 0.0, %v1319
        %v1321 = vpop.f32.mrf.mxu0
        %1322 = vmatprep.mubr.bf16.mxu0 0
        %1323 = vmatmul.mubr.bf16.gmra.mxu0 %v1182
        %v1324 = vpop.f32.mrf.mxu0
        %v1325 = vadd.f32 0.0, %v1324
        %v1326 = vpop.f32.mrf.mxu0
        %v1327 = vpop.f32.mrf.mxu0
        %v1328 = vadd.f32 0.0, %v1327
        %v1329 = vpop.f32.mrf.mxu0
        %1330 = vmatprep.mubr.bf16.mxu0 0
        %1331 = vmatmul.mubr.bf16.gmra.mxu0 %v1183
        %v1332 = vpop.f32.mrf.mxu0
        %v1333 = vadd.f32 0.0, %v1332
        %v1334 = vpop.f32.mrf.mxu0
        %v1335 = vpop.f32.mrf.mxu0
        %v1336 = vadd.f32 0.0, %v1335
        %v1337 = vpop.f32.mrf.mxu0
        %1338 = vmatprep.mubr.bf16.mxu0 0
        %1339 = vmatmul.mubr.bf16.gmra.mxu0 %v1184
        %v1340 = vpop.f32.mrf.mxu0
        %v1341 = vadd.f32 0.0, %v1340
        %v1342 = vpop.f32.mrf.mxu0
        %v1343 = vpop.f32.mrf.mxu0
        %v1344 = vadd.f32 0.0, %v1343
        %v1345 = vpop.f32.mrf.mxu0
        %1346 = vmatprep.mubr.bf16.mxu0 0
        %1347 = vmatmul.mubr.bf16.gmra.mxu0 %v1185
        %v1348 = vpop.f32.mrf.mxu0
        %v1349 = vadd.f32 0.0, %v1348
        %v1350 = vpop.f32.mrf.mxu0
        %v1351 = vpop.f32.mrf.mxu0
        %v1352 = vadd.f32 0.0, %v1351
        %v1353 = vpop.f32.mrf.mxu0
        %1354 = vmatprep.mubr.bf16.mxu0 0
        %1355 = vmatmul.mubr.bf16.gmra.mxu0 %v1186
        %v1356 = vpop.f32.mrf.mxu0
        %v1357 = vadd.f32 0.0, %v1356
        %v1358 = vpop.f32.mrf.mxu0
        %v1359 = vpop.f32.mrf.mxu0
        %v1360 = vadd.f32 0.0, %v1359
        %v1361 = vpop.f32.mrf.mxu0
        %1362 = vmatprep.mubr.bf16.mxu0 0
        %1363 = vmatmul.mubr.bf16.gmra.mxu0 %v1187
        %v1364 = vpop.f32.mrf.mxu0
        %v1365 = vadd.f32 0.0, %v1364
        %v1366 = vpop.f32.mrf.mxu0
        %v1367 = vpop.f32.mrf.mxu0
        %v1368 = vadd.f32 0.0, %v1367
        %v1369 = vpop.f32.mrf.mxu0
        %1370 = vmatprep.mubr.bf16.mxu0 0
        %1371 = vmatmul.mubr.bf16.gmra.mxu0 %v1188
        %v1372 = vpop.f32.mrf.mxu0
        %v1373 = vadd.f32 0.0, %v1372
        %v1374 = vpop.f32.mrf.mxu0
        %v1375 = vpop.f32.mrf.mxu0
        %v1376 = vadd.f32 0.0, %v1375
        %v1377 = vpop.f32.mrf.mxu0
        %1378 = vmatprep.mubr.bf16.mxu0 0
        %1379 = vmatmul.mubr.bf16.gmra.mxu0 %v1189
        %v1380 = vpop.f32.mrf.mxu0
        %v1381 = vadd.f32 0.0, %v1380
        %v1382 = vpop.f32.mrf.mxu0
        %v1383 = vpop.f32.mrf.mxu0
        %v1384 = vadd.f32 0.0, %v1383
        %v1385 = vpop.f32.mrf.mxu0
        %1386 = vmatprep.mubr.bf16.mxu0 0
        %1387 = vmatmul.mubr.bf16.gmra.mxu0 %v1190
        %v1388 = vpop.f32.mrf.mxu0
        %v1389 = vadd.f32 0.0, %v1388
        %v1390 = vpop.f32.mrf.mxu0
        %v1391 = vpop.f32.mrf.mxu0
        %v1392 = vadd.f32 0.0, %v1391
        %v1393 = vpop.f32.mrf.mxu0
        %1394 = vmatprep.mubr.bf16.mxu0 0
        %1395 = vmatmul.mubr.bf16.gmra.mxu0 %v1191
        %v1396 = vpop.f32.mrf.mxu0
        %v1397 = vadd.f32 0.0, %v1396
        %v1398 = vpop.f32.mrf.mxu0
        %v1399 = vpop.f32.mrf.mxu0
        %v1400 = vadd.f32 0.0, %v1399
        %v1401 = vpop.f32.mrf.mxu0
        %1402 = vmatprep.mubr.bf16.mxu0 0
        %1403 = vmatmul.mubr.bf16.gmra.mxu0 %v1192
        %v1404 = vpop.f32.mrf.mxu0
        %v1405 = vadd.f32 0.0, %v1404
        %v1406 = vpop.f32.mrf.mxu0
        %v1407 = vpop.f32.mrf.mxu0
        %v1408 = vadd.f32 0.0, %v1407
        %v1409 = vpop.f32.mrf.mxu0
        %1410 = vmatprep.mubr.bf16.mxu0 0
        %1411 = vmatmul.mubr.bf16.gmra.mxu0 %v1193
        %v1412 = vpop.f32.mrf.mxu0
        %v1413 = vadd.f32 0.0, %v1412
        %v1414 = vpop.f32.mrf.mxu0
        %v1415 = vpop.f32.mrf.mxu0
        %v1416 = vadd.f32 0.0, %v1415
        %v1417 = vpop.f32.mrf.mxu0
        %1418 = vdwg.mxu0
        %v1419 = vadd.f32 %v710, %v1293
        %v1420 = vadd.f32 %v711, %v1296
        %v1421 = vadd.f32 %v712, %v1301
        %v1422 = vadd.f32 %v713, %v1304
        %v1423 = vadd.f32 %v714, %v1309
        %v1424 = vadd.f32 %v715, %v1312
        %v1425 = vadd.f32 %v716, %v1317
        %v1426 = vadd.f32 %v717, %v1320
        %v1427 = vadd.f32 %v718, %v1325
        %v1428 = vadd.f32 %v719, %v1328
        %v1429 = vadd.f32 %v720, %v1333
        %v1430 = vadd.f32 %v721, %v1336
        %v1431 = vadd.f32 %v722, %v1341
        %v1432 = vadd.f32 %v723, %v1344
        %v1433 = vadd.f32 %v724, %v1349
        %v1434 = vadd.f32 %v725, %v1352
        %v1435 = vadd.f32 %v726, %v1357
        %v1436 = vadd.f32 %v727, %v1360
        %v1437 = vadd.f32 %v728, %v1365
        %v1438 = vadd.f32 %v729, %v1368
        %v1439 = vadd.f32 %v730, %v1373
        %v1440 = vadd.f32 %v731, %v1376
        %v1441 = vadd.f32 %v732, %v1381
        %v1442 = vadd.f32 %v733, %v1384
        %v1443 = vadd.f32 %v734, %v1389
        %v1444 = vadd.f32 %v735, %v1392
        %v1445 = vadd.f32 %v736, %v1397
        %v1446 = vadd.f32 %v737, %v1400
        %v1447 = vadd.f32 %v738, %v1405
        %v1448 = vadd.f32 %v739, %v1408
        %v1449 = vadd.f32 %v740, %v1413
        %v1450 = vadd.f32 %v741, %v1416
        %1451 = vst [vmem:[#allocation2] sm:$0xff] %v1419
        %1452 = vst [vmem:[#allocation2 + $0x8] sm:$0xff] %v1420
        %1453 = vst [vmem:[#allocation2 + $0x10] sm:$0xff] %v1421
        %1454 = vst [vmem:[#allocation2 + $0x18] sm:$0xff] %v1422
        %1455 = vst [vmem:[#allocation2 + $0x20] sm:$0xff] %v1423
        %1456 = vst [vmem:[#allocation2 + $0x28] sm:$0xff] %v1424
        %1457 = vst [vmem:[#allocation2 + $0x30] sm:$0xff] %v1425
        %1458 = vst [vmem:[#allocation2 + $0x38] sm:$0xff] %v1426
        %1459 = vst [vmem:[#allocation2 + $0x40] sm:$0xff] %v1427
        %1460 = vst [vmem:[#allocation2 + $0x48] sm:$0xff] %v1428
        %1461 = vst [vmem:[#allocation2 + $0x50] sm:$0xff] %v1429
        %1462 = vst [vmem:[#allocation2 + $0x58] sm:$0xff] %v1430
        %1463 = vst [vmem:[#allocation2 + $0x60] sm:$0xff] %v1431
        %1464 = vst [vmem:[#allocation2 + $0x68] sm:$0xff] %v1432
        %1465 = vst [vmem:[#allocation2 + $0x70] sm:$0xff] %v1433
        %1466 = vst [vmem:[#allocation2 + $0x78] sm:$0xff] %v1434
        %1467 = vst [vmem:[#allocation2 + $0x80] sm:$0xff] %v1435
        %1468 = vst [vmem:[#allocation2 + $0x88] sm:$0xff] %v1436
        %1469 = vst [vmem:[#allocation2 + $0x90] sm:$0xff] %v1437
        %1470 = vst [vmem:[#allocation2 + $0x98] sm:$0xff] %v1438
        %1471 = vst [vmem:[#allocation2 + $0xa0] sm:$0xff] %v1439
        %1472 = vst [vmem:[#allocation2 + $0xa8] sm:$0xff] %v1440
        %1473 = vst [vmem:[#allocation2 + $0xb0] sm:$0xff] %v1441
        %1474 = vst [vmem:[#allocation2 + $0xb8] sm:$0xff] %v1442
        %1475 = vst [vmem:[#allocation2 + $0xc0] sm:$0xff] %v1443
        %1476 = vst [vmem:[#allocation2 + $0xc8] sm:$0xff] %v1444
        %1477 = vst [vmem:[#allocation2 + $0xd0] sm:$0xff] %v1445
        %1478 = vst [vmem:[#allocation2 + $0xd8] sm:$0xff] %v1446
        %1479 = vst [vmem:[#allocation2 + $0xe0] sm:$0xff] %v1447
        %1480 = vst [vmem:[#allocation2 + $0xe8] sm:$0xff] %v1448
        %1481 = vst [vmem:[#allocation2 + $0xf0] sm:$0xff] %v1449
        %1482 = vst [vmem:[#allocation2 + $0xf8] sm:$0xff] %v1450
        %v1483 = vld [vmem:[%s179] sm:$0xe]
        %v1484 = vld [vmem:[%s179 + $0x4] sm:$0xf]
        %v1485 = vld [vmem:[%s179 + $0x8] sm:$0x1]
        %v1486 = vld [vmem:[%s179 + $0xc] sm:$0xe]
        %v1487 = vld [vmem:[%s179 + $0x10] sm:$0xf]
        %v1488 = vld [vmem:[%s179 + $0x14] sm:$0x1]
        %v1489 = vld [vmem:[%s179 + $0x18] sm:$0xe]
        %v1490 = vld [vmem:[%s179 + $0x1c] sm:$0xf]
        %v1491 = vld [vmem:[%s179 + $0x20] sm:$0x1]
        %v1492 = vld [vmem:[%s179 + $0x24] sm:$0xe]
        %v1493 = vld [vmem:[%s179 + $0x28] sm:$0xf]
        %v1494 = vld [vmem:[%s179 + $0x2c] sm:$0x1]
        %v1495 = vld [vmem:[%s179 + $0x30] sm:$0xe]
        %v1496 = vld [vmem:[%s179 + $0x34] sm:$0xf]
        %v1497 = vld [vmem:[%s179 + $0x38] sm:$0x1]
        %v1498 = vld [vmem:[%s179 + $0x3c] sm:$0xe]
        %v1499 = vld [vmem:[%s179 + $0x40] sm:$0xf]
        %v1500 = vld [vmem:[%s179 + $0x44] sm:$0x1]
        %v1501 = vld [vmem:[%s179 + $0x48] sm:$0xe]
        %v1502 = vld [vmem:[%s179 + $0x4c] sm:$0xf]
        %v1503 = vld [vmem:[%s179 + $0x50] sm:$0x1]
        %v1504 = vld [vmem:[%s179 + $0x54] sm:$0xe]
        %v1505 = vld [vmem:[%s179 + $0x58] sm:$0xf]
        %v1506 = vld [vmem:[%s179 + $0x5c] sm:$0x1]
        %v1507 = vld [vmem:[%s179 + $0x60] sm:$0xe]
        %v1508 = vld [vmem:[%s179 + $0x64] sm:$0xf]
        %v1509 = vld [vmem:[%s179 + $0x68] sm:$0x1]
        %v1510 = vld [vmem:[%s179 + $0x6c] sm:$0xe]
        %v1511 = vld [vmem:[%s179 + $0x70] sm:$0xf]
        %v1512 = vld [vmem:[%s179 + $0x74] sm:$0x1]
        %v1513 = vld [vmem:[%s179 + $0x78] sm:$0xe]
        %v1514 = vld [vmem:[%s179 + $0x7c] sm:$0xf]
        %v1515 = vld [vmem:[%s179 + $0x80] sm:$0x1]
        %v1516 = vld [vmem:[%s179 + $0x84] sm:$0xe]
        %v1517 = vld [vmem:[%s179 + $0x88] sm:$0xf]
        %v1518 = vld [vmem:[%s179 + $0x8c] sm:$0x1]
        %v1519 = vld [vmem:[%s179 + $0x90] sm:$0xe]
        %v1520 = vld [vmem:[%s179 + $0x94] sm:$0xf]
        %v1521 = vld [vmem:[%s179 + $0x98] sm:$0x1]
        %v1522 = vld [vmem:[%s179 + $0x9c] sm:$0xe]
        %v1523 = vld [vmem:[%s179 + $0xa0] sm:$0xf]
        %v1524 = vld [vmem:[%s179 + $0xa4] sm:$0x1]
        %v1525 = vld [vmem:[%s179 + $0xa8] sm:$0xe]
        %v1526 = vld [vmem:[%s179 + $0xac] sm:$0xf]
        %v1527 = vld [vmem:[%s179 + $0xb0] sm:$0x1]
        %v1528 = vld [vmem:[%s179 + $0xb4] sm:$0xe]
        %v1529 = vld [vmem:[%s179 + $0xb8] sm:$0xf]
        %v1530 = vld [vmem:[%s179 + $0xbc] sm:$0x1]
        %v1531 = vld [vmem:[#allocation2] sm:$0xff]
        %v1532 = vld [vmem:[#allocation2 + $0x8] sm:$0xff]
        %v1533 = vld [vmem:[#allocation2 + $0x10] sm:$0xff]
        %v1534 = vld [vmem:[#allocation2 + $0x18] sm:$0xff]
        %v1535 = vld [vmem:[#allocation2 + $0x20] sm:$0xff]
        %v1536 = vld [vmem:[#allocation2 + $0x28] sm:$0xff]
        %v1537 = vld [vmem:[#allocation2 + $0x30] sm:$0xff]
        %v1538 = vld [vmem:[#allocation2 + $0x38] sm:$0xff]
        %v1539 = vld [vmem:[#allocation2 + $0x40] sm:$0xff]
        %v1540 = vld [vmem:[#allocation2 + $0x48] sm:$0xff]
        %v1541 = vld [vmem:[#allocation2 + $0x50] sm:$0xff]
        %v1542 = vld [vmem:[#allocation2 + $0x58] sm:$0xff]
        %v1543 = vld [vmem:[#allocation2 + $0x60] sm:$0xff]
        %v1544 = vld [vmem:[#allocation2 + $0x68] sm:$0xff]
        %v1545 = vld [vmem:[#allocation2 + $0x70] sm:$0xff]
        %v1546 = vld [vmem:[#allocation2 + $0x78] sm:$0xff]
        %v1547 = vld [vmem:[#allocation2 + $0x80] sm:$0xff]
        %v1548 = vld [vmem:[#allocation2 + $0x88] sm:$0xff]
        %v1549 = vld [vmem:[#allocation2 + $0x90] sm:$0xff]
        %v1550 = vld [vmem:[#allocation2 + $0x98] sm:$0xff]
        %v1551 = vld [vmem:[#allocation2 + $0xa0] sm:$0xff]
        %v1552 = vld [vmem:[#allocation2 + $0xa8] sm:$0xff]
        %v1553 = vld [vmem:[#allocation2 + $0xb0] sm:$0xff]
        %v1554 = vld [vmem:[#allocation2 + $0xb8] sm:$0xff]
        %v1555 = vld [vmem:[#allocation2 + $0xc0] sm:$0xff]
        %v1556 = vld [vmem:[#allocation2 + $0xc8] sm:$0xff]
        %v1557 = vld [vmem:[#allocation2 + $0xd0] sm:$0xff]
        %v1558 = vld [vmem:[#allocation2 + $0xd8] sm:$0xff]
        %v1559 = vld [vmem:[#allocation2 + $0xe0] sm:$0xff]
        %v1560 = vld [vmem:[#allocation2 + $0xe8] sm:$0xff]
        %v1561 = vld [vmem:[#allocation2 + $0xf0] sm:$0xff]
        %v1562 = vld [vmem:[#allocation2 + $0xf8] sm:$0xff]
        %vm1611 = vcmask 1042432
        %vm1612 = vcmask 1046532
        %vm1613 = vmor %vm1611, %vm1612
        %v1614 = vrot.slane %v1483, 5
        %v1615 = vrot.slane %v1614, 4
        %v1616 = vrot.slane %v1484, 5
        %v1617 = vsel %vm1613, %v1615, %v1616
        %v1618 = vrot.slane %v1616, 4
        %v1619 = vrot.slane %v1485, 5
        %v1620 = vsel %vm1613, %v1618, %v1619
        %v1621 = vrot.slane %v1486, 5
        %v1622 = vrot.slane %v1621, 4
        %v1623 = vrot.slane %v1487, 5
        %v1624 = vsel %vm1613, %v1622, %v1623
        %v1625 = vrot.slane %v1623, 4
        %v1626 = vrot.slane %v1488, 5
        %v1627 = vsel %vm1613, %v1625, %v1626
        %v1628 = vrot.slane %v1489, 5
        %v1629 = vrot.slane %v1628, 4
        %v1630 = vrot.slane %v1490, 5
        %v1631 = vsel %vm1613, %v1629, %v1630
        %v1632 = vrot.slane %v1630, 4
        %v1633 = vrot.slane %v1491, 5
        %v1634 = vsel %vm1613, %v1632, %v1633
        %v1635 = vrot.slane %v1492, 5
        %v1636 = vrot.slane %v1635, 4
        %v1637 = vrot.slane %v1493, 5
        %v1638 = vsel %vm1613, %v1636, %v1637
        %v1639 = vrot.slane %v1637, 4
        %v1640 = vrot.slane %v1494, 5
        %v1641 = vsel %vm1613, %v1639, %v1640
        %v1642 = vrot.slane %v1495, 5
        %v1643 = vrot.slane %v1642, 4
        %v1644 = vrot.slane %v1496, 5
        %v1645 = vsel %vm1613, %v1643, %v1644
        %v1646 = vrot.slane %v1644, 4
        %v1647 = vrot.slane %v1497, 5
        %v1648 = vsel %vm1613, %v1646, %v1647
        %v1649 = vrot.slane %v1498, 5
        %v1650 = vrot.slane %v1649, 4
        %v1651 = vrot.slane %v1499, 5
        %v1652 = vsel %vm1613, %v1650, %v1651
        %v1653 = vrot.slane %v1651, 4
        %v1654 = vrot.slane %v1500, 5
        %v1655 = vsel %vm1613, %v1653, %v1654
        %v1656 = vrot.slane %v1501, 5
        %v1657 = vrot.slane %v1656, 4
        %v1658 = vrot.slane %v1502, 5
        %v1659 = vsel %vm1613, %v1657, %v1658
        %v1660 = vrot.slane %v1658, 4
        %v1661 = vrot.slane %v1503, 5
        %v1662 = vsel %vm1613, %v1660, %v1661
        %v1663 = vrot.slane %v1504, 5
        %v1664 = vrot.slane %v1663, 4
        %v1665 = vrot.slane %v1505, 5
        %v1666 = vsel %vm1613, %v1664, %v1665
        %v1667 = vrot.slane %v1665, 4
        %v1668 = vrot.slane %v1506, 5
        %v1669 = vsel %vm1613, %v1667, %v1668
        %v1670 = vrot.slane %v1507, 5
        %v1671 = vrot.slane %v1670, 4
        %v1672 = vrot.slane %v1508, 5
        %v1673 = vsel %vm1613, %v1671, %v1672
        %v1674 = vrot.slane %v1672, 4
        %v1675 = vrot.slane %v1509, 5
        %v1676 = vsel %vm1613, %v1674, %v1675
        %v1677 = vrot.slane %v1510, 5
        %v1678 = vrot.slane %v1677, 4
        %v1679 = vrot.slane %v1511, 5
        %v1680 = vsel %vm1613, %v1678, %v1679
        %v1681 = vrot.slane %v1679, 4
        %v1682 = vrot.slane %v1512, 5
        %v1683 = vsel %vm1613, %v1681, %v1682
        %v1684 = vrot.slane %v1513, 5
        %v1685 = vrot.slane %v1684, 4
        %v1686 = vrot.slane %v1514, 5
        %v1687 = vsel %vm1613, %v1685, %v1686
        %v1688 = vrot.slane %v1686, 4
        %v1689 = vrot.slane %v1515, 5
        %v1690 = vsel %vm1613, %v1688, %v1689
        %v1691 = vrot.slane %v1516, 5
        %v1692 = vrot.slane %v1691, 4
        %v1693 = vrot.slane %v1517, 5
        %v1694 = vsel %vm1613, %v1692, %v1693
        %v1695 = vrot.slane %v1693, 4
        %v1696 = vrot.slane %v1518, 5
        %v1697 = vsel %vm1613, %v1695, %v1696
        %v1698 = vrot.slane %v1519, 5
        %v1699 = vrot.slane %v1698, 4
        %v1700 = vrot.slane %v1520, 5
        %v1701 = vsel %vm1613, %v1699, %v1700
        %v1702 = vrot.slane %v1700, 4
        %v1703 = vrot.slane %v1521, 5
        %v1704 = vsel %vm1613, %v1702, %v1703
        %v1705 = vrot.slane %v1522, 5
        %v1706 = vrot.slane %v1705, 4
        %v1707 = vrot.slane %v1523, 5
        %v1708 = vsel %vm1613, %v1706, %v1707
        %v1709 = vrot.slane %v1707, 4
        %v1710 = vrot.slane %v1524, 5
        %v1711 = vsel %vm1613, %v1709, %v1710
        %v1712 = vrot.slane %v1525, 5
        %v1713 = vrot.slane %v1712, 4
        %v1714 = vrot.slane %v1526, 5
        %v1715 = vsel %vm1613, %v1713, %v1714
        %v1716 = vrot.slane %v1714, 4
        %v1717 = vrot.slane %v1527, 5
        %v1718 = vsel %vm1613, %v1716, %v1717
        %v1719 = vrot.slane %v1528, 5
        %v1720 = vrot.slane %v1719, 4
        %v1721 = vrot.slane %v1529, 5
        %v1722 = vsel %vm1613, %v1720, %v1721
        %v1723 = vrot.slane %v1721, 4
        %v1724 = vrot.slane %v1530, 5
        %v1725 = vsel %vm1613, %v1723, %v1724
        %s1726 = scalar_lea.vmem %s1, 128
        %v1727 = vld [vmem:[%s1726] sm:$0xf]
        %v1728 = vld [vmem:[%s1726 + $0x4] sm:$0xf]
        %v1729 = vld [vmem:[%s1726 + $0x8] sm:$0xf]
        %v1730 = vld [vmem:[%s1726 + $0xc] sm:$0xf]
        %v1731 = vld [vmem:[%s1726 + $0x10] sm:$0xf]
        %v1732 = vld [vmem:[%s1726 + $0x14] sm:$0xf]
        %v1733 = vld [vmem:[%s1726 + $0x18] sm:$0xf]
        %v1734 = vld [vmem:[%s1726 + $0x1c] sm:$0xf]
        %v1735 = vld [vmem:[%s1726 + $0x20] sm:$0xf]
        %v1736 = vld [vmem:[%s1726 + $0x24] sm:$0xf]
        %v1737 = vld [vmem:[%s1726 + $0x28] sm:$0xf]
        %v1738 = vld [vmem:[%s1726 + $0x2c] sm:$0xf]
        %v1739 = vld [vmem:[%s1726 + $0x30] sm:$0xf]
        %v1740 = vld [vmem:[%s1726 + $0x34] sm:$0xf]
        %v1741 = vld [vmem:[%s1726 + $0x38] sm:$0xf]
        %v1742 = vld [vmem:[%s1726 + $0x3c] sm:$0xf]
        %v1743 = vunpack.c.l.b16 %v1617
        %v1744 = vunpack.c.l.b16 %v1620
        %v1745 = vunpack.c.l.b16 %v1624
        %v1746 = vunpack.c.l.b16 %v1627
        %v1747 = vunpack.c.l.b16 %v1631
        %v1748 = vunpack.c.l.b16 %v1634
        %v1749 = vunpack.c.l.b16 %v1638
        %v1750 = vunpack.c.l.b16 %v1641
        %v1751 = vunpack.c.l.b16 %v1645
        %v1752 = vunpack.c.l.b16 %v1648
        %v1753 = vunpack.c.l.b16 %v1652
        %v1754 = vunpack.c.l.b16 %v1655
        %v1755 = vunpack.c.l.b16 %v1659
        %v1756 = vunpack.c.l.b16 %v1662
        %v1757 = vunpack.c.l.b16 %v1666
        %v1758 = vunpack.c.l.b16 %v1669
        %v1759 = vunpack.c.l.b16 %v1673
        %v1760 = vunpack.c.l.b16 %v1676
        %v1761 = vunpack.c.l.b16 %v1680
        %v1762 = vunpack.c.l.b16 %v1683
        %v1763 = vunpack.c.l.b16 %v1687
        %v1764 = vunpack.c.l.b16 %v1690
        %v1765 = vunpack.c.l.b16 %v1694
        %v1766 = vunpack.c.l.b16 %v1697
        %v1767 = vunpack.c.l.b16 %v1701
        %v1768 = vunpack.c.l.b16 %v1704
        %v1769 = vunpack.c.l.b16 %v1708
        %v1770 = vunpack.c.l.b16 %v1711
        %v1771 = vunpack.c.l.b16 %v1715
        %v1772 = vunpack.c.l.b16 %v1718
        %v1773 = vunpack.c.l.b16 %v1722
        %v1774 = vunpack.c.l.b16 %v1725
        %v1775 = vpack.c.b16 %v1744, %v1743
        %v1776 = vpack.c.b16 %v1746, %v1745
        %v1777 = vpack.c.b16 %v1748, %v1747
        %v1778 = vpack.c.b16 %v1750, %v1749
        %v1779 = vpack.c.b16 %v1752, %v1751
        %v1780 = vpack.c.b16 %v1754, %v1753
        %v1781 = vpack.c.b16 %v1756, %v1755
        %v1782 = vpack.c.b16 %v1758, %v1757
        %v1783 = vpack.c.b16 %v1760, %v1759
        %v1784 = vpack.c.b16 %v1762, %v1761
        %v1785 = vpack.c.b16 %v1764, %v1763
        %v1786 = vpack.c.b16 %v1766, %v1765
        %v1787 = vpack.c.b16 %v1768, %v1767
        %v1788 = vpack.c.b16 %v1770, %v1769
        %v1789 = vpack.c.b16 %v1772, %v1771
        %v1790 = vpack.c.b16 %v1774, %v1773
        %v1823 = vunpack.c.l.b16 %v1727
        %v1824 = vunpack.c.l.b16 %v1728
        %v1825 = vunpack.c.l.b16 %v1729
        %v1826 = vunpack.c.l.b16 %v1730
        %v1827 = vunpack.c.l.b16 %v1731
        %v1828 = vunpack.c.l.b16 %v1732
        %v1829 = vunpack.c.l.b16 %v1733
        %v1830 = vunpack.c.l.b16 %v1734
        %v1831 = vunpack.c.l.b16 %v1735
        %v1832 = vunpack.c.l.b16 %v1736
        %v1833 = vunpack.c.l.b16 %v1737
        %v1834 = vunpack.c.l.b16 %v1738
        %v1835 = vunpack.c.l.b16 %v1739
        %v1836 = vunpack.c.l.b16 %v1740
        %v1837 = vunpack.c.l.b16 %v1741
        %v1838 = vunpack.c.l.b16 %v1742
        %v1839 = vpack.c.b16 %v1824, %v1823
        %v1840 = vpack.c.b16 %v1826, %v1825
        %v1841 = vpack.c.b16 %v1828, %v1827
        %v1842 = vpack.c.b16 %v1830, %v1829
        %v1843 = vpack.c.b16 %v1832, %v1831
        %v1844 = vpack.c.b16 %v1834, %v1833
        %v1845 = vpack.c.b16 %v1836, %v1835
        %v1846 = vpack.c.b16 %v1838, %v1837
        %1855 = vmatprep.subr.bf16.mxu0 0
        %1856 = vmatpush1.bf16.msra.mxu0 %v1846
        %1857 = vmatprep.subr.bf16.mxu0 0
        %1858 = vmatpush1.bf16.msra.mxu0 %v1845
        %1859 = vmatprep.subr.bf16.mxu0 0
        %1860 = vmatpush1.bf16.msra.mxu0 %v1844
        %1861 = vmatprep.subr.bf16.mxu0 0
        %1862 = vmatpush1.bf16.msra.mxu0 %v1843
        %1863 = vmatprep.subr.bf16.mxu0 0
        %1864 = vmatpush1.bf16.msra.mxu0 %v1842
        %1865 = vmatprep.subr.bf16.mxu0 0
        %1866 = vmatpush1.bf16.msra.mxu0 %v1841
        %1867 = vmatprep.subr.bf16.mxu0 0
        %1868 = vmatpush1.bf16.msra.mxu0 %v1840
        %1869 = vmatprep.subr.bf16.mxu0 0
        %1870 = vmatpush1.bf16.msra.mxu0 %v1839
        %1871 = vmatprep.subr.bf16.mxu0 0
        %1872 = vmatpush2.bf16.msra.mxu0 0
        %1873 = vmatprep.subr.bf16.mxu0 0
        %1874 = vmatpush2.bf16.msra.mxu0 0
        %1875 = vmatprep.subr.bf16.mxu0 0
        %1876 = vmatpush2.bf16.msra.mxu0 0
        %1877 = vmatprep.subr.bf16.mxu0 0
        %1878 = vmatpush2.bf16.msra.mxu0 0
        %1879 = vmatprep.subr.bf16.mxu0 0
        %1880 = vmatpush2.bf16.msra.mxu0 0
        %1881 = vmatprep.subr.bf16.mxu0 0
        %1882 = vmatpush2.bf16.msra.mxu0 0
        %1883 = vmatprep.subr.bf16.mxu0 0
        %1884 = vmatpush2.bf16.msra.mxu0 0
        %1885 = vmatprep.subr.bf16.mxu0 0
        %1886 = vmatpush2.bf16.msra.mxu0 0
        %1887 = vmatprep.mubr.bf16.mxu0 0
        %1888 = vmatmul.mubr.bf16.gmra.mxu0 %v1775
        %v1889 = vpop.f32.mrf.mxu0
        %v1890 = vadd.f32 0.0, %v1889
        %v1891 = vpop.f32.mrf.mxu0
        %v1892 = vpop.f32.mrf.mxu0
        %v1893 = vadd.f32 0.0, %v1892
        %v1894 = vpop.f32.mrf.mxu0
        %1895 = vmatprep.mubr.bf16.mxu0 0
        %1896 = vmatmul.mubr.bf16.gmra.mxu0 %v1776
        %v1897 = vpop.f32.mrf.mxu0
        %v1898 = vadd.f32 0.0, %v1897
        %v1899 = vpop.f32.mrf.mxu0
        %v1900 = vpop.f32.mrf.mxu0
        %v1901 = vadd.f32 0.0, %v1900
        %v1902 = vpop.f32.mrf.mxu0
        %1903 = vmatprep.mubr.bf16.mxu0 0
        %1904 = vmatmul.mubr.bf16.gmra.mxu0 %v1777
        %v1905 = vpop.f32.mrf.mxu0
        %v1906 = vadd.f32 0.0, %v1905
        %v1907 = vpop.f32.mrf.mxu0
        %v1908 = vpop.f32.mrf.mxu0
        %v1909 = vadd.f32 0.0, %v1908
        %v1910 = vpop.f32.mrf.mxu0
        %1911 = vmatprep.mubr.bf16.mxu0 0
        %1912 = vmatmul.mubr.bf16.gmra.mxu0 %v1778
        %v1913 = vpop.f32.mrf.mxu0
        %v1914 = vadd.f32 0.0, %v1913
        %v1915 = vpop.f32.mrf.mxu0
        %v1916 = vpop.f32.mrf.mxu0
        %v1917 = vadd.f32 0.0, %v1916
        %v1918 = vpop.f32.mrf.mxu0
        %1919 = vmatprep.mubr.bf16.mxu0 0
        %1920 = vmatmul.mubr.bf16.gmra.mxu0 %v1779
        %v1921 = vpop.f32.mrf.mxu0
        %v1922 = vadd.f32 0.0, %v1921
        %v1923 = vpop.f32.mrf.mxu0
        %v1924 = vpop.f32.mrf.mxu0
        %v1925 = vadd.f32 0.0, %v1924
        %v1926 = vpop.f32.mrf.mxu0
        %1927 = vmatprep.mubr.bf16.mxu0 0
        %1928 = vmatmul.mubr.bf16.gmra.mxu0 %v1780
        %v1929 = vpop.f32.mrf.mxu0
        %v1930 = vadd.f32 0.0, %v1929
        %v1931 = vpop.f32.mrf.mxu0
        %v1932 = vpop.f32.mrf.mxu0
        %v1933 = vadd.f32 0.0, %v1932
        %v1934 = vpop.f32.mrf.mxu0
        %1935 = vmatprep.mubr.bf16.mxu0 0
        %1936 = vmatmul.mubr.bf16.gmra.mxu0 %v1781
        %v1937 = vpop.f32.mrf.mxu0
        %v1938 = vadd.f32 0.0, %v1937
        %v1939 = vpop.f32.mrf.mxu0
        %v1940 = vpop.f32.mrf.mxu0
        %v1941 = vadd.f32 0.0, %v1940
        %v1942 = vpop.f32.mrf.mxu0
        %1943 = vmatprep.mubr.bf16.mxu0 0
        %1944 = vmatmul.mubr.bf16.gmra.mxu0 %v1782
        %v1945 = vpop.f32.mrf.mxu0
        %v1946 = vadd.f32 0.0, %v1945
        %v1947 = vpop.f32.mrf.mxu0
        %v1948 = vpop.f32.mrf.mxu0
        %v1949 = vadd.f32 0.0, %v1948
        %v1950 = vpop.f32.mrf.mxu0
        %1951 = vmatprep.mubr.bf16.mxu0 0
        %1952 = vmatmul.mubr.bf16.gmra.mxu0 %v1783
        %v1953 = vpop.f32.mrf.mxu0
        %v1954 = vadd.f32 0.0, %v1953
        %v1955 = vpop.f32.mrf.mxu0
        %v1956 = vpop.f32.mrf.mxu0
        %v1957 = vadd.f32 0.0, %v1956
        %v1958 = vpop.f32.mrf.mxu0
        %1959 = vmatprep.mubr.bf16.mxu0 0
        %1960 = vmatmul.mubr.bf16.gmra.mxu0 %v1784
        %v1961 = vpop.f32.mrf.mxu0
        %v1962 = vadd.f32 0.0, %v1961
        %v1963 = vpop.f32.mrf.mxu0
        %v1964 = vpop.f32.mrf.mxu0
        %v1965 = vadd.f32 0.0, %v1964
        %v1966 = vpop.f32.mrf.mxu0
        %1967 = vmatprep.mubr.bf16.mxu0 0
        %1968 = vmatmul.mubr.bf16.gmra.mxu0 %v1785
        %v1969 = vpop.f32.mrf.mxu0
        %v1970 = vadd.f32 0.0, %v1969
        %v1971 = vpop.f32.mrf.mxu0
        %v1972 = vpop.f32.mrf.mxu0
        %v1973 = vadd.f32 0.0, %v1972
        %v1974 = vpop.f32.mrf.mxu0
        %1975 = vmatprep.mubr.bf16.mxu0 0
        %1976 = vmatmul.mubr.bf16.gmra.mxu0 %v1786
        %v1977 = vpop.f32.mrf.mxu0
        %v1978 = vadd.f32 0.0, %v1977
        %v1979 = vpop.f32.mrf.mxu0
        %v1980 = vpop.f32.mrf.mxu0
        %v1981 = vadd.f32 0.0, %v1980
        %v1982 = vpop.f32.mrf.mxu0
        %1983 = vmatprep.mubr.bf16.mxu0 0
        %1984 = vmatmul.mubr.bf16.gmra.mxu0 %v1787
        %v1985 = vpop.f32.mrf.mxu0
        %v1986 = vadd.f32 0.0, %v1985
        %v1987 = vpop.f32.mrf.mxu0
        %v1988 = vpop.f32.mrf.mxu0
        %v1989 = vadd.f32 0.0, %v1988
        %v1990 = vpop.f32.mrf.mxu0
        %1991 = vmatprep.mubr.bf16.mxu0 0
        %1992 = vmatmul.mubr.bf16.gmra.mxu0 %v1788
        %v1993 = vpop.f32.mrf.mxu0
        %v1994 = vadd.f32 0.0, %v1993
        %v1995 = vpop.f32.mrf.mxu0
        %v1996 = vpop.f32.mrf.mxu0
        %v1997 = vadd.f32 0.0, %v1996
        %v1998 = vpop.f32.mrf.mxu0
        %1999 = vmatprep.mubr.bf16.mxu0 0
        %2000 = vmatmul.mubr.bf16.gmra.mxu0 %v1789
        %v2001 = vpop.f32.mrf.mxu0
        %v2002 = vadd.f32 0.0, %v2001
        %v2003 = vpop.f32.mrf.mxu0
        %v2004 = vpop.f32.mrf.mxu0
        %v2005 = vadd.f32 0.0, %v2004
        %v2006 = vpop.f32.mrf.mxu0
        %2007 = vmatprep.mubr.bf16.mxu0 0
        %2008 = vmatmul.mubr.bf16.gmra.mxu0 %v1790
        %v2009 = vpop.f32.mrf.mxu0
        %v2010 = vadd.f32 0.0, %v2009
        %v2011 = vpop.f32.mrf.mxu0
        %v2012 = vpop.f32.mrf.mxu0
        %v2013 = vadd.f32 0.0, %v2012
        %v2014 = vpop.f32.mrf.mxu0
        %2015 = vdwg.mxu0
        %v2016 = vadd.f32 %v1531, %v1890
        %v2017 = vadd.f32 %v1532, %v1893
        %v2018 = vadd.f32 %v1533, %v1898
        %v2019 = vadd.f32 %v1534, %v1901
        %v2020 = vadd.f32 %v1535, %v1906
        %v2021 = vadd.f32 %v1536, %v1909
        %v2022 = vadd.f32 %v1537, %v1914
        %v2023 = vadd.f32 %v1538, %v1917
        %v2024 = vadd.f32 %v1539, %v1922
        %v2025 = vadd.f32 %v1540, %v1925
        %v2026 = vadd.f32 %v1541, %v1930
        %v2027 = vadd.f32 %v1542, %v1933
        %v2028 = vadd.f32 %v1543, %v1938
        %v2029 = vadd.f32 %v1544, %v1941
        %v2030 = vadd.f32 %v1545, %v1946
        %v2031 = vadd.f32 %v1546, %v1949
        %v2032 = vadd.f32 %v1547, %v1954
        %v2033 = vadd.f32 %v1548, %v1957
        %v2034 = vadd.f32 %v1549, %v1962
        %v2035 = vadd.f32 %v1550, %v1965
        %v2036 = vadd.f32 %v1551, %v1970
        %v2037 = vadd.f32 %v1552, %v1973
        %v2038 = vadd.f32 %v1553, %v1978
        %v2039 = vadd.f32 %v1554, %v1981
        %v2040 = vadd.f32 %v1555, %v1986
        %v2041 = vadd.f32 %v1556, %v1989
        %v2042 = vadd.f32 %v1557, %v1994
        %v2043 = vadd.f32 %v1558, %v1997
        %v2044 = vadd.f32 %v1559, %v2002
        %v2045 = vadd.f32 %v1560, %v2005
        %v2046 = vadd.f32 %v1561, %v2010
        %v2047 = vadd.f32 %v1562, %v2013
        %2048 = vst [vmem:[#allocation2] sm:$0xff] %v2016
        %2049 = vst [vmem:[#allocation2 + $0x8] sm:$0xff] %v2017
        %2050 = vst [vmem:[#allocation2 + $0x10] sm:$0xff] %v2018
        %2051 = vst [vmem:[#allocation2 + $0x18] sm:$0xff] %v2019
        %2052 = vst [vmem:[#allocation2 + $0x20] sm:$0xff] %v2020
        %2053 = vst [vmem:[#allocation2 + $0x28] sm:$0xff] %v2021
        %2054 = vst [vmem:[#allocation2 + $0x30] sm:$0xff] %v2022
        %2055 = vst [vmem:[#allocation2 + $0x38] sm:$0xff] %v2023
        %2056 = vst [vmem:[#allocation2 + $0x40] sm:$0xff] %v2024
        %2057 = vst [vmem:[#allocation2 + $0x48] sm:$0xff] %v2025
        %2058 = vst [vmem:[#allocation2 + $0x50] sm:$0xff] %v2026
        %2059 = vst [vmem:[#allocation2 + $0x58] sm:$0xff] %v2027
        %2060 = vst [vmem:[#allocation2 + $0x60] sm:$0xff] %v2028
        %2061 = vst [vmem:[#allocation2 + $0x68] sm:$0xff] %v2029
        %2062 = vst [vmem:[#allocation2 + $0x70] sm:$0xff] %v2030
        %2063 = vst [vmem:[#allocation2 + $0x78] sm:$0xff] %v2031
        %2064 = vst [vmem:[#allocation2 + $0x80] sm:$0xff] %v2032
        %2065 = vst [vmem:[#allocation2 + $0x88] sm:$0xff] %v2033
        %2066 = vst [vmem:[#allocation2 + $0x90] sm:$0xff] %v2034
        %2067 = vst [vmem:[#allocation2 + $0x98] sm:$0xff] %v2035
        %2068 = vst [vmem:[#allocation2 + $0xa0] sm:$0xff] %v2036
        %2069 = vst [vmem:[#allocation2 + $0xa8] sm:$0xff] %v2037
        %2070 = vst [vmem:[#allocation2 + $0xb0] sm:$0xff] %v2038
        %2071 = vst [vmem:[#allocation2 + $0xb8] sm:$0xff] %v2039
        %2072 = vst [vmem:[#allocation2 + $0xc0] sm:$0xff] %v2040
        %2073 = vst [vmem:[#allocation2 + $0xc8] sm:$0xff] %v2041
        %2074 = vst [vmem:[#allocation2 + $0xd0] sm:$0xff] %v2042
        %2075 = vst [vmem:[#allocation2 + $0xd8] sm:$0xff] %v2043
        %2076 = vst [vmem:[#allocation2 + $0xe0] sm:$0xff] %v2044
        %2077 = vst [vmem:[#allocation2 + $0xe8] sm:$0xff] %v2045
        %2078 = vst [vmem:[#allocation2 + $0xf0] sm:$0xff] %v2046
        %2079 = vst [vmem:[#allocation2 + $0xf8] sm:$0xff] %v2047
        %s2080 = scalar_lea.vmem %s179, 12
        %v2081 = vld [vmem:[%s2080] sm:$0xf]
        %v2082 = vld [vmem:[%s2080 + $0x4] sm:$0xf]
        %v2083 = vld [vmem:[%s2080 + $0xc] sm:$0xf]
        %v2084 = vld [vmem:[%s2080 + $0x10] sm:$0xf]
        %v2085 = vld [vmem:[%s2080 + $0x18] sm:$0xf]
        %v2086 = vld [vmem:[%s2080 + $0x1c] sm:$0xf]
        %v2087 = vld [vmem:[%s2080 + $0x24] sm:$0xf]
        %v2088 = vld [vmem:[%s2080 + $0x28] sm:$0xf]
        %v2089 = vld [vmem:[%s2080 + $0x30] sm:$0xf]
        %v2090 = vld [vmem:[%s2080 + $0x34] sm:$0xf]
        %v2091 = vld [vmem:[%s2080 + $0x3c] sm:$0xf]
        %v2092 = vld [vmem:[%s2080 + $0x40] sm:$0xf]
        %v2093 = vld [vmem:[%s2080 + $0x48] sm:$0xf]
        %v2094 = vld [vmem:[%s2080 + $0x4c] sm:$0xf]
        %v2095 = vld [vmem:[%s2080 + $0x54] sm:$0xf]
        %v2096 = vld [vmem:[%s2080 + $0x58] sm:$0xf]
        %v2097 = vld [vmem:[%s2080 + $0x60] sm:$0xf]
        %v2098 = vld [vmem:[%s2080 + $0x64] sm:$0xf]
        %v2099 = vld [vmem:[%s2080 + $0x6c] sm:$0xf]
        %v2100 = vld [vmem:[%s2080 + $0x70] sm:$0xf]
        %v2101 = vld [vmem:[%s2080 + $0x78] sm:$0xf]
        %v2102 = vld [vmem:[%s2080 + $0x7c] sm:$0xf]
        %v2103 = vld [vmem:[%s2080 + $0x84] sm:$0xf]
        %v2104 = vld [vmem:[%s2080 + $0x88] sm:$0xf]
        %v2105 = vld [vmem:[%s2080 + $0x90] sm:$0xf]
        %v2106 = vld [vmem:[%s2080 + $0x94] sm:$0xf]
        %v2107 = vld [vmem:[%s2080 + $0x9c] sm:$0xf]
        %v2108 = vld [vmem:[%s2080 + $0xa0] sm:$0xf]
        %v2109 = vld [vmem:[%s2080 + $0xa8] sm:$0xf]
        %v2110 = vld [vmem:[%s2080 + $0xac] sm:$0xf]
        %v2111 = vld [vmem:[%s2080 + $0xb4] sm:$0xf]
        %v2112 = vld [vmem:[%s2080 + $0xb8] sm:$0xf]
        %v2113 = vld [vmem:[#allocation2] sm:$0xff]
        %v2114 = vld [vmem:[#allocation2 + $0x8] sm:$0xff]
        %v2115 = vld [vmem:[#allocation2 + $0x10] sm:$0xff]
        %v2116 = vld [vmem:[#allocation2 + $0x18] sm:$0xff]
        %v2117 = vld [vmem:[#allocation2 + $0x20] sm:$0xff]
        %v2118 = vld [vmem:[#allocation2 + $0x28] sm:$0xff]
        %v2119 = vld [vmem:[#allocation2 + $0x30] sm:$0xff]
        %v2120 = vld [vmem:[#allocation2 + $0x38] sm:$0xff]
        %v2121 = vld [vmem:[#allocation2 + $0x40] sm:$0xff]
        %v2122 = vld [vmem:[#allocation2 + $0x48] sm:$0xff]
        %v2123 = vld [vmem:[#allocation2 + $0x50] sm:$0xff]
        %v2124 = vld [vmem:[#allocation2 + $0x58] sm:$0xff]
        %v2125 = vld [vmem:[#allocation2 + $0x60] sm:$0xff]
        %v2126 = vld [vmem:[#allocation2 + $0x68] sm:$0xff]
        %v2127 = vld [vmem:[#allocation2 + $0x70] sm:$0xff]
        %v2128 = vld [vmem:[#allocation2 + $0x78] sm:$0xff]
        %v2129 = vld [vmem:[#allocation2 + $0x80] sm:$0xff]
        %v2130 = vld [vmem:[#allocation2 + $0x88] sm:$0xff]
        %v2131 = vld [vmem:[#allocation2 + $0x90] sm:$0xff]
        %v2132 = vld [vmem:[#allocation2 + $0x98] sm:$0xff]
        %v2133 = vld [vmem:[#allocation2 + $0xa0] sm:$0xff]
        %v2134 = vld [vmem:[#allocation2 + $0xa8] sm:$0xff]
        %v2135 = vld [vmem:[#allocation2 + $0xb0] sm:$0xff]
        %v2136 = vld [vmem:[#allocation2 + $0xb8] sm:$0xff]
        %v2137 = vld [vmem:[#allocation2 + $0xc0] sm:$0xff]
        %v2138 = vld [vmem:[#allocation2 + $0xc8] sm:$0xff]
        %v2139 = vld [vmem:[#allocation2 + $0xd0] sm:$0xff]
        %v2140 = vld [vmem:[#allocation2 + $0xd8] sm:$0xff]
        %v2141 = vld [vmem:[#allocation2 + $0xe0] sm:$0xff]
        %v2142 = vld [vmem:[#allocation2 + $0xe8] sm:$0xff]
        %v2143 = vld [vmem:[#allocation2 + $0xf0] sm:$0xff]
        %v2144 = vld [vmem:[#allocation2 + $0xf8] sm:$0xff]
        %s2145 = scalar_lea.vmem %s1, 192
        %v2146 = vld [vmem:[%s2145] sm:$0xf]
        %v2147 = vld [vmem:[%s2145 + $0x4] sm:$0xf]
        %v2148 = vld [vmem:[%s2145 + $0x8] sm:$0xf]
        %v2149 = vld [vmem:[%s2145 + $0xc] sm:$0xf]
        %v2150 = vld [vmem:[%s2145 + $0x10] sm:$0xf]
        %v2151 = vld [vmem:[%s2145 + $0x14] sm:$0xf]
        %v2152 = vld [vmem:[%s2145 + $0x18] sm:$0xf]
        %v2153 = vld [vmem:[%s2145 + $0x1c] sm:$0xf]
        %v2154 = vld [vmem:[%s2145 + $0x20] sm:$0xf]
        %v2155 = vld [vmem:[%s2145 + $0x24] sm:$0xf]
        %v2156 = vld [vmem:[%s2145 + $0x28] sm:$0xf]
        %v2157 = vld [vmem:[%s2145 + $0x2c] sm:$0xf]
        %v2158 = vld [vmem:[%s2145 + $0x30] sm:$0xf]
        %v2159 = vld [vmem:[%s2145 + $0x34] sm:$0xf]
        %v2160 = vld [vmem:[%s2145 + $0x38] sm:$0xf]
        %v2161 = vld [vmem:[%s2145 + $0x3c] sm:$0xf]
        %v2194 = vunpack.c.l.b16 %v2081
        %v2195 = vunpack.c.l.b16 %v2082
        %v2196 = vunpack.c.l.b16 %v2083
        %v2197 = vunpack.c.l.b16 %v2084
        %v2198 = vunpack.c.l.b16 %v2085
        %v2199 = vunpack.c.l.b16 %v2086
        %v2200 = vunpack.c.l.b16 %v2087
        %v2201 = vunpack.c.l.b16 %v2088
        %v2202 = vunpack.c.l.b16 %v2089
        %v2203 = vunpack.c.l.b16 %v2090
        %v2204 = vunpack.c.l.b16 %v2091
        %v2205 = vunpack.c.l.b16 %v2092
        %v2206 = vunpack.c.l.b16 %v2093
        %v2207 = vunpack.c.l.b16 %v2094
        %v2208 = vunpack.c.l.b16 %v2095
        %v2209 = vunpack.c.l.b16 %v2096
        %v2210 = vunpack.c.l.b16 %v2097
        %v2211 = vunpack.c.l.b16 %v2098
        %v2212 = vunpack.c.l.b16 %v2099
        %v2213 = vunpack.c.l.b16 %v2100
        %v2214 = vunpack.c.l.b16 %v2101
        %v2215 = vunpack.c.l.b16 %v2102
        %v2216 = vunpack.c.l.b16 %v2103
        %v2217 = vunpack.c.l.b16 %v2104
        %v2218 = vunpack.c.l.b16 %v2105
        %v2219 = vunpack.c.l.b16 %v2106
        %v2220 = vunpack.c.l.b16 %v2107
        %v2221 = vunpack.c.l.b16 %v2108
        %v2222 = vunpack.c.l.b16 %v2109
        %v2223 = vunpack.c.l.b16 %v2110
        %v2224 = vunpack.c.l.b16 %v2111
        %v2225 = vunpack.c.l.b16 %v2112
        %v2226 = vpack.c.b16 %v2195, %v2194
        %v2227 = vpack.c.b16 %v2197, %v2196
        %v2228 = vpack.c.b16 %v2199, %v2198
        %v2229 = vpack.c.b16 %v2201, %v2200
        %v2230 = vpack.c.b16 %v2203, %v2202
        %v2231 = vpack.c.b16 %v2205, %v2204
        %v2232 = vpack.c.b16 %v2207, %v2206
        %v2233 = vpack.c.b16 %v2209, %v2208
        %v2234 = vpack.c.b16 %v2211, %v2210
        %v2235 = vpack.c.b16 %v2213, %v2212
        %v2236 = vpack.c.b16 %v2215, %v2214
        %v2237 = vpack.c.b16 %v2217, %v2216
        %v2238 = vpack.c.b16 %v2219, %v2218
        %v2239 = vpack.c.b16 %v2221, %v2220
        %v2240 = vpack.c.b16 %v2223, %v2222
        %v2241 = vpack.c.b16 %v2225, %v2224
        %v2274 = vunpack.c.l.b16 %v2146
        %v2275 = vunpack.c.l.b16 %v2147
        %v2276 = vunpack.c.l.b16 %v2148
        %v2277 = vunpack.c.l.b16 %v2149
        %v2278 = vunpack.c.l.b16 %v2150
        %v2279 = vunpack.c.l.b16 %v2151
        %v2280 = vunpack.c.l.b16 %v2152
        %v2281 = vunpack.c.l.b16 %v2153
        %v2282 = vunpack.c.l.b16 %v2154
        %v2283 = vunpack.c.l.b16 %v2155
        %v2284 = vunpack.c.l.b16 %v2156
        %v2285 = vunpack.c.l.b16 %v2157
        %v2286 = vunpack.c.l.b16 %v2158
        %v2287 = vunpack.c.l.b16 %v2159
        %v2288 = vunpack.c.l.b16 %v2160
        %v2289 = vunpack.c.l.b16 %v2161
        %v2290 = vpack.c.b16 %v2275, %v2274
        %v2291 = vpack.c.b16 %v2277, %v2276
        %v2292 = vpack.c.b16 %v2279, %v2278
        %v2293 = vpack.c.b16 %v2281, %v2280
        %v2294 = vpack.c.b16 %v2283, %v2282
        %v2295 = vpack.c.b16 %v2285, %v2284
        %v2296 = vpack.c.b16 %v2287, %v2286
        %v2297 = vpack.c.b16 %v2289, %v2288
        %2306 = vmatprep.subr.bf16.mxu0 0
        %2307 = vmatpush1.bf16.msra.mxu0 %v2297
        %2308 = vmatprep.subr.bf16.mxu0 0
        %2309 = vmatpush1.bf16.msra.mxu0 %v2296
        %2310 = vmatprep.subr.bf16.mxu0 0
        %2311 = vmatpush1.bf16.msra.mxu0 %v2295
        %2312 = vmatprep.subr.bf16.mxu0 0
        %2313 = vmatpush1.bf16.msra.mxu0 %v2294
        %2314 = vmatprep.subr.bf16.mxu0 0
        %2315 = vmatpush1.bf16.msra.mxu0 %v2293
        %2316 = vmatprep.subr.bf16.mxu0 0
        %2317 = vmatpush1.bf16.msra.mxu0 %v2292
        %2318 = vmatprep.subr.bf16.mxu0 0
        %2319 = vmatpush1.bf16.msra.mxu0 %v2291
        %2320 = vmatprep.subr.bf16.mxu0 0
        %2321 = vmatpush1.bf16.msra.mxu0 %v2290
        %2322 = vmatprep.subr.bf16.mxu0 0
        %2323 = vmatpush2.bf16.msra.mxu0 0
        %2324 = vmatprep.subr.bf16.mxu0 0
        %2325 = vmatpush2.bf16.msra.mxu0 0
        %2326 = vmatprep.subr.bf16.mxu0 0
        %2327 = vmatpush2.bf16.msra.mxu0 0
        %2328 = vmatprep.subr.bf16.mxu0 0
        %2329 = vmatpush2.bf16.msra.mxu0 0
        %2330 = vmatprep.subr.bf16.mxu0 0
        %2331 = vmatpush2.bf16.msra.mxu0 0
        %2332 = vmatprep.subr.bf16.mxu0 0
        %2333 = vmatpush2.bf16.msra.mxu0 0
        %2334 = vmatprep.subr.bf16.mxu0 0
        %2335 = vmatpush2.bf16.msra.mxu0 0
        %2336 = vmatprep.subr.bf16.mxu0 0
        %2337 = vmatpush2.bf16.msra.mxu0 0
        %2338 = vmatprep.mubr.bf16.mxu0 0
        %2339 = vmatmul.mubr.bf16.gmra.mxu0 %v2226
        %v2340 = vpop.f32.mrf.mxu0
        %v2341 = vadd.f32 0.0, %v2340
        %v2342 = vpop.f32.mrf.mxu0
        %v2343 = vpop.f32.mrf.mxu0
        %v2344 = vadd.f32 0.0, %v2343
        %v2345 = vpop.f32.mrf.mxu0
        %2346 = vmatprep.mubr.bf16.mxu0 0
        %2347 = vmatmul.mubr.bf16.gmra.mxu0 %v2227
        %v2348 = vpop.f32.mrf.mxu0
        %v2349 = vadd.f32 0.0, %v2348
        %v2350 = vpop.f32.mrf.mxu0
        %v2351 = vpop.f32.mrf.mxu0
        %v2352 = vadd.f32 0.0, %v2351
        %v2353 = vpop.f32.mrf.mxu0
        %2354 = vmatprep.mubr.bf16.mxu0 0
        %2355 = vmatmul.mubr.bf16.gmra.mxu0 %v2228
        %v2356 = vpop.f32.mrf.mxu0
        %v2357 = vadd.f32 0.0, %v2356
        %v2358 = vpop.f32.mrf.mxu0
        %v2359 = vpop.f32.mrf.mxu0
        %v2360 = vadd.f32 0.0, %v2359
        %v2361 = vpop.f32.mrf.mxu0
        %2362 = vmatprep.mubr.bf16.mxu0 0
        %2363 = vmatmul.mubr.bf16.gmra.mxu0 %v2229
        %v2364 = vpop.f32.mrf.mxu0
        %v2365 = vadd.f32 0.0, %v2364
        %v2366 = vpop.f32.mrf.mxu0
        %v2367 = vpop.f32.mrf.mxu0
        %v2368 = vadd.f32 0.0, %v2367
        %v2369 = vpop.f32.mrf.mxu0
        %2370 = vmatprep.mubr.bf16.mxu0 0
        %2371 = vmatmul.mubr.bf16.gmra.mxu0 %v2230
        %v2372 = vpop.f32.mrf.mxu0
        %v2373 = vadd.f32 0.0, %v2372
        %v2374 = vpop.f32.mrf.mxu0
        %v2375 = vpop.f32.mrf.mxu0
        %v2376 = vadd.f32 0.0, %v2375
        %v2377 = vpop.f32.mrf.mxu0
        %2378 = vmatprep.mubr.bf16.mxu0 0
        %2379 = vmatmul.mubr.bf16.gmra.mxu0 %v2231
        %v2380 = vpop.f32.mrf.mxu0
        %v2381 = vadd.f32 0.0, %v2380
        %v2382 = vpop.f32.mrf.mxu0
        %v2383 = vpop.f32.mrf.mxu0
        %v2384 = vadd.f32 0.0, %v2383
        %v2385 = vpop.f32.mrf.mxu0
        %2386 = vmatprep.mubr.bf16.mxu0 0
        %2387 = vmatmul.mubr.bf16.gmra.mxu0 %v2232
        %v2388 = vpop.f32.mrf.mxu0
        %v2389 = vadd.f32 0.0, %v2388
        %v2390 = vpop.f32.mrf.mxu0
        %v2391 = vpop.f32.mrf.mxu0
        %v2392 = vadd.f32 0.0, %v2391
        %v2393 = vpop.f32.mrf.mxu0
        %2394 = vmatprep.mubr.bf16.mxu0 0
        %2395 = vmatmul.mubr.bf16.gmra.mxu0 %v2233
        %v2396 = vpop.f32.mrf.mxu0
        %v2397 = vadd.f32 0.0, %v2396
        %v2398 = vpop.f32.mrf.mxu0
        %v2399 = vpop.f32.mrf.mxu0
        %v2400 = vadd.f32 0.0, %v2399
        %v2401 = vpop.f32.mrf.mxu0
        %2402 = vmatprep.mubr.bf16.mxu0 0
        %2403 = vmatmul.mubr.bf16.gmra.mxu0 %v2234
        %v2404 = vpop.f32.mrf.mxu0
        %v2405 = vadd.f32 0.0, %v2404
        %v2406 = vpop.f32.mrf.mxu0
        %v2407 = vpop.f32.mrf.mxu0
        %v2408 = vadd.f32 0.0, %v2407
        %v2409 = vpop.f32.mrf.mxu0
        %2410 = vmatprep.mubr.bf16.mxu0 0
        %2411 = vmatmul.mubr.bf16.gmra.mxu0 %v2235
        %v2412 = vpop.f32.mrf.mxu0
        %v2413 = vadd.f32 0.0, %v2412
        %v2414 = vpop.f32.mrf.mxu0
        %v2415 = vpop.f32.mrf.mxu0
        %v2416 = vadd.f32 0.0, %v2415
        %v2417 = vpop.f32.mrf.mxu0
        %2418 = vmatprep.mubr.bf16.mxu0 0
        %2419 = vmatmul.mubr.bf16.gmra.mxu0 %v2236
        %v2420 = vpop.f32.mrf.mxu0
        %v2421 = vadd.f32 0.0, %v2420
        %v2422 = vpop.f32.mrf.mxu0
        %v2423 = vpop.f32.mrf.mxu0
        %v2424 = vadd.f32 0.0, %v2423
        %v2425 = vpop.f32.mrf.mxu0
        %2426 = vmatprep.mubr.bf16.mxu0 0
        %2427 = vmatmul.mubr.bf16.gmra.mxu0 %v2237
        %v2428 = vpop.f32.mrf.mxu0
        %v2429 = vadd.f32 0.0, %v2428
        %v2430 = vpop.f32.mrf.mxu0
        %v2431 = vpop.f32.mrf.mxu0
        %v2432 = vadd.f32 0.0, %v2431
        %v2433 = vpop.f32.mrf.mxu0
        %2434 = vmatprep.mubr.bf16.mxu0 0
        %2435 = vmatmul.mubr.bf16.gmra.mxu0 %v2238
        %v2436 = vpop.f32.mrf.mxu0
        %v2437 = vadd.f32 0.0, %v2436
        %v2438 = vpop.f32.mrf.mxu0
        %v2439 = vpop.f32.mrf.mxu0
        %v2440 = vadd.f32 0.0, %v2439
        %v2441 = vpop.f32.mrf.mxu0
        %2442 = vmatprep.mubr.bf16.mxu0 0
        %2443 = vmatmul.mubr.bf16.gmra.mxu0 %v2239
        %v2444 = vpop.f32.mrf.mxu0
        %v2445 = vadd.f32 0.0, %v2444
        %v2446 = vpop.f32.mrf.mxu0
        %v2447 = vpop.f32.mrf.mxu0
        %v2448 = vadd.f32 0.0, %v2447
        %v2449 = vpop.f32.mrf.mxu0
        %2450 = vmatprep.mubr.bf16.mxu0 0
        %2451 = vmatmul.mubr.bf16.gmra.mxu0 %v2240
        %v2452 = vpop.f32.mrf.mxu0
        %v2453 = vadd.f32 0.0, %v2452
        %v2454 = vpop.f32.mrf.mxu0
        %v2455 = vpop.f32.mrf.mxu0
        %v2456 = vadd.f32 0.0, %v2455
        %v2457 = vpop.f32.mrf.mxu0
        %2458 = vmatprep.mubr.bf16.mxu0 0
        %2459 = vmatmul.mubr.bf16.gmra.mxu0 %v2241
        %v2460 = vpop.f32.mrf.mxu0
        %v2461 = vadd.f32 0.0, %v2460
        %v2462 = vpop.f32.mrf.mxu0
        %v2463 = vpop.f32.mrf.mxu0
        %v2464 = vadd.f32 0.0, %v2463
        %v2465 = vpop.f32.mrf.mxu0
        %2466 = vdwg.mxu0
        %v2467 = vadd.f32 %v2113, %v2341
        %v2468 = vadd.f32 %v2114, %v2344
        %v2469 = vadd.f32 %v2115, %v2349
        %v2470 = vadd.f32 %v2116, %v2352
        %v2471 = vadd.f32 %v2117, %v2357
        %v2472 = vadd.f32 %v2118, %v2360
        %v2473 = vadd.f32 %v2119, %v2365
        %v2474 = vadd.f32 %v2120, %v2368
        %v2475 = vadd.f32 %v2121, %v2373
        %v2476 = vadd.f32 %v2122, %v2376
        %v2477 = vadd.f32 %v2123, %v2381
        %v2478 = vadd.f32 %v2124, %v2384
        %v2479 = vadd.f32 %v2125, %v2389
        %v2480 = vadd.f32 %v2126, %v2392
        %v2481 = vadd.f32 %v2127, %v2397
        %v2482 = vadd.f32 %v2128, %v2400
        %v2483 = vadd.f32 %v2129, %v2405
        %v2484 = vadd.f32 %v2130, %v2408
        %v2485 = vadd.f32 %v2131, %v2413
        %v2486 = vadd.f32 %v2132, %v2416
        %v2487 = vadd.f32 %v2133, %v2421
        %v2488 = vadd.f32 %v2134, %v2424
        %v2489 = vadd.f32 %v2135, %v2429
        %v2490 = vadd.f32 %v2136, %v2432
        %v2491 = vadd.f32 %v2137, %v2437
        %v2492 = vadd.f32 %v2138, %v2440
        %v2493 = vadd.f32 %v2139, %v2445
        %v2494 = vadd.f32 %v2140, %v2448
        %v2495 = vadd.f32 %v2141, %v2453
        %v2496 = vadd.f32 %v2142, %v2456
        %v2497 = vadd.f32 %v2143, %v2461
        %v2498 = vadd.f32 %v2144, %v2464
        %2499 = vst [vmem:[#allocation2] sm:$0xff] %v2467
        %2500 = vst [vmem:[#allocation2 + $0x8] sm:$0xff] %v2468
        %2501 = vst [vmem:[#allocation2 + $0x10] sm:$0xff] %v2469
        %2502 = vst [vmem:[#allocation2 + $0x18] sm:$0xff] %v2470
        %2503 = vst [vmem:[#allocation2 + $0x20] sm:$0xff] %v2471
        %2504 = vst [vmem:[#allocation2 + $0x28] sm:$0xff] %v2472
        %2505 = vst [vmem:[#allocation2 + $0x30] sm:$0xff] %v2473
        %2506 = vst [vmem:[#allocation2 + $0x38] sm:$0xff] %v2474
        %2507 = vst [vmem:[#allocation2 + $0x40] sm:$0xff] %v2475
        %2508 = vst [vmem:[#allocation2 + $0x48] sm:$0xff] %v2476
        %2509 = vst [vmem:[#allocation2 + $0x50] sm:$0xff] %v2477
        %2510 = vst [vmem:[#allocation2 + $0x58] sm:$0xff] %v2478
        %2511 = vst [vmem:[#allocation2 + $0x60] sm:$0xff] %v2479
        %2512 = vst [vmem:[#allocation2 + $0x68] sm:$0xff] %v2480
        %2513 = vst [vmem:[#allocation2 + $0x70] sm:$0xff] %v2481
        %2514 = vst [vmem:[#allocation2 + $0x78] sm:$0xff] %v2482
        %2515 = vst [vmem:[#allocation2 + $0x80] sm:$0xff] %v2483
        %2516 = vst [vmem:[#allocation2 + $0x88] sm:$0xff] %v2484
        %2517 = vst [vmem:[#allocation2 + $0x90] sm:$0xff] %v2485
        %2518 = vst [vmem:[#allocation2 + $0x98] sm:$0xff] %v2486
        %2519 = vst [vmem:[#allocation2 + $0xa0] sm:$0xff] %v2487
        %2520 = vst [vmem:[#allocation2 + $0xa8] sm:$0xff] %v2488
        %2521 = vst [vmem:[#allocation2 + $0xb0] sm:$0xff] %v2489
        %2522 = vst [vmem:[#allocation2 + $0xb8] sm:$0xff] %v2490
        %2523 = vst [vmem:[#allocation2 + $0xc0] sm:$0xff] %v2491
        %2524 = vst [vmem:[#allocation2 + $0xc8] sm:$0xff] %v2492
        %2525 = vst [vmem:[#allocation2 + $0xd0] sm:$0xff] %v2493
        %2526 = vst [vmem:[#allocation2 + $0xd8] sm:$0xff] %v2494
        %2527 = vst [vmem:[#allocation2 + $0xe0] sm:$0xff] %v2495
        %2528 = vst [vmem:[#allocation2 + $0xe8] sm:$0xff] %v2496
        %2529 = vst [vmem:[#allocation2 + $0xf0] sm:$0xff] %v2497
        %2530 = vst [vmem:[#allocation2 + $0xf8] sm:$0xff] %v2498
        %v2531 = vld [vmem:[%s2080] sm:$0xf]
        %v2532 = vld [vmem:[%s2080 + $0x4] sm:$0xf]
        %v2533 = vld [vmem:[%s2080 + $0x8] sm:$0x1]
        %v2534 = vld [vmem:[%s2080 + $0xc] sm:$0xf]
        %v2535 = vld [vmem:[%s2080 + $0x10] sm:$0xf]
        %v2536 = vld [vmem:[%s2080 + $0x14] sm:$0x1]
        %v2537 = vld [vmem:[%s2080 + $0x18] sm:$0xf]
        %v2538 = vld [vmem:[%s2080 + $0x1c] sm:$0xf]
        %v2539 = vld [vmem:[%s2080 + $0x20] sm:$0x1]
        %v2540 = vld [vmem:[%s2080 + $0x24] sm:$0xf]
        %v2541 = vld [vmem:[%s2080 + $0x28] sm:$0xf]
        %v2542 = vld [vmem:[%s2080 + $0x2c] sm:$0x1]
        %v2543 = vld [vmem:[%s2080 + $0x30] sm:$0xf]
        %v2544 = vld [vmem:[%s2080 + $0x34] sm:$0xf]
        %v2545 = vld [vmem:[%s2080 + $0x38] sm:$0x1]
        %v2546 = vld [vmem:[%s2080 + $0x3c] sm:$0xf]
        %v2547 = vld [vmem:[%s2080 + $0x40] sm:$0xf]
        %v2548 = vld [vmem:[%s2080 + $0x44] sm:$0x1]
        %v2549 = vld [vmem:[%s2080 + $0x48] sm:$0xf]
        %v2550 = vld [vmem:[%s2080 + $0x4c] sm:$0xf]
        %v2551 = vld [vmem:[%s2080 + $0x50] sm:$0x1]
        %v2552 = vld [vmem:[%s2080 + $0x54] sm:$0xf]
        %v2553 = vld [vmem:[%s2080 + $0x58] sm:$0xf]
        %v2554 = vld [vmem:[%s2080 + $0x5c] sm:$0x1]
        %v2555 = vld [vmem:[%s2080 + $0x60] sm:$0xf]
        %v2556 = vld [vmem:[%s2080 + $0x64] sm:$0xf]
        %v2557 = vld [vmem:[%s2080 + $0x68] sm:$0x1]
        %v2558 = vld [vmem:[%s2080 + $0x6c] sm:$0xf]
        %v2559 = vld [vmem:[%s2080 + $0x70] sm:$0xf]
        %v2560 = vld [vmem:[%s2080 + $0x74] sm:$0x1]
        %v2561 = vld [vmem:[%s2080 + $0x78] sm:$0xf]
        %v2562 = vld [vmem:[%s2080 + $0x7c] sm:$0xf]
        %v2563 = vld [vmem:[%s2080 + $0x80] sm:$0x1]
        %v2564 = vld [vmem:[%s2080 + $0x84] sm:$0xf]
        %v2565 = vld [vmem:[%s2080 + $0x88] sm:$0xf]
        %v2566 = vld [vmem:[%s2080 + $0x8c] sm:$0x1]
        %v2567 = vld [vmem:[%s2080 + $0x90] sm:$0xf]
        %v2568 = vld [vmem:[%s2080 + $0x94] sm:$0xf]
        %v2569 = vld [vmem:[%s2080 + $0x98] sm:$0x1]
        %v2570 = vld [vmem:[%s2080 + $0x9c] sm:$0xf]
        %v2571 = vld [vmem:[%s2080 + $0xa0] sm:$0xf]
        %v2572 = vld [vmem:[%s2080 + $0xa4] sm:$0x1]
        %v2573 = vld [vmem:[%s2080 + $0xa8] sm:$0xf]
        %v2574 = vld [vmem:[%s2080 + $0xac] sm:$0xf]
        %v2575 = vld [vmem:[%s2080 + $0xb0] sm:$0x1]
        %v2576 = vld [vmem:[%s2080 + $0xb4] sm:$0xf]
        %v2577 = vld [vmem:[%s2080 + $0xb8] sm:$0xf]
        %v2578 = vld [vmem:[%s2080 + $0xbc] sm:$0x1]
        %v2579 = vld [vmem:[#allocation2] sm:$0xff]
        %v2580 = vld [vmem:[#allocation2 + $0x8] sm:$0xff]
        %v2581 = vld [vmem:[#allocation2 + $0x10] sm:$0xff]
        %v2582 = vld [vmem:[#allocation2 + $0x18] sm:$0xff]
        %v2583 = vld [vmem:[#allocation2 + $0x20] sm:$0xff]
        %v2584 = vld [vmem:[#allocation2 + $0x28] sm:$0xff]
        %v2585 = vld [vmem:[#allocation2 + $0x30] sm:$0xff]
        %v2586 = vld [vmem:[#allocation2 + $0x38] sm:$0xff]
        %v2587 = vld [vmem:[#allocation2 + $0x40] sm:$0xff]
        %v2588 = vld [vmem:[#allocation2 + $0x48] sm:$0xff]
        %v2589 = vld [vmem:[#allocation2 + $0x50] sm:$0xff]
        %v2590 = vld [vmem:[#allocation2 + $0x58] sm:$0xff]
        %v2591 = vld [vmem:[#allocation2 + $0x60] sm:$0xff]
        %v2592 = vld [vmem:[#allocation2 + $0x68] sm:$0xff]
        %v2593 = vld [vmem:[#allocation2 + $0x70] sm:$0xff]
        %v2594 = vld [vmem:[#allocation2 + $0x78] sm:$0xff]
        %v2595 = vld [vmem:[#allocation2 + $0x80] sm:$0xff]
        %v2596 = vld [vmem:[#allocation2 + $0x88] sm:$0xff]
        %v2597 = vld [vmem:[#allocation2 + $0x90] sm:$0xff]
        %v2598 = vld [vmem:[#allocation2 + $0x98] sm:$0xff]
        %v2599 = vld [vmem:[#allocation2 + $0xa0] sm:$0xff]
        %v2600 = vld [vmem:[#allocation2 + $0xa8] sm:$0xff]
        %v2601 = vld [vmem:[#allocation2 + $0xb0] sm:$0xff]
        %v2602 = vld [vmem:[#allocation2 + $0xb8] sm:$0xff]
        %v2603 = vld [vmem:[#allocation2 + $0xc0] sm:$0xff]
        %v2604 = vld [vmem:[#allocation2 + $0xc8] sm:$0xff]
        %v2605 = vld [vmem:[#allocation2 + $0xd0] sm:$0xff]
        %v2606 = vld [vmem:[#allocation2 + $0xd8] sm:$0xff]
        %v2607 = vld [vmem:[#allocation2 + $0xe0] sm:$0xff]
        %v2608 = vld [vmem:[#allocation2 + $0xe8] sm:$0xff]
        %v2609 = vld [vmem:[#allocation2 + $0xf0] sm:$0xff]
        %v2610 = vld [vmem:[#allocation2 + $0xf8] sm:$0xff]
        %v2612 = vshrl.u32 %v2531, 16
        %v2614 = vrot.slane %v2612, 4
        %v2615 = vshll.u32 %v2531, 16
        %v2617 = vrot.slane %v2615, 5
        %v2618 = vor.u32 %v2614, %v2617
        %v2619 = vrot.slane %v2618, 4
        %v2621 = vshll.u32 %v2532, 16
        %v2623 = vrot.slane %v2621, 5
        %v2624 = vsel %vm744, %v2619, %v2623
        %v2625 = vshrl.u32 %v2532, 16
        %v2627 = vrot.slane %v2625, 4
        %v2628 = vor.u32 %v2627, %v2623
        %v2629 = vrot.slane %v2628, 4
        %v2631 = vshll.u32 %v2533, 16
        %v2633 = vrot.slane %v2631, 5
        %v2634 = vsel %vm744, %v2629, %v2633
        %v2636 = vshrl.u32 %v2534, 16
        %v2638 = vrot.slane %v2636, 4
        %v2639 = vshll.u32 %v2534, 16
        %v2641 = vrot.slane %v2639, 5
        %v2642 = vor.u32 %v2638, %v2641
        %v2643 = vrot.slane %v2642, 4
        %v2645 = vshll.u32 %v2535, 16
        %v2647 = vrot.slane %v2645, 5
        %v2648 = vsel %vm744, %v2643, %v2647
        %v2649 = vshrl.u32 %v2535, 16
        %v2651 = vrot.slane %v2649, 4
        %v2652 = vor.u32 %v2651, %v2647
        %v2653 = vrot.slane %v2652, 4
        %v2655 = vshll.u32 %v2536, 16
        %v2657 = vrot.slane %v2655, 5
        %v2658 = vsel %vm744, %v2653, %v2657
        %v2660 = vshrl.u32 %v2537, 16
        %v2662 = vrot.slane %v2660, 4
        %v2663 = vshll.u32 %v2537, 16
        %v2665 = vrot.slane %v2663, 5
        %v2666 = vor.u32 %v2662, %v2665
        %v2667 = vrot.slane %v2666, 4
        %v2669 = vshll.u32 %v2538, 16
        %v2671 = vrot.slane %v2669, 5
        %v2672 = vsel %vm744, %v2667, %v2671
        %v2673 = vshrl.u32 %v2538, 16
        %v2675 = vrot.slane %v2673, 4
        %v2676 = vor.u32 %v2675, %v2671
        %v2677 = vrot.slane %v2676, 4
        %v2679 = vshll.u32 %v2539, 16
        %v2681 = vrot.slane %v2679, 5
        %v2682 = vsel %vm744, %v2677, %v2681
        %v2684 = vshrl.u32 %v2540, 16
        %v2686 = vrot.slane %v2684, 4
        %v2687 = vshll.u32 %v2540, 16
        %v2689 = vrot.slane %v2687, 5
        %v2690 = vor.u32 %v2686, %v2689
        %v2691 = vrot.slane %v2690, 4
        %v2693 = vshll.u32 %v2541, 16
        %v2695 = vrot.slane %v2693, 5
        %v2696 = vsel %vm744, %v2691, %v2695
        %v2697 = vshrl.u32 %v2541, 16
        %v2699 = vrot.slane %v2697, 4
        %v2700 = vor.u32 %v2699, %v2695
        %v2701 = vrot.slane %v2700, 4
        %v2703 = vshll.u32 %v2542, 16
        %v2705 = vrot.slane %v2703, 5
        %v2706 = vsel %vm744, %v2701, %v2705
        %v2708 = vshrl.u32 %v2543, 16
        %v2710 = vrot.slane %v2708, 4
        %v2711 = vshll.u32 %v2543, 16
        %v2713 = vrot.slane %v2711, 5
        %v2714 = vor.u32 %v2710, %v2713
        %v2715 = vrot.slane %v2714, 4
        %v2717 = vshll.u32 %v2544, 16
        %v2719 = vrot.slane %v2717, 5
        %v2720 = vsel %vm744, %v2715, %v2719
        %v2721 = vshrl.u32 %v2544, 16
        %v2723 = vrot.slane %v2721, 4
        %v2724 = vor.u32 %v2723, %v2719
        %v2725 = vrot.slane %v2724, 4
        %v2727 = vshll.u32 %v2545, 16
        %v2729 = vrot.slane %v2727, 5
        %v2730 = vsel %vm744, %v2725, %v2729
        %v2732 = vshrl.u32 %v2546, 16
        %v2734 = vrot.slane %v2732, 4
        %v2735 = vshll.u32 %v2546, 16
        %v2737 = vrot.slane %v2735, 5
        %v2738 = vor.u32 %v2734, %v2737
        %v2739 = vrot.slane %v2738, 4
        %v2741 = vshll.u32 %v2547, 16
        %v2743 = vrot.slane %v2741, 5
        %v2744 = vsel %vm744, %v2739, %v2743
        %v2745 = vshrl.u32 %v2547, 16
        %v2747 = vrot.slane %v2745, 4
        %v2748 = vor.u32 %v2747, %v2743
        %v2749 = vrot.slane %v2748, 4
        %v2751 = vshll.u32 %v2548, 16
        %v2753 = vrot.slane %v2751, 5
        %v2754 = vsel %vm744, %v2749, %v2753
        %v2756 = vshrl.u32 %v2549, 16
        %v2758 = vrot.slane %v2756, 4
        %v2759 = vshll.u32 %v2549, 16
        %v2761 = vrot.slane %v2759, 5
        %v2762 = vor.u32 %v2758, %v2761
        %v2763 = vrot.slane %v2762, 4
        %v2765 = vshll.u32 %v2550, 16
        %v2767 = vrot.slane %v2765, 5
        %v2768 = vsel %vm744, %v2763, %v2767
        %v2769 = vshrl.u32 %v2550, 16
        %v2771 = vrot.slane %v2769, 4
        %v2772 = vor.u32 %v2771, %v2767
        %v2773 = vrot.slane %v2772, 4
        %v2775 = vshll.u32 %v2551, 16
        %v2777 = vrot.slane %v2775, 5
        %v2778 = vsel %vm744, %v2773, %v2777
        %v2780 = vshrl.u32 %v2552, 16
        %v2782 = vrot.slane %v2780, 4
        %v2783 = vshll.u32 %v2552, 16
        %v2785 = vrot.slane %v2783, 5
        %v2786 = vor.u32 %v2782, %v2785
        %v2787 = vrot.slane %v2786, 4
        %v2789 = vshll.u32 %v2553, 16
        %v2791 = vrot.slane %v2789, 5
        %v2792 = vsel %vm744, %v2787, %v2791
        %v2793 = vshrl.u32 %v2553, 16
        %v2795 = vrot.slane %v2793, 4
        %v2796 = vor.u32 %v2795, %v2791
        %v2797 = vrot.slane %v2796, 4
        %v2799 = vshll.u32 %v2554, 16
        %v2801 = vrot.slane %v2799, 5
        %v2802 = vsel %vm744, %v2797, %v2801
        %v2804 = vshrl.u32 %v2555, 16
        %v2806 = vrot.slane %v2804, 4
        %v2807 = vshll.u32 %v2555, 16
        %v2809 = vrot.slane %v2807, 5
        %v2810 = vor.u32 %v2806, %v2809
        %v2811 = vrot.slane %v2810, 4
        %v2813 = vshll.u32 %v2556, 16
        %v2815 = vrot.slane %v2813, 5
        %v2816 = vsel %vm744, %v2811, %v2815
        %v2817 = vshrl.u32 %v2556, 16
        %v2819 = vrot.slane %v2817, 4
        %v2820 = vor.u32 %v2819, %v2815
        %v2821 = vrot.slane %v2820, 4
        %v2823 = vshll.u32 %v2557, 16
        %v2825 = vrot.slane %v2823, 5
        %v2826 = vsel %vm744, %v2821, %v2825
        %v2828 = vshrl.u32 %v2558, 16
        %v2830 = vrot.slane %v2828, 4
        %v2831 = vshll.u32 %v2558, 16
        %v2833 = vrot.slane %v2831, 5
        %v2834 = vor.u32 %v2830, %v2833
        %v2835 = vrot.slane %v2834, 4
        %v2837 = vshll.u32 %v2559, 16
        %v2839 = vrot.slane %v2837, 5
        %v2840 = vsel %vm744, %v2835, %v2839
        %v2841 = vshrl.u32 %v2559, 16
        %v2843 = vrot.slane %v2841, 4
        %v2844 = vor.u32 %v2843, %v2839
        %v2845 = vrot.slane %v2844, 4
        %v2847 = vshll.u32 %v2560, 16
        %v2849 = vrot.slane %v2847, 5
        %v2850 = vsel %vm744, %v2845, %v2849
        %v2852 = vshrl.u32 %v2561, 16
        %v2854 = vrot.slane %v2852, 4
        %v2855 = vshll.u32 %v2561, 16
        %v2857 = vrot.slane %v2855, 5
        %v2858 = vor.u32 %v2854, %v2857
        %v2859 = vrot.slane %v2858, 4
        %v2861 = vshll.u32 %v2562, 16
        %v2863 = vrot.slane %v2861, 5
        %v2864 = vsel %vm744, %v2859, %v2863
        %v2865 = vshrl.u32 %v2562, 16
        %v2867 = vrot.slane %v2865, 4
        %v2868 = vor.u32 %v2867, %v2863
        %v2869 = vrot.slane %v2868, 4
        %v2871 = vshll.u32 %v2563, 16
        %v2873 = vrot.slane %v2871, 5
        %v2874 = vsel %vm744, %v2869, %v2873
        %v2876 = vshrl.u32 %v2564, 16
        %v2878 = vrot.slane %v2876, 4
        %v2879 = vshll.u32 %v2564, 16
        %v2881 = vrot.slane %v2879, 5
        %v2882 = vor.u32 %v2878, %v2881
        %v2883 = vrot.slane %v2882, 4
        %v2885 = vshll.u32 %v2565, 16
        %v2887 = vrot.slane %v2885, 5
        %v2888 = vsel %vm744, %v2883, %v2887
        %v2889 = vshrl.u32 %v2565, 16
        %v2891 = vrot.slane %v2889, 4
        %v2892 = vor.u32 %v2891, %v2887
        %v2893 = vrot.slane %v2892, 4
        %v2895 = vshll.u32 %v2566, 16
        %v2897 = vrot.slane %v2895, 5
        %v2898 = vsel %vm744, %v2893, %v2897
        %v2900 = vshrl.u32 %v2567, 16
        %v2902 = vrot.slane %v2900, 4
        %v2903 = vshll.u32 %v2567, 16
        %v2905 = vrot.slane %v2903, 5
        %v2906 = vor.u32 %v2902, %v2905
        %v2907 = vrot.slane %v2906, 4
        %v2909 = vshll.u32 %v2568, 16
        %v2911 = vrot.slane %v2909, 5
        %v2912 = vsel %vm744, %v2907, %v2911
        %v2913 = vshrl.u32 %v2568, 16
        %v2915 = vrot.slane %v2913, 4
        %v2916 = vor.u32 %v2915, %v2911
        %v2917 = vrot.slane %v2916, 4
        %v2919 = vshll.u32 %v2569, 16
        %v2921 = vrot.slane %v2919, 5
        %v2922 = vsel %vm744, %v2917, %v2921
        %v2924 = vshrl.u32 %v2570, 16
        %v2926 = vrot.slane %v2924, 4
        %v2927 = vshll.u32 %v2570, 16
        %v2929 = vrot.slane %v2927, 5
        %v2930 = vor.u32 %v2926, %v2929
        %v2931 = vrot.slane %v2930, 4
        %v2933 = vshll.u32 %v2571, 16
        %v2935 = vrot.slane %v2933, 5
        %v2936 = vsel %vm744, %v2931, %v2935
        %v2937 = vshrl.u32 %v2571, 16
        %v2939 = vrot.slane %v2937, 4
        %v2940 = vor.u32 %v2939, %v2935
        %v2941 = vrot.slane %v2940, 4
        %v2943 = vshll.u32 %v2572, 16
        %v2945 = vrot.slane %v2943, 5
        %v2946 = vsel %vm744, %v2941, %v2945
        %v2948 = vshrl.u32 %v2573, 16
        %v2950 = vrot.slane %v2948, 4
        %v2951 = vshll.u32 %v2573, 16
        %v2953 = vrot.slane %v2951, 5
        %v2954 = vor.u32 %v2950, %v2953
        %v2955 = vrot.slane %v2954, 4
        %v2957 = vshll.u32 %v2574, 16
        %v2959 = vrot.slane %v2957, 5
        %v2960 = vsel %vm744, %v2955, %v2959
        %v2961 = vshrl.u32 %v2574, 16
        %v2963 = vrot.slane %v2961, 4
        %v2964 = vor.u32 %v2963, %v2959
        %v2965 = vrot.slane %v2964, 4
        %v2967 = vshll.u32 %v2575, 16
        %v2969 = vrot.slane %v2967, 5
        %v2970 = vsel %vm744, %v2965, %v2969
        %v2972 = vshrl.u32 %v2576, 16
        %v2974 = vrot.slane %v2972, 4
        %v2975 = vshll.u32 %v2576, 16
        %v2977 = vrot.slane %v2975, 5
        %v2978 = vor.u32 %v2974, %v2977
        %v2979 = vrot.slane %v2978, 4
        %v2981 = vshll.u32 %v2577, 16
        %v2983 = vrot.slane %v2981, 5
        %v2984 = vsel %vm744, %v2979, %v2983
        %v2985 = vshrl.u32 %v2577, 16
        %v2987 = vrot.slane %v2985, 4
        %v2988 = vor.u32 %v2987, %v2983
        %v2989 = vrot.slane %v2988, 4
        %v2991 = vshll.u32 %v2578, 16
        %v2993 = vrot.slane %v2991, 5
        %v2994 = vsel %vm744, %v2989, %v2993
        %s2995 = scalar_lea.vmem %s1, 256
        %v2996 = vld [vmem:[%s2995] sm:$0xf]
        %v2997 = vld [vmem:[%s2995 + $0x4] sm:$0xf]
        %v2998 = vld [vmem:[%s2995 + $0x8] sm:$0xf]
        %v2999 = vld [vmem:[%s2995 + $0xc] sm:$0xf]
        %v3000 = vld [vmem:[%s2995 + $0x10] sm:$0xf]
        %v3001 = vld [vmem:[%s2995 + $0x14] sm:$0xf]
        %v3002 = vld [vmem:[%s2995 + $0x18] sm:$0xf]
        %v3003 = vld [vmem:[%s2995 + $0x1c] sm:$0xf]
        %v3004 = vld [vmem:[%s2995 + $0x20] sm:$0xf]
        %v3005 = vld [vmem:[%s2995 + $0x24] sm:$0xf]
        %v3006 = vld [vmem:[%s2995 + $0x28] sm:$0xf]
        %v3007 = vld [vmem:[%s2995 + $0x2c] sm:$0xf]
        %v3008 = vld [vmem:[%s2995 + $0x30] sm:$0xf]
        %v3009 = vld [vmem:[%s2995 + $0x34] sm:$0xf]
        %v3010 = vld [vmem:[%s2995 + $0x38] sm:$0xf]
        %v3011 = vld [vmem:[%s2995 + $0x3c] sm:$0xf]
        %v3012 = vunpack.c.l.b16 %v2624
        %v3013 = vunpack.c.l.b16 %v2634
        %v3014 = vunpack.c.l.b16 %v2648
        %v3015 = vunpack.c.l.b16 %v2658
        %v3016 = vunpack.c.l.b16 %v2672
        %v3017 = vunpack.c.l.b16 %v2682
        %v3018 = vunpack.c.l.b16 %v2696
        %v3019 = vunpack.c.l.b16 %v2706
        %v3020 = vunpack.c.l.b16 %v2720
        %v3021 = vunpack.c.l.b16 %v2730
        %v3022 = vunpack.c.l.b16 %v2744
        %v3023 = vunpack.c.l.b16 %v2754
        %v3024 = vunpack.c.l.b16 %v2768
        %v3025 = vunpack.c.l.b16 %v2778
        %v3026 = vunpack.c.l.b16 %v2792
        %v3027 = vunpack.c.l.b16 %v2802
        %v3028 = vunpack.c.l.b16 %v2816
        %v3029 = vunpack.c.l.b16 %v2826
        %v3030 = vunpack.c.l.b16 %v2840
        %v3031 = vunpack.c.l.b16 %v2850
        %v3032 = vunpack.c.l.b16 %v2864
        %v3033 = vunpack.c.l.b16 %v2874
        %v3034 = vunpack.c.l.b16 %v2888
        %v3035 = vunpack.c.l.b16 %v2898
        %v3036 = vunpack.c.l.b16 %v2912
        %v3037 = vunpack.c.l.b16 %v2922
        %v3038 = vunpack.c.l.b16 %v2936
        %v3039 = vunpack.c.l.b16 %v2946
        %v3040 = vunpack.c.l.b16 %v2960
        %v3041 = vunpack.c.l.b16 %v2970
        %v3042 = vunpack.c.l.b16 %v2984
        %v3043 = vunpack.c.l.b16 %v2994
        %v3044 = vpack.c.b16 %v3013, %v3012
        %v3045 = vpack.c.b16 %v3015, %v3014
        %v3046 = vpack.c.b16 %v3017, %v3016
        %v3047 = vpack.c.b16 %v3019, %v3018
        %v3048 = vpack.c.b16 %v3021, %v3020
        %v3049 = vpack.c.b16 %v3023, %v3022
        %v3050 = vpack.c.b16 %v3025, %v3024
        %v3051 = vpack.c.b16 %v3027, %v3026
        %v3052 = vpack.c.b16 %v3029, %v3028
        %v3053 = vpack.c.b16 %v3031, %v3030
        %v3054 = vpack.c.b16 %v3033, %v3032
        %v3055 = vpack.c.b16 %v3035, %v3034
        %v3056 = vpack.c.b16 %v3037, %v3036
        %v3057 = vpack.c.b16 %v3039, %v3038
        %v3058 = vpack.c.b16 %v3041, %v3040
        %v3059 = vpack.c.b16 %v3043, %v3042
        %v3092 = vunpack.c.l.b16 %v2996
        %v3093 = vunpack.c.l.b16 %v2997
        %v3094 = vunpack.c.l.b16 %v2998
        %v3095 = vunpack.c.l.b16 %v2999
        %v3096 = vunpack.c.l.b16 %v3000
        %v3097 = vunpack.c.l.b16 %v3001
        %v3098 = vunpack.c.l.b16 %v3002
        %v3099 = vunpack.c.l.b16 %v3003
        %v3100 = vunpack.c.l.b16 %v3004
        %v3101 = vunpack.c.l.b16 %v3005
        %v3102 = vunpack.c.l.b16 %v3006
        %v3103 = vunpack.c.l.b16 %v3007
        %v3104 = vunpack.c.l.b16 %v3008
        %v3105 = vunpack.c.l.b16 %v3009
        %v3106 = vunpack.c.l.b16 %v3010
        %v3107 = vunpack.c.l.b16 %v3011
        %v3108 = vpack.c.b16 %v3093, %v3092
        %v3109 = vpack.c.b16 %v3095, %v3094
        %v3110 = vpack.c.b16 %v3097, %v3096
        %v3111 = vpack.c.b16 %v3099, %v3098
        %v3112 = vpack.c.b16 %v3101, %v3100
        %v3113 = vpack.c.b16 %v3103, %v3102
        %v3114 = vpack.c.b16 %v3105, %v3104
        %v3115 = vpack.c.b16 %v3107, %v3106
        %3124 = vmatprep.subr.bf16.mxu0 0
        %3125 = vmatpush1.bf16.msra.mxu0 %v3115
        %3126 = vmatprep.subr.bf16.mxu0 0
        %3127 = vmatpush1.bf16.msra.mxu0 %v3114
        %3128 = vmatprep.subr.bf16.mxu0 0
        %3129 = vmatpush1.bf16.msra.mxu0 %v3113
        %3130 = vmatprep.subr.bf16.mxu0 0
        %3131 = vmatpush1.bf16.msra.mxu0 %v3112
        %3132 = vmatprep.subr.bf16.mxu0 0
        %3133 = vmatpush1.bf16.msra.mxu0 %v3111
        %3134 = vmatprep.subr.bf16.mxu0 0
        %3135 = vmatpush1.bf16.msra.mxu0 %v3110
        %3136 = vmatprep.subr.bf16.mxu0 0
        %3137 = vmatpush1.bf16.msra.mxu0 %v3109
        %3138 = vmatprep.subr.bf16.mxu0 0
        %3139 = vmatpush1.bf16.msra.mxu0 %v3108
        %3140 = vmatprep.subr.bf16.mxu0 0
        %3141 = vmatpush2.bf16.msra.mxu0 0
        %3142 = vmatprep.subr.bf16.mxu0 0
        %3143 = vmatpush2.bf16.msra.mxu0 0
        %3144 = vmatprep.subr.bf16.mxu0 0
        %3145 = vmatpush2.bf16.msra.mxu0 0
        %3146 = vmatprep.subr.bf16.mxu0 0
        %3147 = vmatpush2.bf16.msra.mxu0 0
        %3148 = vmatprep.subr.bf16.mxu0 0
        %3149 = vmatpush2.bf16.msra.mxu0 0
        %3150 = vmatprep.subr.bf16.mxu0 0
        %3151 = vmatpush2.bf16.msra.mxu0 0
        %3152 = vmatprep.subr.bf16.mxu0 0
        %3153 = vmatpush2.bf16.msra.mxu0 0
        %3154 = vmatprep.subr.bf16.mxu0 0
        %3155 = vmatpush2.bf16.msra.mxu0 0
        %3156 = vmatprep.mubr.bf16.mxu0 0
        %3157 = vmatmul.mubr.bf16.gmra.mxu0 %v3044
        %v3158 = vpop.f32.mrf.mxu0
        %v3159 = vadd.f32 0.0, %v3158
        %v3160 = vpop.f32.mrf.mxu0
        %v3161 = vpop.f32.mrf.mxu0
        %v3162 = vadd.f32 0.0, %v3161
        %v3163 = vpop.f32.mrf.mxu0
        %3164 = vmatprep.mubr.bf16.mxu0 0
        %3165 = vmatmul.mubr.bf16.gmra.mxu0 %v3045
        %v3166 = vpop.f32.mrf.mxu0
        %v3167 = vadd.f32 0.0, %v3166
        %v3168 = vpop.f32.mrf.mxu0
        %v3169 = vpop.f32.mrf.mxu0
        %v3170 = vadd.f32 0.0, %v3169
        %v3171 = vpop.f32.mrf.mxu0
        %3172 = vmatprep.mubr.bf16.mxu0 0
        %3173 = vmatmul.mubr.bf16.gmra.mxu0 %v3046
        %v3174 = vpop.f32.mrf.mxu0
        %v3175 = vadd.f32 0.0, %v3174
        %v3176 = vpop.f32.mrf.mxu0
        %v3177 = vpop.f32.mrf.mxu0
        %v3178 = vadd.f32 0.0, %v3177
        %v3179 = vpop.f32.mrf.mxu0
        %3180 = vmatprep.mubr.bf16.mxu0 0
        %3181 = vmatmul.mubr.bf16.gmra.mxu0 %v3047
        %v3182 = vpop.f32.mrf.mxu0
        %v3183 = vadd.f32 0.0, %v3182
        %v3184 = vpop.f32.mrf.mxu0
        %v3185 = vpop.f32.mrf.mxu0
        %v3186 = vadd.f32 0.0, %v3185
        %v3187 = vpop.f32.mrf.mxu0
        %3188 = vmatprep.mubr.bf16.mxu0 0
        %3189 = vmatmul.mubr.bf16.gmra.mxu0 %v3048
        %v3190 = vpop.f32.mrf.mxu0
        %v3191 = vadd.f32 0.0, %v3190
        %v3192 = vpop.f32.mrf.mxu0
        %v3193 = vpop.f32.mrf.mxu0
        %v3194 = vadd.f32 0.0, %v3193
        %v3195 = vpop.f32.mrf.mxu0
        %3196 = vmatprep.mubr.bf16.mxu0 0
        %3197 = vmatmul.mubr.bf16.gmra.mxu0 %v3049
        %v3198 = vpop.f32.mrf.mxu0
        %v3199 = vadd.f32 0.0, %v3198
        %v3200 = vpop.f32.mrf.mxu0
        %v3201 = vpop.f32.mrf.mxu0
        %v3202 = vadd.f32 0.0, %v3201
        %v3203 = vpop.f32.mrf.mxu0
        %3204 = vmatprep.mubr.bf16.mxu0 0
        %3205 = vmatmul.mubr.bf16.gmra.mxu0 %v3050
        %v3206 = vpop.f32.mrf.mxu0
        %v3207 = vadd.f32 0.0, %v3206
        %v3208 = vpop.f32.mrf.mxu0
        %v3209 = vpop.f32.mrf.mxu0
        %v3210 = vadd.f32 0.0, %v3209
        %v3211 = vpop.f32.mrf.mxu0
        %3212 = vmatprep.mubr.bf16.mxu0 0
        %3213 = vmatmul.mubr.bf16.gmra.mxu0 %v3051
        %v3214 = vpop.f32.mrf.mxu0
        %v3215 = vadd.f32 0.0, %v3214
        %v3216 = vpop.f32.mrf.mxu0
        %v3217 = vpop.f32.mrf.mxu0
        %v3218 = vadd.f32 0.0, %v3217
        %v3219 = vpop.f32.mrf.mxu0
        %3220 = vmatprep.mubr.bf16.mxu0 0
        %3221 = vmatmul.mubr.bf16.gmra.mxu0 %v3052
        %v3222 = vpop.f32.mrf.mxu0
        %v3223 = vadd.f32 0.0, %v3222
        %v3224 = vpop.f32.mrf.mxu0
        %v3225 = vpop.f32.mrf.mxu0
        %v3226 = vadd.f32 0.0, %v3225
        %v3227 = vpop.f32.mrf.mxu0
        %3228 = vmatprep.mubr.bf16.mxu0 0
        %3229 = vmatmul.mubr.bf16.gmra.mxu0 %v3053
        %v3230 = vpop.f32.mrf.mxu0
        %v3231 = vadd.f32 0.0, %v3230
        %v3232 = vpop.f32.mrf.mxu0
        %v3233 = vpop.f32.mrf.mxu0
        %v3234 = vadd.f32 0.0, %v3233
        %v3235 = vpop.f32.mrf.mxu0
        %3236 = vmatprep.mubr.bf16.mxu0 0
        %3237 = vmatmul.mubr.bf16.gmra.mxu0 %v3054
        %v3238 = vpop.f32.mrf.mxu0
        %v3239 = vadd.f32 0.0, %v3238
        %v3240 = vpop.f32.mrf.mxu0
        %v3241 = vpop.f32.mrf.mxu0
        %v3242 = vadd.f32 0.0, %v3241
        %v3243 = vpop.f32.mrf.mxu0
        %3244 = vmatprep.mubr.bf16.mxu0 0
        %3245 = vmatmul.mubr.bf16.gmra.mxu0 %v3055
        %v3246 = vpop.f32.mrf.mxu0
        %v3247 = vadd.f32 0.0, %v3246
        %v3248 = vpop.f32.mrf.mxu0
        %v3249 = vpop.f32.mrf.mxu0
        %v3250 = vadd.f32 0.0, %v3249
        %v3251 = vpop.f32.mrf.mxu0
        %3252 = vmatprep.mubr.bf16.mxu0 0
        %3253 = vmatmul.mubr.bf16.gmra.mxu0 %v3056
        %v3254 = vpop.f32.mrf.mxu0
        %v3255 = vadd.f32 0.0, %v3254
        %v3256 = vpop.f32.mrf.mxu0
        %v3257 = vpop.f32.mrf.mxu0
        %v3258 = vadd.f32 0.0, %v3257
        %v3259 = vpop.f32.mrf.mxu0
        %3260 = vmatprep.mubr.bf16.mxu0 0
        %3261 = vmatmul.mubr.bf16.gmra.mxu0 %v3057
        %v3262 = vpop.f32.mrf.mxu0
        %v3263 = vadd.f32 0.0, %v3262
        %v3264 = vpop.f32.mrf.mxu0
        %v3265 = vpop.f32.mrf.mxu0
        %v3266 = vadd.f32 0.0, %v3265
        %v3267 = vpop.f32.mrf.mxu0
        %3268 = vmatprep.mubr.bf16.mxu0 0
        %3269 = vmatmul.mubr.bf16.gmra.mxu0 %v3058
        %v3270 = vpop.f32.mrf.mxu0
        %v3271 = vadd.f32 0.0, %v3270
        %v3272 = vpop.f32.mrf.mxu0
        %v3273 = vpop.f32.mrf.mxu0
        %v3274 = vadd.f32 0.0, %v3273
        %v3275 = vpop.f32.mrf.mxu0
        %3276 = vmatprep.mubr.bf16.mxu0 0
        %3277 = vmatmul.mubr.bf16.gmra.mxu0 %v3059
        %v3278 = vpop.f32.mrf.mxu0
        %v3279 = vadd.f32 0.0, %v3278
        %v3280 = vpop.f32.mrf.mxu0
        %v3281 = vpop.f32.mrf.mxu0
        %v3282 = vadd.f32 0.0, %v3281
        %v3283 = vpop.f32.mrf.mxu0
        %3284 = vdwg.mxu0
        %v3285 = vadd.f32 %v2579, %v3159
        %v3286 = vadd.f32 %v2580, %v3162
        %v3287 = vadd.f32 %v2581, %v3167
        %v3288 = vadd.f32 %v2582, %v3170
        %v3289 = vadd.f32 %v2583, %v3175
        %v3290 = vadd.f32 %v2584, %v3178
        %v3291 = vadd.f32 %v2585, %v3183
        %v3292 = vadd.f32 %v2586, %v3186
        %v3293 = vadd.f32 %v2587, %v3191
        %v3294 = vadd.f32 %v2588, %v3194
        %v3295 = vadd.f32 %v2589, %v3199
        %v3296 = vadd.f32 %v2590, %v3202
        %v3297 = vadd.f32 %v2591, %v3207
        %v3298 = vadd.f32 %v2592, %v3210
        %v3299 = vadd.f32 %v2593, %v3215
        %v3300 = vadd.f32 %v2594, %v3218
        %v3301 = vadd.f32 %v2595, %v3223
        %v3302 = vadd.f32 %v2596, %v3226
        %v3303 = vadd.f32 %v2597, %v3231
        %v3304 = vadd.f32 %v2598, %v3234
        %v3305 = vadd.f32 %v2599, %v3239
        %v3306 = vadd.f32 %v2600, %v3242
        %v3307 = vadd.f32 %v2601, %v3247
        %v3308 = vadd.f32 %v2602, %v3250
        %v3309 = vadd.f32 %v2603, %v3255
        %v3310 = vadd.f32 %v2604, %v3258
        %v3311 = vadd.f32 %v2605, %v3263
        %v3312 = vadd.f32 %v2606, %v3266
        %v3313 = vadd.f32 %v2607, %v3271
        %v3314 = vadd.f32 %v2608, %v3274
        %v3315 = vadd.f32 %v2609, %v3279
        %v3316 = vadd.f32 %v2610, %v3282
        %3317 = vst [vmem:[#allocation2] sm:$0xff] %v3285
        %3318 = vst [vmem:[#allocation2 + $0x8] sm:$0xff] %v3286
        %3319 = vst [vmem:[#allocation2 + $0x10] sm:$0xff] %v3287
        %3320 = vst [vmem:[#allocation2 + $0x18] sm:$0xff] %v3288
        %3321 = vst [vmem:[#allocation2 + $0x20] sm:$0xff] %v3289
        %3322 = vst [vmem:[#allocation2 + $0x28] sm:$0xff] %v3290
        %3323 = vst [vmem:[#allocation2 + $0x30] sm:$0xff] %v3291
        %3324 = vst [vmem:[#allocation2 + $0x38] sm:$0xff] %v3292
        %3325 = vst [vmem:[#allocation2 + $0x40] sm:$0xff] %v3293
        %3326 = vst [vmem:[#allocation2 + $0x48] sm:$0xff] %v3294
        %3327 = vst [vmem:[#allocation2 + $0x50] sm:$0xff] %v3295
        %3328 = vst [vmem:[#allocation2 + $0x58] sm:$0xff] %v3296
        %3329 = vst [vmem:[#allocation2 + $0x60] sm:$0xff] %v3297
        %3330 = vst [vmem:[#allocation2 + $0x68] sm:$0xff] %v3298
        %3331 = vst [vmem:[#allocation2 + $0x70] sm:$0xff] %v3299
        %3332 = vst [vmem:[#allocation2 + $0x78] sm:$0xff] %v3300
        %3333 = vst [vmem:[#allocation2 + $0x80] sm:$0xff] %v3301
        %3334 = vst [vmem:[#allocation2 + $0x88] sm:$0xff] %v3302
        %3335 = vst [vmem:[#allocation2 + $0x90] sm:$0xff] %v3303
        %3336 = vst [vmem:[#allocation2 + $0x98] sm:$0xff] %v3304
        %3337 = vst [vmem:[#allocation2 + $0xa0] sm:$0xff] %v3305
        %3338 = vst [vmem:[#allocation2 + $0xa8] sm:$0xff] %v3306
        %3339 = vst [vmem:[#allocation2 + $0xb0] sm:$0xff] %v3307
        %3340 = vst [vmem:[#allocation2 + $0xb8] sm:$0xff] %v3308
        %3341 = vst [vmem:[#allocation2 + $0xc0] sm:$0xff] %v3309
        %3342 = vst [vmem:[#allocation2 + $0xc8] sm:$0xff] %v3310
        %3343 = vst [vmem:[#allocation2 + $0xd0] sm:$0xff] %v3311
        %3344 = vst [vmem:[#allocation2 + $0xd8] sm:$0xff] %v3312
        %3345 = vst [vmem:[#allocation2 + $0xe0] sm:$0xff] %v3313
        %3346 = vst [vmem:[#allocation2 + $0xe8] sm:$0xff] %v3314
        %3347 = vst [vmem:[#allocation2 + $0xf0] sm:$0xff] %v3315
        %3348 = vst [vmem:[#allocation2 + $0xf8] sm:$0xff] %v3316
        %v3349 = vld [vmem:[%s2080] sm:$0xe]
        %v3350 = vld [vmem:[%s2080 + $0x4] sm:$0xf]
        %v3351 = vld [vmem:[%s2080 + $0x8] sm:$0x1]
        %v3352 = vld [vmem:[%s2080 + $0xc] sm:$0xe]
        %v3353 = vld [vmem:[%s2080 + $0x10] sm:$0xf]
        %v3354 = vld [vmem:[%s2080 + $0x14] sm:$0x1]
        %v3355 = vld [vmem:[%s2080 + $0x18] sm:$0xe]
        %v3356 = vld [vmem:[%s2080 + $0x1c] sm:$0xf]
        %v3357 = vld [vmem:[%s2080 + $0x20] sm:$0x1]
        %v3358 = vld [vmem:[%s2080 + $0x24] sm:$0xe]
        %v3359 = vld [vmem:[%s2080 + $0x28] sm:$0xf]
        %v3360 = vld [vmem:[%s2080 + $0x2c] sm:$0x1]
        %v3361 = vld [vmem:[%s2080 + $0x30] sm:$0xe]
        %v3362 = vld [vmem:[%s2080 + $0x34] sm:$0xf]
        %v3363 = vld [vmem:[%s2080 + $0x38] sm:$0x1]
        %v3364 = vld [vmem:[%s2080 + $0x3c] sm:$0xe]
        %v3365 = vld [vmem:[%s2080 + $0x40] sm:$0xf]
        %v3366 = vld [vmem:[%s2080 + $0x44] sm:$0x1]
        %v3367 = vld [vmem:[%s2080 + $0x48] sm:$0xe]
        %v3368 = vld [vmem:[%s2080 + $0x4c] sm:$0xf]
        %v3369 = vld [vmem:[%s2080 + $0x50] sm:$0x1]
        %v3370 = vld [vmem:[%s2080 + $0x54] sm:$0xe]
        %v3371 = vld [vmem:[%s2080 + $0x58] sm:$0xf]
        %v3372 = vld [vmem:[%s2080 + $0x5c] sm:$0x1]
        %v3373 = vld [vmem:[%s2080 + $0x60] sm:$0xe]
        %v3374 = vld [vmem:[%s2080 + $0x64] sm:$0xf]
        %v3375 = vld [vmem:[%s2080 + $0x68] sm:$0x1]
        %v3376 = vld [vmem:[%s2080 + $0x6c] sm:$0xe]
        %v3377 = vld [vmem:[%s2080 + $0x70] sm:$0xf]
        %v3378 = vld [vmem:[%s2080 + $0x74] sm:$0x1]
        %v3379 = vld [vmem:[%s2080 + $0x78] sm:$0xe]
        %v3380 = vld [vmem:[%s2080 + $0x7c] sm:$0xf]
        %v3381 = vld [vmem:[%s2080 + $0x80] sm:$0x1]
        %v3382 = vld [vmem:[%s2080 + $0x84] sm:$0xe]
        %v3383 = vld [vmem:[%s2080 + $0x88] sm:$0xf]
        %v3384 = vld [vmem:[%s2080 + $0x8c] sm:$0x1]
        %v3385 = vld [vmem:[%s2080 + $0x90] sm:$0xe]
        %v3386 = vld [vmem:[%s2080 + $0x94] sm:$0xf]
        %v3387 = vld [vmem:[%s2080 + $0x98] sm:$0x1]
        %v3388 = vld [vmem:[%s2080 + $0x9c] sm:$0xe]
        %v3389 = vld [vmem:[%s2080 + $0xa0] sm:$0xf]
        %v3390 = vld [vmem:[%s2080 + $0xa4] sm:$0x1]
        %v3391 = vld [vmem:[%s2080 + $0xa8] sm:$0xe]
        %v3392 = vld [vmem:[%s2080 + $0xac] sm:$0xf]
        %v3393 = vld [vmem:[%s2080 + $0xb0] sm:$0x1]
        %v3394 = vld [vmem:[%s2080 + $0xb4] sm:$0xe]
        %v3395 = vld [vmem:[%s2080 + $0xb8] sm:$0xf]
        %v3396 = vld [vmem:[%s2080 + $0xbc] sm:$0x1]
        %v3397 = vld [vmem:[#allocation2] sm:$0xff]
        %v3398 = vld [vmem:[#allocation2 + $0x8] sm:$0xff]
        %v3399 = vld [vmem:[#allocation2 + $0x10] sm:$0xff]
        %v3400 = vld [vmem:[#allocation2 + $0x18] sm:$0xff]
        %v3401 = vld [vmem:[#allocation2 + $0x20] sm:$0xff]
        %v3402 = vld [vmem:[#allocation2 + $0x28] sm:$0xff]
        %v3403 = vld [vmem:[#allocation2 + $0x30] sm:$0xff]
        %v3404 = vld [vmem:[#allocation2 + $0x38] sm:$0xff]
        %v3405 = vld [vmem:[#allocation2 + $0x40] sm:$0xff]
        %v3406 = vld [vmem:[#allocation2 + $0x48] sm:$0xff]
        %v3407 = vld [vmem:[#allocation2 + $0x50] sm:$0xff]
        %v3408 = vld [vmem:[#allocation2 + $0x58] sm:$0xff]
        %v3409 = vld [vmem:[#allocation2 + $0x60] sm:$0xff]
        %v3410 = vld [vmem:[#allocation2 + $0x68] sm:$0xff]
        %v3411 = vld [vmem:[#allocation2 + $0x70] sm:$0xff]
        %v3412 = vld [vmem:[#allocation2 + $0x78] sm:$0xff]
        %v3413 = vld [vmem:[#allocation2 + $0x80] sm:$0xff]
        %v3414 = vld [vmem:[#allocation2 + $0x88] sm:$0xff]
        %v3415 = vld [vmem:[#allocation2 + $0x90] sm:$0xff]
        %v3416 = vld [vmem:[#allocation2 + $0x98] sm:$0xff]
        %v3417 = vld [vmem:[#allocation2 + $0xa0] sm:$0xff]
        %v3418 = vld [vmem:[#allocation2 + $0xa8] sm:$0xff]
        %v3419 = vld [vmem:[#allocation2 + $0xb0] sm:$0xff]
        %v3420 = vld [vmem:[#allocation2 + $0xb8] sm:$0xff]
        %v3421 = vld [vmem:[#allocation2 + $0xc0] sm:$0xff]
        %v3422 = vld [vmem:[#allocation2 + $0xc8] sm:$0xff]
        %v3423 = vld [vmem:[#allocation2 + $0xd0] sm:$0xff]
        %v3424 = vld [vmem:[#allocation2 + $0xd8] sm:$0xff]
        %v3425 = vld [vmem:[#allocation2 + $0xe0] sm:$0xff]
        %v3426 = vld [vmem:[#allocation2 + $0xe8] sm:$0xff]
        %v3427 = vld [vmem:[#allocation2 + $0xf0] sm:$0xff]
        %v3428 = vld [vmem:[#allocation2 + $0xf8] sm:$0xff]
        %v3477 = vrot.slane %v3349, 5
        %v3478 = vrot.slane %v3477, 4
        %v3479 = vrot.slane %v3350, 5
        %v3480 = vsel %vm1613, %v3478, %v3479
        %v3481 = vrot.slane %v3479, 4
        %v3482 = vrot.slane %v3351, 5
        %v3483 = vsel %vm1613, %v3481, %v3482
        %v3484 = vrot.slane %v3352, 5
        %v3485 = vrot.slane %v3484, 4
        %v3486 = vrot.slane %v3353, 5
        %v3487 = vsel %vm1613, %v3485, %v3486
        %v3488 = vrot.slane %v3486, 4
        %v3489 = vrot.slane %v3354, 5
        %v3490 = vsel %vm1613, %v3488, %v3489
        %v3491 = vrot.slane %v3355, 5
        %v3492 = vrot.slane %v3491, 4
        %v3493 = vrot.slane %v3356, 5
        %v3494 = vsel %vm1613, %v3492, %v3493
        %v3495 = vrot.slane %v3493, 4
        %v3496 = vrot.slane %v3357, 5
        %v3497 = vsel %vm1613, %v3495, %v3496
        %v3498 = vrot.slane %v3358, 5
        %v3499 = vrot.slane %v3498, 4
        %v3500 = vrot.slane %v3359, 5
        %v3501 = vsel %vm1613, %v3499, %v3500
        %v3502 = vrot.slane %v3500, 4
        %v3503 = vrot.slane %v3360, 5
        %v3504 = vsel %vm1613, %v3502, %v3503
        %v3505 = vrot.slane %v3361, 5
        %v3506 = vrot.slane %v3505, 4
        %v3507 = vrot.slane %v3362, 5
        %v3508 = vsel %vm1613, %v3506, %v3507
        %v3509 = vrot.slane %v3507, 4
        %v3510 = vrot.slane %v3363, 5
        %v3511 = vsel %vm1613, %v3509, %v3510
        %v3512 = vrot.slane %v3364, 5
        %v3513 = vrot.slane %v3512, 4
        %v3514 = vrot.slane %v3365, 5
        %v3515 = vsel %vm1613, %v3513, %v3514
        %v3516 = vrot.slane %v3514, 4
        %v3517 = vrot.slane %v3366, 5
        %v3518 = vsel %vm1613, %v3516, %v3517
        %v3519 = vrot.slane %v3367, 5
        %v3520 = vrot.slane %v3519, 4
        %v3521 = vrot.slane %v3368, 5
        %v3522 = vsel %vm1613, %v3520, %v3521
        %v3523 = vrot.slane %v3521, 4
        %v3524 = vrot.slane %v3369, 5
        %v3525 = vsel %vm1613, %v3523, %v3524
        %v3526 = vrot.slane %v3370, 5
        %v3527 = vrot.slane %v3526, 4
        %v3528 = vrot.slane %v3371, 5
        %v3529 = vsel %vm1613, %v3527, %v3528
        %v3530 = vrot.slane %v3528, 4
        %v3531 = vrot.slane %v3372, 5
        %v3532 = vsel %vm1613, %v3530, %v3531
        %v3533 = vrot.slane %v3373, 5
        %v3534 = vrot.slane %v3533, 4
        %v3535 = vrot.slane %v3374, 5
        %v3536 = vsel %vm1613, %v3534, %v3535
        %v3537 = vrot.slane %v3535, 4
        %v3538 = vrot.slane %v3375, 5
        %v3539 = vsel %vm1613, %v3537, %v3538
        %v3540 = vrot.slane %v3376, 5
        %v3541 = vrot.slane %v3540, 4
        %v3542 = vrot.slane %v3377, 5
        %v3543 = vsel %vm1613, %v3541, %v3542
        %v3544 = vrot.slane %v3542, 4
        %v3545 = vrot.slane %v3378, 5
        %v3546 = vsel %vm1613, %v3544, %v3545
        %v3547 = vrot.slane %v3379, 5
        %v3548 = vrot.slane %v3547, 4
        %v3549 = vrot.slane %v3380, 5
        %v3550 = vsel %vm1613, %v3548, %v3549
        %v3551 = vrot.slane %v3549, 4
        %v3552 = vrot.slane %v3381, 5
        %v3553 = vsel %vm1613, %v3551, %v3552
        %v3554 = vrot.slane %v3382, 5
        %v3555 = vrot.slane %v3554, 4
        %v3556 = vrot.slane %v3383, 5
        %v3557 = vsel %vm1613, %v3555, %v3556
        %v3558 = vrot.slane %v3556, 4
        %v3559 = vrot.slane %v3384, 5
        %v3560 = vsel %vm1613, %v3558, %v3559
        %v3561 = vrot.slane %v3385, 5
        %v3562 = vrot.slane %v3561, 4
        %v3563 = vrot.slane %v3386, 5
        %v3564 = vsel %vm1613, %v3562, %v3563
        %v3565 = vrot.slane %v3563, 4
        %v3566 = vrot.slane %v3387, 5
        %v3567 = vsel %vm1613, %v3565, %v3566
        %v3568 = vrot.slane %v3388, 5
        %v3569 = vrot.slane %v3568, 4
        %v3570 = vrot.slane %v3389, 5
        %v3571 = vsel %vm1613, %v3569, %v3570
        %v3572 = vrot.slane %v3570, 4
        %v3573 = vrot.slane %v3390, 5
        %v3574 = vsel %vm1613, %v3572, %v3573
        %v3575 = vrot.slane %v3391, 5
        %v3576 = vrot.slane %v3575, 4
        %v3577 = vrot.slane %v3392, 5
        %v3578 = vsel %vm1613, %v3576, %v3577
        %v3579 = vrot.slane %v3577, 4
        %v3580 = vrot.slane %v3393, 5
        %v3581 = vsel %vm1613, %v3579, %v3580
        %v3582 = vrot.slane %v3394, 5
        %v3583 = vrot.slane %v3582, 4
        %v3584 = vrot.slane %v3395, 5
        %v3585 = vsel %vm1613, %v3583, %v3584
        %v3586 = vrot.slane %v3584, 4
        %v3587 = vrot.slane %v3396, 5
        %v3588 = vsel %vm1613, %v3586, %v3587
        %s3589 = scalar_lea.vmem %s1, 320
        %v3590 = vld [vmem:[%s3589] sm:$0xf]
        %v3591 = vld [vmem:[%s3589 + $0x4] sm:$0xf]
        %v3592 = vld [vmem:[%s3589 + $0x8] sm:$0xf]
        %v3593 = vld [vmem:[%s3589 + $0xc] sm:$0xf]
        %v3594 = vld [vmem:[%s3589 + $0x10] sm:$0xf]
        %v3595 = vld [vmem:[%s3589 + $0x14] sm:$0xf]
        %v3596 = vld [vmem:[%s3589 + $0x18] sm:$0xf]
        %v3597 = vld [vmem:[%s3589 + $0x1c] sm:$0xf]
        %v3598 = vld [vmem:[%s3589 + $0x20] sm:$0xf]
        %v3599 = vld [vmem:[%s3589 + $0x24] sm:$0xf]
        %v3600 = vld [vmem:[%s3589 + $0x28] sm:$0xf]
        %v3601 = vld [vmem:[%s3589 + $0x2c] sm:$0xf]
        %v3602 = vld [vmem:[%s3589 + $0x30] sm:$0xf]
        %v3603 = vld [vmem:[%s3589 + $0x34] sm:$0xf]
        %v3604 = vld [vmem:[%s3589 + $0x38] sm:$0xf]
        %v3605 = vld [vmem:[%s3589 + $0x3c] sm:$0xf]
        %v3606 = vunpack.c.l.b16 %v3480
        %v3607 = vunpack.c.l.b16 %v3483
        %v3608 = vunpack.c.l.b16 %v3487
        %v3609 = vunpack.c.l.b16 %v3490
        %v3610 = vunpack.c.l.b16 %v3494
        %v3611 = vunpack.c.l.b16 %v3497
        %v3612 = vunpack.c.l.b16 %v3501
        %v3613 = vunpack.c.l.b16 %v3504
        %v3614 = vunpack.c.l.b16 %v3508
        %v3615 = vunpack.c.l.b16 %v3511
        %v3616 = vunpack.c.l.b16 %v3515
        %v3617 = vunpack.c.l.b16 %v3518
        %v3618 = vunpack.c.l.b16 %v3522
        %v3619 = vunpack.c.l.b16 %v3525
        %v3620 = vunpack.c.l.b16 %v3529
        %v3621 = vunpack.c.l.b16 %v3532
        %v3622 = vunpack.c.l.b16 %v3536
        %v3623 = vunpack.c.l.b16 %v3539
        %v3624 = vunpack.c.l.b16 %v3543
        %v3625 = vunpack.c.l.b16 %v3546
        %v3626 = vunpack.c.l.b16 %v3550
        %v3627 = vunpack.c.l.b16 %v3553
        %v3628 = vunpack.c.l.b16 %v3557
        %v3629 = vunpack.c.l.b16 %v3560
        %v3630 = vunpack.c.l.b16 %v3564
        %v3631 = vunpack.c.l.b16 %v3567
        %v3632 = vunpack.c.l.b16 %v3571
        %v3633 = vunpack.c.l.b16 %v3574
        %v3634 = vunpack.c.l.b16 %v3578
        %v3635 = vunpack.c.l.b16 %v3581
        %v3636 = vunpack.c.l.b16 %v3585
        %v3637 = vunpack.c.l.b16 %v3588
        %v3638 = vpack.c.b16 %v3607, %v3606
        %v3639 = vpack.c.b16 %v3609, %v3608
        %v3640 = vpack.c.b16 %v3611, %v3610
        %v3641 = vpack.c.b16 %v3613, %v3612
        %v3642 = vpack.c.b16 %v3615, %v3614
        %v3643 = vpack.c.b16 %v3617, %v3616
        %v3644 = vpack.c.b16 %v3619, %v3618
        %v3645 = vpack.c.b16 %v3621, %v3620
        %v3646 = vpack.c.b16 %v3623, %v3622
        %v3647 = vpack.c.b16 %v3625, %v3624
        %v3648 = vpack.c.b16 %v3627, %v3626
        %v3649 = vpack.c.b16 %v3629, %v3628
        %v3650 = vpack.c.b16 %v3631, %v3630
        %v3651 = vpack.c.b16 %v3633, %v3632
        %v3652 = vpack.c.b16 %v3635, %v3634
        %v3653 = vpack.c.b16 %v3637, %v3636
        %v3686 = vunpack.c.l.b16 %v3590
        %v3687 = vunpack.c.l.b16 %v3591
        %v3688 = vunpack.c.l.b16 %v3592
        %v3689 = vunpack.c.l.b16 %v3593
        %v3690 = vunpack.c.l.b16 %v3594
        %v3691 = vunpack.c.l.b16 %v3595
        %v3692 = vunpack.c.l.b16 %v3596
        %v3693 = vunpack.c.l.b16 %v3597
        %v3694 = vunpack.c.l.b16 %v3598
        %v3695 = vunpack.c.l.b16 %v3599
        %v3696 = vunpack.c.l.b16 %v3600
        %v3697 = vunpack.c.l.b16 %v3601
        %v3698 = vunpack.c.l.b16 %v3602
        %v3699 = vunpack.c.l.b16 %v3603
        %v3700 = vunpack.c.l.b16 %v3604
        %v3701 = vunpack.c.l.b16 %v3605
        %v3702 = vpack.c.b16 %v3687, %v3686
        %v3703 = vpack.c.b16 %v3689, %v3688
        %v3704 = vpack.c.b16 %v3691, %v3690
        %v3705 = vpack.c.b16 %v3693, %v3692
        %v3706 = vpack.c.b16 %v3695, %v3694
        %v3707 = vpack.c.b16 %v3697, %v3696
        %v3708 = vpack.c.b16 %v3699, %v3698
        %v3709 = vpack.c.b16 %v3701, %v3700
        %3718 = vmatprep.subr.bf16.mxu0 0
        %3719 = vmatpush1.bf16.msra.mxu0 %v3709
        %3720 = vmatprep.subr.bf16.mxu0 0
        %3721 = vmatpush1.bf16.msra.mxu0 %v3708
        %3722 = vmatprep.subr.bf16.mxu0 0
        %3723 = vmatpush1.bf16.msra.mxu0 %v3707
        %3724 = vmatprep.subr.bf16.mxu0 0
        %3725 = vmatpush1.bf16.msra.mxu0 %v3706
        %3726 = vmatprep.subr.bf16.mxu0 0
        %3727 = vmatpush1.bf16.msra.mxu0 %v3705
        %3728 = vmatprep.subr.bf16.mxu0 0
        %3729 = vmatpush1.bf16.msra.mxu0 %v3704
        %3730 = vmatprep.subr.bf16.mxu0 0
        %3731 = vmatpush1.bf16.msra.mxu0 %v3703
        %3732 = vmatprep.subr.bf16.mxu0 0
        %3733 = vmatpush1.bf16.msra.mxu0 %v3702
        %3734 = vmatprep.subr.bf16.mxu0 0
        %3735 = vmatpush2.bf16.msra.mxu0 0
        %3736 = vmatprep.subr.bf16.mxu0 0
        %3737 = vmatpush2.bf16.msra.mxu0 0
        %3738 = vmatprep.subr.bf16.mxu0 0
        %3739 = vmatpush2.bf16.msra.mxu0 0
        %3740 = vmatprep.subr.bf16.mxu0 0
        %3741 = vmatpush2.bf16.msra.mxu0 0
        %3742 = vmatprep.subr.bf16.mxu0 0
        %3743 = vmatpush2.bf16.msra.mxu0 0
        %3744 = vmatprep.subr.bf16.mxu0 0
        %3745 = vmatpush2.bf16.msra.mxu0 0
        %3746 = vmatprep.subr.bf16.mxu0 0
        %3747 = vmatpush2.bf16.msra.mxu0 0
        %3748 = vmatprep.subr.bf16.mxu0 0
        %3749 = vmatpush2.bf16.msra.mxu0 0
        %3750 = vmatprep.mubr.bf16.mxu0 0
        %3751 = vmatmul.mubr.bf16.gmra.mxu0 %v3638
        %v3752 = vpop.f32.mrf.mxu0
        %v3753 = vadd.f32 0.0, %v3752
        %v3754 = vpop.f32.mrf.mxu0
        %v3755 = vpop.f32.mrf.mxu0
        %v3756 = vadd.f32 0.0, %v3755
        %v3757 = vpop.f32.mrf.mxu0
        %3758 = vmatprep.mubr.bf16.mxu0 0
        %3759 = vmatmul.mubr.bf16.gmra.mxu0 %v3639
        %v3760 = vpop.f32.mrf.mxu0
        %v3761 = vadd.f32 0.0, %v3760
        %v3762 = vpop.f32.mrf.mxu0
        %v3763 = vpop.f32.mrf.mxu0
        %v3764 = vadd.f32 0.0, %v3763
        %v3765 = vpop.f32.mrf.mxu0
        %3766 = vmatprep.mubr.bf16.mxu0 0
        %3767 = vmatmul.mubr.bf16.gmra.mxu0 %v3640
        %v3768 = vpop.f32.mrf.mxu0
        %v3769 = vadd.f32 0.0, %v3768
        %v3770 = vpop.f32.mrf.mxu0
        %v3771 = vpop.f32.mrf.mxu0
        %v3772 = vadd.f32 0.0, %v3771
        %v3773 = vpop.f32.mrf.mxu0
        %3774 = vmatprep.mubr.bf16.mxu0 0
        %3775 = vmatmul.mubr.bf16.gmra.mxu0 %v3641
        %v3776 = vpop.f32.mrf.mxu0
        %v3777 = vadd.f32 0.0, %v3776
        %v3778 = vpop.f32.mrf.mxu0
        %v3779 = vpop.f32.mrf.mxu0
        %v3780 = vadd.f32 0.0, %v3779
        %v3781 = vpop.f32.mrf.mxu0
        %3782 = vmatprep.mubr.bf16.mxu0 0
        %3783 = vmatmul.mubr.bf16.gmra.mxu0 %v3642
        %v3784 = vpop.f32.mrf.mxu0
        %v3785 = vadd.f32 0.0, %v3784
        %v3786 = vpop.f32.mrf.mxu0
        %v3787 = vpop.f32.mrf.mxu0
        %v3788 = vadd.f32 0.0, %v3787
        %v3789 = vpop.f32.mrf.mxu0
        %3790 = vmatprep.mubr.bf16.mxu0 0
        %3791 = vmatmul.mubr.bf16.gmra.mxu0 %v3643
        %v3792 = vpop.f32.mrf.mxu0
        %v3793 = vadd.f32 0.0, %v3792
        %v3794 = vpop.f32.mrf.mxu0
        %v3795 = vpop.f32.mrf.mxu0
        %v3796 = vadd.f32 0.0, %v3795
        %v3797 = vpop.f32.mrf.mxu0
        %3798 = vmatprep.mubr.bf16.mxu0 0
        %3799 = vmatmul.mubr.bf16.gmra.mxu0 %v3644
        %v3800 = vpop.f32.mrf.mxu0
        %v3801 = vadd.f32 0.0, %v3800
        %v3802 = vpop.f32.mrf.mxu0
        %v3803 = vpop.f32.mrf.mxu0
        %v3804 = vadd.f32 0.0, %v3803
        %v3805 = vpop.f32.mrf.mxu0
        %3806 = vmatprep.mubr.bf16.mxu0 0
        %3807 = vmatmul.mubr.bf16.gmra.mxu0 %v3645
        %v3808 = vpop.f32.mrf.mxu0
        %v3809 = vadd.f32 0.0, %v3808
        %v3810 = vpop.f32.mrf.mxu0
        %v3811 = vpop.f32.mrf.mxu0
        %v3812 = vadd.f32 0.0, %v3811
        %v3813 = vpop.f32.mrf.mxu0
        %3814 = vmatprep.mubr.bf16.mxu0 0
        %3815 = vmatmul.mubr.bf16.gmra.mxu0 %v3646
        %v3816 = vpop.f32.mrf.mxu0
        %v3817 = vadd.f32 0.0, %v3816
        %v3818 = vpop.f32.mrf.mxu0
        %v3819 = vpop.f32.mrf.mxu0
        %v3820 = vadd.f32 0.0, %v3819
        %v3821 = vpop.f32.mrf.mxu0
        %3822 = vmatprep.mubr.bf16.mxu0 0
        %3823 = vmatmul.mubr.bf16.gmra.mxu0 %v3647
        %v3824 = vpop.f32.mrf.mxu0
        %v3825 = vadd.f32 0.0, %v3824
        %v3826 = vpop.f32.mrf.mxu0
        %v3827 = vpop.f32.mrf.mxu0
        %v3828 = vadd.f32 0.0, %v3827
        %v3829 = vpop.f32.mrf.mxu0
        %3830 = vmatprep.mubr.bf16.mxu0 0
        %3831 = vmatmul.mubr.bf16.gmra.mxu0 %v3648
        %v3832 = vpop.f32.mrf.mxu0
        %v3833 = vadd.f32 0.0, %v3832
        %v3834 = vpop.f32.mrf.mxu0
        %v3835 = vpop.f32.mrf.mxu0
        %v3836 = vadd.f32 0.0, %v3835
        %v3837 = vpop.f32.mrf.mxu0
        %3838 = vmatprep.mubr.bf16.mxu0 0
        %3839 = vmatmul.mubr.bf16.gmra.mxu0 %v3649
        %v3840 = vpop.f32.mrf.mxu0
        %v3841 = vadd.f32 0.0, %v3840
        %v3842 = vpop.f32.mrf.mxu0
        %v3843 = vpop.f32.mrf.mxu0
        %v3844 = vadd.f32 0.0, %v3843
        %v3845 = vpop.f32.mrf.mxu0
        %3846 = vmatprep.mubr.bf16.mxu0 0
        %3847 = vmatmul.mubr.bf16.gmra.mxu0 %v3650
        %v3848 = vpop.f32.mrf.mxu0
        %v3849 = vadd.f32 0.0, %v3848
        %v3850 = vpop.f32.mrf.mxu0
        %v3851 = vpop.f32.mrf.mxu0
        %v3852 = vadd.f32 0.0, %v3851
        %v3853 = vpop.f32.mrf.mxu0
        %3854 = vmatprep.mubr.bf16.mxu0 0
        %3855 = vmatmul.mubr.bf16.gmra.mxu0 %v3651
        %v3856 = vpop.f32.mrf.mxu0
        %v3857 = vadd.f32 0.0, %v3856
        %v3858 = vpop.f32.mrf.mxu0
        %v3859 = vpop.f32.mrf.mxu0
        %v3860 = vadd.f32 0.0, %v3859
        %v3861 = vpop.f32.mrf.mxu0
        %3862 = vmatprep.mubr.bf16.mxu0 0
        %3863 = vmatmul.mubr.bf16.gmra.mxu0 %v3652
        %v3864 = vpop.f32.mrf.mxu0
        %v3865 = vadd.f32 0.0, %v3864
        %v3866 = vpop.f32.mrf.mxu0
        %v3867 = vpop.f32.mrf.mxu0
        %v3868 = vadd.f32 0.0, %v3867
        %v3869 = vpop.f32.mrf.mxu0
        %3870 = vmatprep.mubr.bf16.mxu0 0
        %3871 = vmatmul.mubr.bf16.gmra.mxu0 %v3653
        %v3872 = vpop.f32.mrf.mxu0
        %v3873 = vadd.f32 0.0, %v3872
        %v3874 = vpop.f32.mrf.mxu0
        %v3875 = vpop.f32.mrf.mxu0
        %v3876 = vadd.f32 0.0, %v3875
        %v3877 = vpop.f32.mrf.mxu0
        %3878 = vdwg.mxu0
        %v3879 = vadd.f32 %v3397, %v3753
        %v3880 = vadd.f32 %v3398, %v3756
        %v3881 = vadd.f32 %v3399, %v3761
        %v3882 = vadd.f32 %v3400, %v3764
        %v3883 = vadd.f32 %v3401, %v3769
        %v3884 = vadd.f32 %v3402, %v3772
        %v3885 = vadd.f32 %v3403, %v3777
        %v3886 = vadd.f32 %v3404, %v3780
        %v3887 = vadd.f32 %v3405, %v3785
        %v3888 = vadd.f32 %v3406, %v3788
        %v3889 = vadd.f32 %v3407, %v3793
        %v3890 = vadd.f32 %v3408, %v3796
        %v3891 = vadd.f32 %v3409, %v3801
        %v3892 = vadd.f32 %v3410, %v3804
        %v3893 = vadd.f32 %v3411, %v3809
        %v3894 = vadd.f32 %v3412, %v3812
        %v3895 = vadd.f32 %v3413, %v3817
        %v3896 = vadd.f32 %v3414, %v3820
        %v3897 = vadd.f32 %v3415, %v3825
        %v3898 = vadd.f32 %v3416, %v3828
        %v3899 = vadd.f32 %v3417, %v3833
        %v3900 = vadd.f32 %v3418, %v3836
        %v3901 = vadd.f32 %v3419, %v3841
        %v3902 = vadd.f32 %v3420, %v3844
        %v3903 = vadd.f32 %v3421, %v3849
        %v3904 = vadd.f32 %v3422, %v3852
        %v3905 = vadd.f32 %v3423, %v3857
        %v3906 = vadd.f32 %v3424, %v3860
        %v3907 = vadd.f32 %v3425, %v3865
        %v3908 = vadd.f32 %v3426, %v3868
        %v3909 = vadd.f32 %v3427, %v3873
        %v3910 = vadd.f32 %v3428, %v3876
        %3911 = vst [vmem:[#allocation2] sm:$0xff] %v3879
        %3912 = vst [vmem:[#allocation2 + $0x8] sm:$0xff] %v3880
        %3913 = vst [vmem:[#allocation2 + $0x10] sm:$0xff] %v3881
        %3914 = vst [vmem:[#allocation2 + $0x18] sm:$0xff] %v3882
        %3915 = vst [vmem:[#allocation2 + $0x20] sm:$0xff] %v3883
        %3916 = vst [vmem:[#allocation2 + $0x28] sm:$0xff] %v3884
        %3917 = vst [vmem:[#allocation2 + $0x30] sm:$0xff] %v3885
        %3918 = vst [vmem:[#allocation2 + $0x38] sm:$0xff] %v3886
        %3919 = vst [vmem:[#allocation2 + $0x40] sm:$0xff] %v3887
        %3920 = vst [vmem:[#allocation2 + $0x48] sm:$0xff] %v3888
        %3921 = vst [vmem:[#allocation2 + $0x50] sm:$0xff] %v3889
        %3922 = vst [vmem:[#allocation2 + $0x58] sm:$0xff] %v3890
        %3923 = vst [vmem:[#allocation2 + $0x60] sm:$0xff] %v3891
        %3924 = vst [vmem:[#allocation2 + $0x68] sm:$0xff] %v3892
        %3925 = vst [vmem:[#allocation2 + $0x70] sm:$0xff] %v3893
        %3926 = vst [vmem:[#allocation2 + $0x78] sm:$0xff] %v3894
        %3927 = vst [vmem:[#allocation2 + $0x80] sm:$0xff] %v3895
        %3928 = vst [vmem:[#allocation2 + $0x88] sm:$0xff] %v3896
        %3929 = vst [vmem:[#allocation2 + $0x90] sm:$0xff] %v3897
        %3930 = vst [vmem:[#allocation2 + $0x98] sm:$0xff] %v3898
        %3931 = vst [vmem:[#allocation2 + $0xa0] sm:$0xff] %v3899
        %3932 = vst [vmem:[#allocation2 + $0xa8] sm:$0xff] %v3900
        %3933 = vst [vmem:[#allocation2 + $0xb0] sm:$0xff] %v3901
        %3934 = vst [vmem:[#allocation2 + $0xb8] sm:$0xff] %v3902
        %3935 = vst [vmem:[#allocation2 + $0xc0] sm:$0xff] %v3903
        %3936 = vst [vmem:[#allocation2 + $0xc8] sm:$0xff] %v3904
        %3937 = vst [vmem:[#allocation2 + $0xd0] sm:$0xff] %v3905
        %3938 = vst [vmem:[#allocation2 + $0xd8] sm:$0xff] %v3906
        %3939 = vst [vmem:[#allocation2 + $0xe0] sm:$0xff] %v3907
        %3940 = vst [vmem:[#allocation2 + $0xe8] sm:$0xff] %v3908
        %3941 = vst [vmem:[#allocation2 + $0xf0] sm:$0xff] %v3909
        %3942 = vst [vmem:[#allocation2 + $0xf8] sm:$0xff] %v3910
        %s3943 = scalar_lea.vmem %s179, 24
        %v3944 = vld [vmem:[%s3943] sm:$0xf]
        %v3945 = vld [vmem:[%s3943 + $0x4] sm:$0xf]
        %v3946 = vld [vmem:[%s3943 + $0xc] sm:$0xf]
        %v3947 = vld [vmem:[%s3943 + $0x10] sm:$0xf]
        %v3948 = vld [vmem:[%s3943 + $0x18] sm:$0xf]
        %v3949 = vld [vmem:[%s3943 + $0x1c] sm:$0xf]
        %v3950 = vld [vmem:[%s3943 + $0x24] sm:$0xf]
        %v3951 = vld [vmem:[%s3943 + $0x28] sm:$0xf]
        %v3952 = vld [vmem:[%s3943 + $0x30] sm:$0xf]
        %v3953 = vld [vmem:[%s3943 + $0x34] sm:$0xf]
        %v3954 = vld [vmem:[%s3943 + $0x3c] sm:$0xf]
        %v3955 = vld [vmem:[%s3943 + $0x40] sm:$0xf]
        %v3956 = vld [vmem:[%s3943 + $0x48] sm:$0xf]
        %v3957 = vld [vmem:[%s3943 + $0x4c] sm:$0xf]
        %v3958 = vld [vmem:[%s3943 + $0x54] sm:$0xf]
        %v3959 = vld [vmem:[%s3943 + $0x58] sm:$0xf]
        %v3960 = vld [vmem:[%s3943 + $0x60] sm:$0xf]
        %v3961 = vld [vmem:[%s3943 + $0x64] sm:$0xf]
        %v3962 = vld [vmem:[%s3943 + $0x6c] sm:$0xf]
        %v3963 = vld [vmem:[%s3943 + $0x70] sm:$0xf]
        %v3964 = vld [vmem:[%s3943 + $0x78] sm:$0xf]
        %v3965 = vld [vmem:[%s3943 + $0x7c] sm:$0xf]
        %v3966 = vld [vmem:[%s3943 + $0x84] sm:$0xf]
        %v3967 = vld [vmem:[%s3943 + $0x88] sm:$0xf]
        %v3968 = vld [vmem:[%s3943 + $0x90] sm:$0xf]
        %v3969 = vld [vmem:[%s3943 + $0x94] sm:$0xf]
        %v3970 = vld [vmem:[%s3943 + $0x9c] sm:$0xf]
        %v3971 = vld [vmem:[%s3943 + $0xa0] sm:$0xf]
        %v3972 = vld [vmem:[%s3943 + $0xa8] sm:$0xf]
        %v3973 = vld [vmem:[%s3943 + $0xac] sm:$0xf]
        %v3974 = vld [vmem:[%s3943 + $0xb4] sm:$0xf]
        %v3975 = vld [vmem:[%s3943 + $0xb8] sm:$0xf]
        %v3976 = vld [vmem:[#allocation2] sm:$0xff]
        %v3977 = vld [vmem:[#allocation2 + $0x8] sm:$0xff]
        %v3978 = vld [vmem:[#allocation2 + $0x10] sm:$0xff]
        %v3979 = vld [vmem:[#allocation2 + $0x18] sm:$0xff]
        %v3980 = vld [vmem:[#allocation2 + $0x20] sm:$0xff]
        %v3981 = vld [vmem:[#allocation2 + $0x28] sm:$0xff]
        %v3982 = vld [vmem:[#allocation2 + $0x30] sm:$0xff]
        %v3983 = vld [vmem:[#allocation2 + $0x38] sm:$0xff]
        %v3984 = vld [vmem:[#allocation2 + $0x40] sm:$0xff]
        %v3985 = vld [vmem:[#allocation2 + $0x48] sm:$0xff]
        %v3986 = vld [vmem:[#allocation2 + $0x50] sm:$0xff]
        %v3987 = vld [vmem:[#allocation2 + $0x58] sm:$0xff]
        %v3988 = vld [vmem:[#allocation2 + $0x60] sm:$0xff]
        %v3989 = vld [vmem:[#allocation2 + $0x68] sm:$0xff]
        %v3990 = vld [vmem:[#allocation2 + $0x70] sm:$0xff]
        %v3991 = vld [vmem:[#allocation2 + $0x78] sm:$0xff]
        %v3992 = vld [vmem:[#allocation2 + $0x80] sm:$0xff]
        %v3993 = vld [vmem:[#allocation2 + $0x88] sm:$0xff]
        %v3994 = vld [vmem:[#allocation2 + $0x90] sm:$0xff]
        %v3995 = vld [vmem:[#allocation2 + $0x98] sm:$0xff]
        %v3996 = vld [vmem:[#allocation2 + $0xa0] sm:$0xff]
        %v3997 = vld [vmem:[#allocation2 + $0xa8] sm:$0xff]
        %v3998 = vld [vmem:[#allocation2 + $0xb0] sm:$0xff]
        %v3999 = vld [vmem:[#allocation2 + $0xb8] sm:$0xff]
        %v4000 = vld [vmem:[#allocation2 + $0xc0] sm:$0xff]
        %v4001 = vld [vmem:[#allocation2 + $0xc8] sm:$0xff]
        %v4002 = vld [vmem:[#allocation2 + $0xd0] sm:$0xff]
        %v4003 = vld [vmem:[#allocation2 + $0xd8] sm:$0xff]
        %v4004 = vld [vmem:[#allocation2 + $0xe0] sm:$0xff]
        %v4005 = vld [vmem:[#allocation2 + $0xe8] sm:$0xff]
        %v4006 = vld [vmem:[#allocation2 + $0xf0] sm:$0xff]
        %v4007 = vld [vmem:[#allocation2 + $0xf8] sm:$0xff]
        %s4008 = scalar_lea.vmem %s1, 384
        %v4009 = vld [vmem:[%s4008] sm:$0xf]
        %v4010 = vld [vmem:[%s4008 + $0x4] sm:$0xf]
        %v4011 = vld [vmem:[%s4008 + $0x8] sm:$0xf]
        %v4012 = vld [vmem:[%s4008 + $0xc] sm:$0xf]
        %v4013 = vld [vmem:[%s4008 + $0x10] sm:$0xf]
        %v4014 = vld [vmem:[%s4008 + $0x14] sm:$0xf]
        %v4015 = vld [vmem:[%s4008 + $0x18] sm:$0xf]
        %v4016 = vld [vmem:[%s4008 + $0x1c] sm:$0xf]
        %v4017 = vld [vmem:[%s4008 + $0x20] sm:$0xf]
        %v4018 = vld [vmem:[%s4008 + $0x24] sm:$0xf]
        %v4019 = vld [vmem:[%s4008 + $0x28] sm:$0xf]
        %v4020 = vld [vmem:[%s4008 + $0x2c] sm:$0xf]
        %v4021 = vld [vmem:[%s4008 + $0x30] sm:$0xf]
        %v4022 = vld [vmem:[%s4008 + $0x34] sm:$0xf]
        %v4023 = vld [vmem:[%s4008 + $0x38] sm:$0xf]
        %v4024 = vld [vmem:[%s4008 + $0x3c] sm:$0xf]
        %v4057 = vunpack.c.l.b16 %v3944
        %v4058 = vunpack.c.l.b16 %v3945
        %v4059 = vunpack.c.l.b16 %v3946
        %v4060 = vunpack.c.l.b16 %v3947
        %v4061 = vunpack.c.l.b16 %v3948
        %v4062 = vunpack.c.l.b16 %v3949
        %v4063 = vunpack.c.l.b16 %v3950
        %v4064 = vunpack.c.l.b16 %v3951
        %v4065 = vunpack.c.l.b16 %v3952
        %v4066 = vunpack.c.l.b16 %v3953
        %v4067 = vunpack.c.l.b16 %v3954
        %v4068 = vunpack.c.l.b16 %v3955
        %v4069 = vunpack.c.l.b16 %v3956
        %v4070 = vunpack.c.l.b16 %v3957
        %v4071 = vunpack.c.l.b16 %v3958
        %v4072 = vunpack.c.l.b16 %v3959
        %v4073 = vunpack.c.l.b16 %v3960
        %v4074 = vunpack.c.l.b16 %v3961
        %v4075 = vunpack.c.l.b16 %v3962
        %v4076 = vunpack.c.l.b16 %v3963
        %v4077 = vunpack.c.l.b16 %v3964
        %v4078 = vunpack.c.l.b16 %v3965
        %v4079 = vunpack.c.l.b16 %v3966
        %v4080 = vunpack.c.l.b16 %v3967
        %v4081 = vunpack.c.l.b16 %v3968
        %v4082 = vunpack.c.l.b16 %v3969
        %v4083 = vunpack.c.l.b16 %v3970
        %v4084 = vunpack.c.l.b16 %v3971
        %v4085 = vunpack.c.l.b16 %v3972
        %v4086 = vunpack.c.l.b16 %v3973
        %v4087 = vunpack.c.l.b16 %v3974
        %v4088 = vunpack.c.l.b16 %v3975
        %v4089 = vpack.c.b16 %v4058, %v4057
        %v4090 = vpack.c.b16 %v4060, %v4059
        %v4091 = vpack.c.b16 %v4062, %v4061
        %v4092 = vpack.c.b16 %v4064, %v4063
        %v4093 = vpack.c.b16 %v4066, %v4065
        %v4094 = vpack.c.b16 %v4068, %v4067
        %v4095 = vpack.c.b16 %v4070, %v4069
        %v4096 = vpack.c.b16 %v4072, %v4071
        %v4097 = vpack.c.b16 %v4074, %v4073
        %v4098 = vpack.c.b16 %v4076, %v4075
        %v4099 = vpack.c.b16 %v4078, %v4077
        %v4100 = vpack.c.b16 %v4080, %v4079
        %v4101 = vpack.c.b16 %v4082, %v4081
        %v4102 = vpack.c.b16 %v4084, %v4083
        %v4103 = vpack.c.b16 %v4086, %v4085
        %v4104 = vpack.c.b16 %v4088, %v4087
        %v4137 = vunpack.c.l.b16 %v4009
        %v4138 = vunpack.c.l.b16 %v4010
        %v4139 = vunpack.c.l.b16 %v4011
        %v4140 = vunpack.c.l.b16 %v4012
        %v4141 = vunpack.c.l.b16 %v4013
        %v4142 = vunpack.c.l.b16 %v4014
        %v4143 = vunpack.c.l.b16 %v4015
        %v4144 = vunpack.c.l.b16 %v4016
        %v4145 = vunpack.c.l.b16 %v4017
        %v4146 = vunpack.c.l.b16 %v4018
        %v4147 = vunpack.c.l.b16 %v4019
        %v4148 = vunpack.c.l.b16 %v4020
        %v4149 = vunpack.c.l.b16 %v4021
        %v4150 = vunpack.c.l.b16 %v4022
        %v4151 = vunpack.c.l.b16 %v4023
        %v4152 = vunpack.c.l.b16 %v4024
        %v4153 = vpack.c.b16 %v4138, %v4137
        %v4154 = vpack.c.b16 %v4140, %v4139
        %v4155 = vpack.c.b16 %v4142, %v4141
        %v4156 = vpack.c.b16 %v4144, %v4143
        %v4157 = vpack.c.b16 %v4146, %v4145
        %v4158 = vpack.c.b16 %v4148, %v4147
        %v4159 = vpack.c.b16 %v4150, %v4149
        %v4160 = vpack.c.b16 %v4152, %v4151
        %4169 = vmatprep.subr.bf16.mxu0 0
        %4170 = vmatpush1.bf16.msra.mxu0 %v4160
        %4171 = vmatprep.subr.bf16.mxu0 0
        %4172 = vmatpush1.bf16.msra.mxu0 %v4159
        %4173 = vmatprep.subr.bf16.mxu0 0
        %4174 = vmatpush1.bf16.msra.mxu0 %v4158
        %4175 = vmatprep.subr.bf16.mxu0 0
        %4176 = vmatpush1.bf16.msra.mxu0 %v4157
        %4177 = vmatprep.subr.bf16.mxu0 0
        %4178 = vmatpush1.bf16.msra.mxu0 %v4156
        %4179 = vmatprep.subr.bf16.mxu0 0
        %4180 = vmatpush1.bf16.msra.mxu0 %v4155
        %4181 = vmatprep.subr.bf16.mxu0 0
        %4182 = vmatpush1.bf16.msra.mxu0 %v4154
        %4183 = vmatprep.subr.bf16.mxu0 0
        %4184 = vmatpush1.bf16.msra.mxu0 %v4153
        %4185 = vmatprep.subr.bf16.mxu0 0
        %4186 = vmatpush2.bf16.msra.mxu0 0
        %4187 = vmatprep.subr.bf16.mxu0 0
        %4188 = vmatpush2.bf16.msra.mxu0 0
        %4189 = vmatprep.subr.bf16.mxu0 0
        %4190 = vmatpush2.bf16.msra.mxu0 0
        %4191 = vmatprep.subr.bf16.mxu0 0
        %4192 = vmatpush2.bf16.msra.mxu0 0
        %4193 = vmatprep.subr.bf16.mxu0 0
        %4194 = vmatpush2.bf16.msra.mxu0 0
        %4195 = vmatprep.subr.bf16.mxu0 0
        %4196 = vmatpush2.bf16.msra.mxu0 0
        %4197 = vmatprep.subr.bf16.mxu0 0
        %4198 = vmatpush2.bf16.msra.mxu0 0
        %4199 = vmatprep.subr.bf16.mxu0 0
        %4200 = vmatpush2.bf16.msra.mxu0 0
        %4201 = vmatprep.mubr.bf16.mxu0 0
        %4202 = vmatmul.mubr.bf16.gmra.mxu0 %v4089
        %v4203 = vpop.f32.mrf.mxu0
        %v4204 = vadd.f32 0.0, %v4203
        %v4205 = vpop.f32.mrf.mxu0
        %v4206 = vpop.f32.mrf.mxu0
        %v4207 = vadd.f32 0.0, %v4206
        %v4208 = vpop.f32.mrf.mxu0
        %4209 = vmatprep.mubr.bf16.mxu0 0
        %4210 = vmatmul.mubr.bf16.gmra.mxu0 %v4090
        %v4211 = vpop.f32.mrf.mxu0
        %v4212 = vadd.f32 0.0, %v4211
        %v4213 = vpop.f32.mrf.mxu0
        %v4214 = vpop.f32.mrf.mxu0
        %v4215 = vadd.f32 0.0, %v4214
        %v4216 = vpop.f32.mrf.mxu0
        %4217 = vmatprep.mubr.bf16.mxu0 0
        %4218 = vmatmul.mubr.bf16.gmra.mxu0 %v4091
        %v4219 = vpop.f32.mrf.mxu0
        %v4220 = vadd.f32 0.0, %v4219
        %v4221 = vpop.f32.mrf.mxu0
        %v4222 = vpop.f32.mrf.mxu0
        %v4223 = vadd.f32 0.0, %v4222
        %v4224 = vpop.f32.mrf.mxu0
        %4225 = vmatprep.mubr.bf16.mxu0 0
        %4226 = vmatmul.mubr.bf16.gmra.mxu0 %v4092
        %v4227 = vpop.f32.mrf.mxu0
        %v4228 = vadd.f32 0.0, %v4227
        %v4229 = vpop.f32.mrf.mxu0
        %v4230 = vpop.f32.mrf.mxu0
        %v4231 = vadd.f32 0.0, %v4230
        %v4232 = vpop.f32.mrf.mxu0
        %4233 = vmatprep.mubr.bf16.mxu0 0
        %4234 = vmatmul.mubr.bf16.gmra.mxu0 %v4093
        %v4235 = vpop.f32.mrf.mxu0
        %v4236 = vadd.f32 0.0, %v4235
        %v4237 = vpop.f32.mrf.mxu0
        %v4238 = vpop.f32.mrf.mxu0
        %v4239 = vadd.f32 0.0, %v4238
        %v4240 = vpop.f32.mrf.mxu0
        %4241 = vmatprep.mubr.bf16.mxu0 0
        %4242 = vmatmul.mubr.bf16.gmra.mxu0 %v4094
        %v4243 = vpop.f32.mrf.mxu0
        %v4244 = vadd.f32 0.0, %v4243
        %v4245 = vpop.f32.mrf.mxu0
        %v4246 = vpop.f32.mrf.mxu0
        %v4247 = vadd.f32 0.0, %v4246
        %v4248 = vpop.f32.mrf.mxu0
        %4249 = vmatprep.mubr.bf16.mxu0 0
        %4250 = vmatmul.mubr.bf16.gmra.mxu0 %v4095
        %v4251 = vpop.f32.mrf.mxu0
        %v4252 = vadd.f32 0.0, %v4251
        %v4253 = vpop.f32.mrf.mxu0
        %v4254 = vpop.f32.mrf.mxu0
        %v4255 = vadd.f32 0.0, %v4254
        %v4256 = vpop.f32.mrf.mxu0
        %4257 = vmatprep.mubr.bf16.mxu0 0
        %4258 = vmatmul.mubr.bf16.gmra.mxu0 %v4096
        %v4259 = vpop.f32.mrf.mxu0
        %v4260 = vadd.f32 0.0, %v4259
        %v4261 = vpop.f32.mrf.mxu0
        %v4262 = vpop.f32.mrf.mxu0
        %v4263 = vadd.f32 0.0, %v4262
        %v4264 = vpop.f32.mrf.mxu0
        %4265 = vmatprep.mubr.bf16.mxu0 0
        %4266 = vmatmul.mubr.bf16.gmra.mxu0 %v4097
        %v4267 = vpop.f32.mrf.mxu0
        %v4268 = vadd.f32 0.0, %v4267
        %v4269 = vpop.f32.mrf.mxu0
        %v4270 = vpop.f32.mrf.mxu0
        %v4271 = vadd.f32 0.0, %v4270
        %v4272 = vpop.f32.mrf.mxu0
        %4273 = vmatprep.mubr.bf16.mxu0 0
        %4274 = vmatmul.mubr.bf16.gmra.mxu0 %v4098
        %v4275 = vpop.f32.mrf.mxu0
        %v4276 = vadd.f32 0.0, %v4275
        %v4277 = vpop.f32.mrf.mxu0
        %v4278 = vpop.f32.mrf.mxu0
        %v4279 = vadd.f32 0.0, %v4278
        %v4280 = vpop.f32.mrf.mxu0
        %4281 = vmatprep.mubr.bf16.mxu0 0
        %4282 = vmatmul.mubr.bf16.gmra.mxu0 %v4099
        %v4283 = vpop.f32.mrf.mxu0
        %v4284 = vadd.f32 0.0, %v4283
        %v4285 = vpop.f32.mrf.mxu0
        %v4286 = vpop.f32.mrf.mxu0
        %v4287 = vadd.f32 0.0, %v4286
        %v4288 = vpop.f32.mrf.mxu0
        %4289 = vmatprep.mubr.bf16.mxu0 0
        %4290 = vmatmul.mubr.bf16.gmra.mxu0 %v4100
        %v4291 = vpop.f32.mrf.mxu0
        %v4292 = vadd.f32 0.0, %v4291
        %v4293 = vpop.f32.mrf.mxu0
        %v4294 = vpop.f32.mrf.mxu0
        %v4295 = vadd.f32 0.0, %v4294
        %v4296 = vpop.f32.mrf.mxu0
        %4297 = vmatprep.mubr.bf16.mxu0 0
        %4298 = vmatmul.mubr.bf16.gmra.mxu0 %v4101
        %v4299 = vpop.f32.mrf.mxu0
        %v4300 = vadd.f32 0.0, %v4299
        %v4301 = vpop.f32.mrf.mxu0
        %v4302 = vpop.f32.mrf.mxu0
        %v4303 = vadd.f32 0.0, %v4302
        %v4304 = vpop.f32.mrf.mxu0
        %4305 = vmatprep.mubr.bf16.mxu0 0
        %4306 = vmatmul.mubr.bf16.gmra.mxu0 %v4102
        %v4307 = vpop.f32.mrf.mxu0
        %v4308 = vadd.f32 0.0, %v4307
        %v4309 = vpop.f32.mrf.mxu0
        %v4310 = vpop.f32.mrf.mxu0
        %v4311 = vadd.f32 0.0, %v4310
        %v4312 = vpop.f32.mrf.mxu0
        %4313 = vmatprep.mubr.bf16.mxu0 0
        %4314 = vmatmul.mubr.bf16.gmra.mxu0 %v4103
        %v4315 = vpop.f32.mrf.mxu0
        %v4316 = vadd.f32 0.0, %v4315
        %v4317 = vpop.f32.mrf.mxu0
        %v4318 = vpop.f32.mrf.mxu0
        %v4319 = vadd.f32 0.0, %v4318
        %v4320 = vpop.f32.mrf.mxu0
        %4321 = vmatprep.mubr.bf16.mxu0 0
        %4322 = vmatmul.mubr.bf16.gmra.mxu0 %v4104
        %v4323 = vpop.f32.mrf.mxu0
        %v4324 = vadd.f32 0.0, %v4323
        %v4325 = vpop.f32.mrf.mxu0
        %v4326 = vpop.f32.mrf.mxu0
        %v4327 = vadd.f32 0.0, %v4326
        %v4328 = vpop.f32.mrf.mxu0
        %4329 = vdwg.mxu0
        %v4330 = vadd.f32 %v3976, %v4204
        %v4331 = vadd.f32 %v3977, %v4207
        %v4332 = vadd.f32 %v3978, %v4212
        %v4333 = vadd.f32 %v3979, %v4215
        %v4334 = vadd.f32 %v3980, %v4220
        %v4335 = vadd.f32 %v3981, %v4223
        %v4336 = vadd.f32 %v3982, %v4228
        %v4337 = vadd.f32 %v3983, %v4231
        %v4338 = vadd.f32 %v3984, %v4236
        %v4339 = vadd.f32 %v3985, %v4239
        %v4340 = vadd.f32 %v3986, %v4244
        %v4341 = vadd.f32 %v3987, %v4247
        %v4342 = vadd.f32 %v3988, %v4252
        %v4343 = vadd.f32 %v3989, %v4255
        %v4344 = vadd.f32 %v3990, %v4260
        %v4345 = vadd.f32 %v3991, %v4263
        %v4346 = vadd.f32 %v3992, %v4268
        %v4347 = vadd.f32 %v3993, %v4271
        %v4348 = vadd.f32 %v3994, %v4276
        %v4349 = vadd.f32 %v3995, %v4279
        %v4350 = vadd.f32 %v3996, %v4284
        %v4351 = vadd.f32 %v3997, %v4287
        %v4352 = vadd.f32 %v3998, %v4292
        %v4353 = vadd.f32 %v3999, %v4295
        %v4354 = vadd.f32 %v4000, %v4300
        %v4355 = vadd.f32 %v4001, %v4303
        %v4356 = vadd.f32 %v4002, %v4308
        %v4357 = vadd.f32 %v4003, %v4311
        %v4358 = vadd.f32 %v4004, %v4316
        %v4359 = vadd.f32 %v4005, %v4319
        %v4360 = vadd.f32 %v4006, %v4324
        %v4361 = vadd.f32 %v4007, %v4327
        %4362 = vst [vmem:[#allocation2] sm:$0xff] %v4330
        %4363 = vst [vmem:[#allocation2 + $0x8] sm:$0xff] %v4331
        %4364 = vst [vmem:[#allocation2 + $0x10] sm:$0xff] %v4332
        %4365 = vst [vmem:[#allocation2 + $0x18] sm:$0xff] %v4333
        %4366 = vst [vmem:[#allocation2 + $0x20] sm:$0xff] %v4334
        %4367 = vst [vmem:[#allocation2 + $0x28] sm:$0xff] %v4335
        %4368 = vst [vmem:[#allocation2 + $0x30] sm:$0xff] %v4336
        %4369 = vst [vmem:[#allocation2 + $0x38] sm:$0xff] %v4337
        %4370 = vst [vmem:[#allocation2 + $0x40] sm:$0xff] %v4338
        %4371 = vst [vmem:[#allocation2 + $0x48] sm:$0xff] %v4339
        %4372 = vst [vmem:[#allocation2 + $0x50] sm:$0xff] %v4340
        %4373 = vst [vmem:[#allocation2 + $0x58] sm:$0xff] %v4341
        %4374 = vst [vmem:[#allocation2 + $0x60] sm:$0xff] %v4342
        %4375 = vst [vmem:[#allocation2 + $0x68] sm:$0xff] %v4343
        %4376 = vst [vmem:[#allocation2 + $0x70] sm:$0xff] %v4344
        %4377 = vst [vmem:[#allocation2 + $0x78] sm:$0xff] %v4345
        %4378 = vst [vmem:[#allocation2 + $0x80] sm:$0xff] %v4346
        %4379 = vst [vmem:[#allocation2 + $0x88] sm:$0xff] %v4347
        %4380 = vst [vmem:[#allocation2 + $0x90] sm:$0xff] %v4348
        %4381 = vst [vmem:[#allocation2 + $0x98] sm:$0xff] %v4349
        %4382 = vst [vmem:[#allocation2 + $0xa0] sm:$0xff] %v4350
        %4383 = vst [vmem:[#allocation2 + $0xa8] sm:$0xff] %v4351
        %4384 = vst [vmem:[#allocation2 + $0xb0] sm:$0xff] %v4352
        %4385 = vst [vmem:[#allocation2 + $0xb8] sm:$0xff] %v4353
        %4386 = vst [vmem:[#allocation2 + $0xc0] sm:$0xff] %v4354
        %4387 = vst [vmem:[#allocation2 + $0xc8] sm:$0xff] %v4355
        %4388 = vst [vmem:[#allocation2 + $0xd0] sm:$0xff] %v4356
        %4389 = vst [vmem:[#allocation2 + $0xd8] sm:$0xff] %v4357
        %4390 = vst [vmem:[#allocation2 + $0xe0] sm:$0xff] %v4358
        %4391 = vst [vmem:[#allocation2 + $0xe8] sm:$0xff] %v4359
        %4392 = vst [vmem:[#allocation2 + $0xf0] sm:$0xff] %v4360
        %4393 = vst [vmem:[#allocation2 + $0xf8] sm:$0xff] %v4361
        %v4394 = vld [vmem:[%s3943] sm:$0xf]
        %v4395 = vld [vmem:[%s3943 + $0x4] sm:$0xf]
        %v4396 = vld [vmem:[%s3943 + $0x8] sm:$0x1]
        %v4397 = vld [vmem:[%s3943 + $0xc] sm:$0xf]
        %v4398 = vld [vmem:[%s3943 + $0x10] sm:$0xf]
        %v4399 = vld [vmem:[%s3943 + $0x14] sm:$0x1]
        %v4400 = vld [vmem:[%s3943 + $0x18] sm:$0xf]
        %v4401 = vld [vmem:[%s3943 + $0x1c] sm:$0xf]
        %v4402 = vld [vmem:[%s3943 + $0x20] sm:$0x1]
        %v4403 = vld [vmem:[%s3943 + $0x24] sm:$0xf]
        %v4404 = vld [vmem:[%s3943 + $0x28] sm:$0xf]
        %v4405 = vld [vmem:[%s3943 + $0x2c] sm:$0x1]
        %v4406 = vld [vmem:[%s3943 + $0x30] sm:$0xf]
        %v4407 = vld [vmem:[%s3943 + $0x34] sm:$0xf]
        %v4408 = vld [vmem:[%s3943 + $0x38] sm:$0x1]
        %v4409 = vld [vmem:[%s3943 + $0x3c] sm:$0xf]
        %v4410 = vld [vmem:[%s3943 + $0x40] sm:$0xf]
        %v4411 = vld [vmem:[%s3943 + $0x44] sm:$0x1]
        %v4412 = vld [vmem:[%s3943 + $0x48] sm:$0xf]
        %v4413 = vld [vmem:[%s3943 + $0x4c] sm:$0xf]
        %v4414 = vld [vmem:[%s3943 + $0x50] sm:$0x1]
        %v4415 = vld [vmem:[%s3943 + $0x54] sm:$0xf]
        %v4416 = vld [vmem:[%s3943 + $0x58] sm:$0xf]
        %v4417 = vld [vmem:[%s3943 + $0x5c] sm:$0x1]
        %v4418 = vld [vmem:[%s3943 + $0x60] sm:$0xf]
        %v4419 = vld [vmem:[%s3943 + $0x64] sm:$0xf]
        %v4420 = vld [vmem:[%s3943 + $0x68] sm:$0x1]
        %v4421 = vld [vmem:[%s3943 + $0x6c] sm:$0xf]
        %v4422 = vld [vmem:[%s3943 + $0x70] sm:$0xf]
        %v4423 = vld [vmem:[%s3943 + $0x74] sm:$0x1]
        %v4424 = vld [vmem:[%s3943 + $0x78] sm:$0xf]
        %v4425 = vld [vmem:[%s3943 + $0x7c] sm:$0xf]
        %v4426 = vld [vmem:[%s3943 + $0x80] sm:$0x1]
        %v4427 = vld [vmem:[%s3943 + $0x84] sm:$0xf]
        %v4428 = vld [vmem:[%s3943 + $0x88] sm:$0xf]
        %v4429 = vld [vmem:[%s3943 + $0x8c] sm:$0x1]
        %v4430 = vld [vmem:[%s3943 + $0x90] sm:$0xf]
        %v4431 = vld [vmem:[%s3943 + $0x94] sm:$0xf]
        %v4432 = vld [vmem:[%s3943 + $0x98] sm:$0x1]
        %v4433 = vld [vmem:[%s3943 + $0x9c] sm:$0xf]
        %v4434 = vld [vmem:[%s3943 + $0xa0] sm:$0xf]
        %v4435 = vld [vmem:[%s3943 + $0xa4] sm:$0x1]
        %v4436 = vld [vmem:[%s3943 + $0xa8] sm:$0xf]
        %v4437 = vld [vmem:[%s3943 + $0xac] sm:$0xf]
        %v4438 = vld [vmem:[%s3943 + $0xb0] sm:$0x1]
        %v4439 = vld [vmem:[%s3943 + $0xb4] sm:$0xf]
        %v4440 = vld [vmem:[%s3943 + $0xb8] sm:$0xf]
        %v4441 = vld [vmem:[%s3943 + $0xbc] sm:$0x1]
        %v4442 = vld [vmem:[#allocation2] sm:$0xff]
        %v4443 = vld [vmem:[#allocation2 + $0x8] sm:$0xff]
        %v4444 = vld [vmem:[#allocation2 + $0x10] sm:$0xff]
        %v4445 = vld [vmem:[#allocation2 + $0x18] sm:$0xff]
        %v4446 = vld [vmem:[#allocation2 + $0x20] sm:$0xff]
        %v4447 = vld [vmem:[#allocation2 + $0x28] sm:$0xff]
        %v4448 = vld [vmem:[#allocation2 + $0x30] sm:$0xff]
        %v4449 = vld [vmem:[#allocation2 + $0x38] sm:$0xff]
        %v4450 = vld [vmem:[#allocation2 + $0x40] sm:$0xff]
        %v4451 = vld [vmem:[#allocation2 + $0x48] sm:$0xff]
        %v4452 = vld [vmem:[#allocation2 + $0x50] sm:$0xff]
        %v4453 = vld [vmem:[#allocation2 + $0x58] sm:$0xff]
        %v4454 = vld [vmem:[#allocation2 + $0x60] sm:$0xff]
        %v4455 = vld [vmem:[#allocation2 + $0x68] sm:$0xff]
        %v4456 = vld [vmem:[#allocation2 + $0x70] sm:$0xff]
        %v4457 = vld [vmem:[#allocation2 + $0x78] sm:$0xff]
        %v4458 = vld [vmem:[#allocation2 + $0x80] sm:$0xff]
        %v4459 = vld [vmem:[#allocation2 + $0x88] sm:$0xff]
        %v4460 = vld [vmem:[#allocation2 + $0x90] sm:$0xff]
        %v4461 = vld [vmem:[#allocation2 + $0x98] sm:$0xff]
        %v4462 = vld [vmem:[#allocation2 + $0xa0] sm:$0xff]
        %v4463 = vld [vmem:[#allocation2 + $0xa8] sm:$0xff]
        %v4464 = vld [vmem:[#allocation2 + $0xb0] sm:$0xff]
        %v4465 = vld [vmem:[#allocation2 + $0xb8] sm:$0xff]
        %v4466 = vld [vmem:[#allocation2 + $0xc0] sm:$0xff]
        %v4467 = vld [vmem:[#allocation2 + $0xc8] sm:$0xff]
        %v4468 = vld [vmem:[#allocation2 + $0xd0] sm:$0xff]
        %v4469 = vld [vmem:[#allocation2 + $0xd8] sm:$0xff]
        %v4470 = vld [vmem:[#allocation2 + $0xe0] sm:$0xff]
        %v4471 = vld [vmem:[#allocation2 + $0xe8] sm:$0xff]
        %v4472 = vld [vmem:[#allocation2 + $0xf0] sm:$0xff]
        %v4473 = vld [vmem:[#allocation2 + $0xf8] sm:$0xff]
        %v4475 = vshrl.u32 %v4394, 16
        %v4477 = vrot.slane %v4475, 4
        %v4478 = vshll.u32 %v4394, 16
        %v4480 = vrot.slane %v4478, 5
        %v4481 = vor.u32 %v4477, %v4480
        %v4482 = vrot.slane %v4481, 4
        %v4484 = vshll.u32 %v4395, 16
        %v4486 = vrot.slane %v4484, 5
        %v4487 = vsel %vm744, %v4482, %v4486
        %v4488 = vshrl.u32 %v4395, 16
        %v4490 = vrot.slane %v4488, 4
        %v4491 = vor.u32 %v4490, %v4486
        %v4492 = vrot.slane %v4491, 4
        %v4494 = vshll.u32 %v4396, 16
        %v4496 = vrot.slane %v4494, 5
        %v4497 = vsel %vm744, %v4492, %v4496
        %v4499 = vshrl.u32 %v4397, 16
        %v4501 = vrot.slane %v4499, 4
        %v4502 = vshll.u32 %v4397, 16
        %v4504 = vrot.slane %v4502, 5
        %v4505 = vor.u32 %v4501, %v4504
        %v4506 = vrot.slane %v4505, 4
        %v4508 = vshll.u32 %v4398, 16
        %v4510 = vrot.slane %v4508, 5
        %v4511 = vsel %vm744, %v4506, %v4510
        %v4512 = vshrl.u32 %v4398, 16
        %v4514 = vrot.slane %v4512, 4
        %v4515 = vor.u32 %v4514, %v4510
        %v4516 = vrot.slane %v4515, 4
        %v4518 = vshll.u32 %v4399, 16
        %v4520 = vrot.slane %v4518, 5
        %v4521 = vsel %vm744, %v4516, %v4520
        %v4523 = vshrl.u32 %v4400, 16
        %v4525 = vrot.slane %v4523, 4
        %v4526 = vshll.u32 %v4400, 16
        %v4528 = vrot.slane %v4526, 5
        %v4529 = vor.u32 %v4525, %v4528
        %v4530 = vrot.slane %v4529, 4
        %v4532 = vshll.u32 %v4401, 16
        %v4534 = vrot.slane %v4532, 5
        %v4535 = vsel %vm744, %v4530, %v4534
        %v4536 = vshrl.u32 %v4401, 16
        %v4538 = vrot.slane %v4536, 4
        %v4539 = vor.u32 %v4538, %v4534
        %v4540 = vrot.slane %v4539, 4
        %v4542 = vshll.u32 %v4402, 16
        %v4544 = vrot.slane %v4542, 5
        %v4545 = vsel %vm744, %v4540, %v4544
        %v4547 = vshrl.u32 %v4403, 16
        %v4549 = vrot.slane %v4547, 4
        %v4550 = vshll.u32 %v4403, 16
        %v4552 = vrot.slane %v4550, 5
        %v4553 = vor.u32 %v4549, %v4552
        %v4554 = vrot.slane %v4553, 4
        %v4556 = vshll.u32 %v4404, 16
        %v4558 = vrot.slane %v4556, 5
        %v4559 = vsel %vm744, %v4554, %v4558
        %v4560 = vshrl.u32 %v4404, 16
        %v4562 = vrot.slane %v4560, 4
        %v4563 = vor.u32 %v4562, %v4558
        %v4564 = vrot.slane %v4563, 4
        %v4566 = vshll.u32 %v4405, 16
        %v4568 = vrot.slane %v4566, 5
        %v4569 = vsel %vm744, %v4564, %v4568
        %v4571 = vshrl.u32 %v4406, 16
        %v4573 = vrot.slane %v4571, 4
        %v4574 = vshll.u32 %v4406, 16
        %v4576 = vrot.slane %v4574, 5
        %v4577 = vor.u32 %v4573, %v4576
        %v4578 = vrot.slane %v4577, 4
        %v4580 = vshll.u32 %v4407, 16
        %v4582 = vrot.slane %v4580, 5
        %v4583 = vsel %vm744, %v4578, %v4582
        %v4584 = vshrl.u32 %v4407, 16
        %v4586 = vrot.slane %v4584, 4
        %v4587 = vor.u32 %v4586, %v4582
        %v4588 = vrot.slane %v4587, 4
        %v4590 = vshll.u32 %v4408, 16
        %v4592 = vrot.slane %v4590, 5
        %v4593 = vsel %vm744, %v4588, %v4592
        %v4595 = vshrl.u32 %v4409, 16
        %v4597 = vrot.slane %v4595, 4
        %v4598 = vshll.u32 %v4409, 16
        %v4600 = vrot.slane %v4598, 5
        %v4601 = vor.u32 %v4597, %v4600
        %v4602 = vrot.slane %v4601, 4
        %v4604 = vshll.u32 %v4410, 16
        %v4606 = vrot.slane %v4604, 5
        %v4607 = vsel %vm744, %v4602, %v4606
        %v4608 = vshrl.u32 %v4410, 16
        %v4610 = vrot.slane %v4608, 4
        %v4611 = vor.u32 %v4610, %v4606
        %v4612 = vrot.slane %v4611, 4
        %v4614 = vshll.u32 %v4411, 16
        %v4616 = vrot.slane %v4614, 5
        %v4617 = vsel %vm744, %v4612, %v4616
        %v4619 = vshrl.u32 %v4412, 16
        %v4621 = vrot.slane %v4619, 4
        %v4622 = vshll.u32 %v4412, 16
        %v4624 = vrot.slane %v4622, 5
        %v4625 = vor.u32 %v4621, %v4624
        %v4626 = vrot.slane %v4625, 4
        %v4628 = vshll.u32 %v4413, 16
        %v4630 = vrot.slane %v4628, 5
        %v4631 = vsel %vm744, %v4626, %v4630
        %v4632 = vshrl.u32 %v4413, 16
        %v4634 = vrot.slane %v4632, 4
        %v4635 = vor.u32 %v4634, %v4630
        %v4636 = vrot.slane %v4635, 4
        %v4638 = vshll.u32 %v4414, 16
        %v4640 = vrot.slane %v4638, 5
        %v4641 = vsel %vm744, %v4636, %v4640
        %v4643 = vshrl.u32 %v4415, 16
        %v4645 = vrot.slane %v4643, 4
        %v4646 = vshll.u32 %v4415, 16
        %v4648 = vrot.slane %v4646, 5
        %v4649 = vor.u32 %v4645, %v4648
        %v4650 = vrot.slane %v4649, 4
        %v4652 = vshll.u32 %v4416, 16
        %v4654 = vrot.slane %v4652, 5
        %v4655 = vsel %vm744, %v4650, %v4654
        %v4656 = vshrl.u32 %v4416, 16
        %v4658 = vrot.slane %v4656, 4
        %v4659 = vor.u32 %v4658, %v4654
        %v4660 = vrot.slane %v4659, 4
        %v4662 = vshll.u32 %v4417, 16
        %v4664 = vrot.slane %v4662, 5
        %v4665 = vsel %vm744, %v4660, %v4664
        %v4667 = vshrl.u32 %v4418, 16
        %v4669 = vrot.slane %v4667, 4
        %v4670 = vshll.u32 %v4418, 16
        %v4672 = vrot.slane %v4670, 5
        %v4673 = vor.u32 %v4669, %v4672
        %v4674 = vrot.slane %v4673, 4
        %v4676 = vshll.u32 %v4419, 16
        %v4678 = vrot.slane %v4676, 5
        %v4679 = vsel %vm744, %v4674, %v4678
        %v4680 = vshrl.u32 %v4419, 16
        %v4682 = vrot.slane %v4680, 4
        %v4683 = vor.u32 %v4682, %v4678
        %v4684 = vrot.slane %v4683, 4
        %v4686 = vshll.u32 %v4420, 16
        %v4688 = vrot.slane %v4686, 5
        %v4689 = vsel %vm744, %v4684, %v4688
        %v4691 = vshrl.u32 %v4421, 16
        %v4693 = vrot.slane %v4691, 4
        %v4694 = vshll.u32 %v4421, 16
        %v4696 = vrot.slane %v4694, 5
        %v4697 = vor.u32 %v4693, %v4696
        %v4698 = vrot.slane %v4697, 4
        %v4700 = vshll.u32 %v4422, 16
        %v4702 = vrot.slane %v4700, 5
        %v4703 = vsel %vm744, %v4698, %v4702
        %v4704 = vshrl.u32 %v4422, 16
        %v4706 = vrot.slane %v4704, 4
        %v4707 = vor.u32 %v4706, %v4702
        %v4708 = vrot.slane %v4707, 4
        %v4710 = vshll.u32 %v4423, 16
        %v4712 = vrot.slane %v4710, 5
        %v4713 = vsel %vm744, %v4708, %v4712
        %v4715 = vshrl.u32 %v4424, 16
        %v4717 = vrot.slane %v4715, 4
        %v4718 = vshll.u32 %v4424, 16
        %v4720 = vrot.slane %v4718, 5
        %v4721 = vor.u32 %v4717, %v4720
        %v4722 = vrot.slane %v4721, 4
        %v4724 = vshll.u32 %v4425, 16
        %v4726 = vrot.slane %v4724, 5
        %v4727 = vsel %vm744, %v4722, %v4726
        %v4728 = vshrl.u32 %v4425, 16
        %v4730 = vrot.slane %v4728, 4
        %v4731 = vor.u32 %v4730, %v4726
        %v4732 = vrot.slane %v4731, 4
        %v4734 = vshll.u32 %v4426, 16
        %v4736 = vrot.slane %v4734, 5
        %v4737 = vsel %vm744, %v4732, %v4736
        %v4739 = vshrl.u32 %v4427, 16
        %v4741 = vrot.slane %v4739, 4
        %v4742 = vshll.u32 %v4427, 16
        %v4744 = vrot.slane %v4742, 5
        %v4745 = vor.u32 %v4741, %v4744
        %v4746 = vrot.slane %v4745, 4
        %v4748 = vshll.u32 %v4428, 16
        %v4750 = vrot.slane %v4748, 5
        %v4751 = vsel %vm744, %v4746, %v4750
        %v4752 = vshrl.u32 %v4428, 16
        %v4754 = vrot.slane %v4752, 4
        %v4755 = vor.u32 %v4754, %v4750
        %v4756 = vrot.slane %v4755, 4
        %v4758 = vshll.u32 %v4429, 16
        %v4760 = vrot.slane %v4758, 5
        %v4761 = vsel %vm744, %v4756, %v4760
        %v4763 = vshrl.u32 %v4430, 16
        %v4765 = vrot.slane %v4763, 4
        %v4766 = vshll.u32 %v4430, 16
        %v4768 = vrot.slane %v4766, 5
        %v4769 = vor.u32 %v4765, %v4768
        %v4770 = vrot.slane %v4769, 4
        %v4772 = vshll.u32 %v4431, 16
        %v4774 = vrot.slane %v4772, 5
        %v4775 = vsel %vm744, %v4770, %v4774
        %v4776 = vshrl.u32 %v4431, 16
        %v4778 = vrot.slane %v4776, 4
        %v4779 = vor.u32 %v4778, %v4774
        %v4780 = vrot.slane %v4779, 4
        %v4782 = vshll.u32 %v4432, 16
        %v4784 = vrot.slane %v4782, 5
        %v4785 = vsel %vm744, %v4780, %v4784
        %v4787 = vshrl.u32 %v4433, 16
        %v4789 = vrot.slane %v4787, 4
        %v4790 = vshll.u32 %v4433, 16
        %v4792 = vrot.slane %v4790, 5
        %v4793 = vor.u32 %v4789, %v4792
        %v4794 = vrot.slane %v4793, 4
        %v4796 = vshll.u32 %v4434, 16
        %v4798 = vrot.slane %v4796, 5
        %v4799 = vsel %vm744, %v4794, %v4798
        %v4800 = vshrl.u32 %v4434, 16
        %v4802 = vrot.slane %v4800, 4
        %v4803 = vor.u32 %v4802, %v4798
        %v4804 = vrot.slane %v4803, 4
        %v4806 = vshll.u32 %v4435, 16
        %v4808 = vrot.slane %v4806, 5
        %v4809 = vsel %vm744, %v4804, %v4808
        %v4811 = vshrl.u32 %v4436, 16
        %v4813 = vrot.slane %v4811, 4
        %v4814 = vshll.u32 %v4436, 16
        %v4816 = vrot.slane %v4814, 5
        %v4817 = vor.u32 %v4813, %v4816
        %v4818 = vrot.slane %v4817, 4
        %v4820 = vshll.u32 %v4437, 16
        %v4822 = vrot.slane %v4820, 5
        %v4823 = vsel %vm744, %v4818, %v4822
        %v4824 = vshrl.u32 %v4437, 16
        %v4826 = vrot.slane %v4824, 4
        %v4827 = vor.u32 %v4826, %v4822
        %v4828 = vrot.slane %v4827, 4
        %v4830 = vshll.u32 %v4438, 16
        %v4832 = vrot.slane %v4830, 5
        %v4833 = vsel %vm744, %v4828, %v4832
        %v4835 = vshrl.u32 %v4439, 16
        %v4837 = vrot.slane %v4835, 4
        %v4838 = vshll.u32 %v4439, 16
        %v4840 = vrot.slane %v4838, 5
        %v4841 = vor.u32 %v4837, %v4840
        %v4842 = vrot.slane %v4841, 4
        %v4844 = vshll.u32 %v4440, 16
        %v4846 = vrot.slane %v4844, 5
        %v4847 = vsel %vm744, %v4842, %v4846
        %v4848 = vshrl.u32 %v4440, 16
        %v4850 = vrot.slane %v4848, 4
        %v4851 = vor.u32 %v4850, %v4846
        %v4852 = vrot.slane %v4851, 4
        %v4854 = vshll.u32 %v4441, 16
        %v4856 = vrot.slane %v4854, 5
        %v4857 = vsel %vm744, %v4852, %v4856
        %s4858 = scalar_lea.vmem %s1, 448
        %v4859 = vld [vmem:[%s4858] sm:$0xf]
        %v4860 = vld [vmem:[%s4858 + $0x4] sm:$0xf]
        %v4861 = vld [vmem:[%s4858 + $0x8] sm:$0xf]
        %v4862 = vld [vmem:[%s4858 + $0xc] sm:$0xf]
        %v4863 = vld [vmem:[%s4858 + $0x10] sm:$0xf]
        %v4864 = vld [vmem:[%s4858 + $0x14] sm:$0xf]
        %v4865 = vld [vmem:[%s4858 + $0x18] sm:$0xf]
        %v4866 = vld [vmem:[%s4858 + $0x1c] sm:$0xf]
        %v4867 = vld [vmem:[%s4858 + $0x20] sm:$0xf]
        %v4868 = vld [vmem:[%s4858 + $0x24] sm:$0xf]
        %v4869 = vld [vmem:[%s4858 + $0x28] sm:$0xf]
        %v4870 = vld [vmem:[%s4858 + $0x2c] sm:$0xf]
        %v4871 = vld [vmem:[%s4858 + $0x30] sm:$0xf]
        %v4872 = vld [vmem:[%s4858 + $0x34] sm:$0xf]
        %v4873 = vld [vmem:[%s4858 + $0x38] sm:$0xf]
        %v4874 = vld [vmem:[%s4858 + $0x3c] sm:$0xf]
        %v4875 = vunpack.c.l.b16 %v4487
        %v4876 = vunpack.c.l.b16 %v4497
        %v4877 = vunpack.c.l.b16 %v4511
        %v4878 = vunpack.c.l.b16 %v4521
        %v4879 = vunpack.c.l.b16 %v4535
        %v4880 = vunpack.c.l.b16 %v4545
        %v4881 = vunpack.c.l.b16 %v4559
        %v4882 = vunpack.c.l.b16 %v4569
        %v4883 = vunpack.c.l.b16 %v4583
        %v4884 = vunpack.c.l.b16 %v4593
        %v4885 = vunpack.c.l.b16 %v4607
        %v4886 = vunpack.c.l.b16 %v4617
        %v4887 = vunpack.c.l.b16 %v4631
        %v4888 = vunpack.c.l.b16 %v4641
        %v4889 = vunpack.c.l.b16 %v4655
        %v4890 = vunpack.c.l.b16 %v4665
        %v4891 = vunpack.c.l.b16 %v4679
        %v4892 = vunpack.c.l.b16 %v4689
        %v4893 = vunpack.c.l.b16 %v4703
        %v4894 = vunpack.c.l.b16 %v4713
        %v4895 = vunpack.c.l.b16 %v4727
        %v4896 = vunpack.c.l.b16 %v4737
        %v4897 = vunpack.c.l.b16 %v4751
        %v4898 = vunpack.c.l.b16 %v4761
        %v4899 = vunpack.c.l.b16 %v4775
        %v4900 = vunpack.c.l.b16 %v4785
        %v4901 = vunpack.c.l.b16 %v4799
        %v4902 = vunpack.c.l.b16 %v4809
        %v4903 = vunpack.c.l.b16 %v4823
        %v4904 = vunpack.c.l.b16 %v4833
        %v4905 = vunpack.c.l.b16 %v4847
        %v4906 = vunpack.c.l.b16 %v4857
        %v4907 = vpack.c.b16 %v4876, %v4875
        %v4908 = vpack.c.b16 %v4878, %v4877
        %v4909 = vpack.c.b16 %v4880, %v4879
        %v4910 = vpack.c.b16 %v4882, %v4881
        %v4911 = vpack.c.b16 %v4884, %v4883
        %v4912 = vpack.c.b16 %v4886, %v4885
        %v4913 = vpack.c.b16 %v4888, %v4887
        %v4914 = vpack.c.b16 %v4890, %v4889
        %v4915 = vpack.c.b16 %v4892, %v4891
        %v4916 = vpack.c.b16 %v4894, %v4893
        %v4917 = vpack.c.b16 %v4896, %v4895
        %v4918 = vpack.c.b16 %v4898, %v4897
        %v4919 = vpack.c.b16 %v4900, %v4899
        %v4920 = vpack.c.b16 %v4902, %v4901
        %v4921 = vpack.c.b16 %v4904, %v4903
        %v4922 = vpack.c.b16 %v4906, %v4905
        %v4955 = vunpack.c.l.b16 %v4859
        %v4956 = vunpack.c.l.b16 %v4860
        %v4957 = vunpack.c.l.b16 %v4861
        %v4958 = vunpack.c.l.b16 %v4862
        %v4959 = vunpack.c.l.b16 %v4863
        %v4960 = vunpack.c.l.b16 %v4864
        %v4961 = vunpack.c.l.b16 %v4865
        %v4962 = vunpack.c.l.b16 %v4866
        %v4963 = vunpack.c.l.b16 %v4867
        %v4964 = vunpack.c.l.b16 %v4868
        %v4965 = vunpack.c.l.b16 %v4869
        %v4966 = vunpack.c.l.b16 %v4870
        %v4967 = vunpack.c.l.b16 %v4871
        %v4968 = vunpack.c.l.b16 %v4872
        %v4969 = vunpack.c.l.b16 %v4873
        %v4970 = vunpack.c.l.b16 %v4874
        %v4971 = vpack.c.b16 %v4956, %v4955
        %v4972 = vpack.c.b16 %v4958, %v4957
        %v4973 = vpack.c.b16 %v4960, %v4959
        %v4974 = vpack.c.b16 %v4962, %v4961
        %v4975 = vpack.c.b16 %v4964, %v4963
        %v4976 = vpack.c.b16 %v4966, %v4965
        %v4977 = vpack.c.b16 %v4968, %v4967
        %v4978 = vpack.c.b16 %v4970, %v4969
        %4987 = vmatprep.subr.bf16.mxu0 0
        %4988 = vmatpush1.bf16.msra.mxu0 %v4978
        %4989 = vmatprep.subr.bf16.mxu0 0
        %4990 = vmatpush1.bf16.msra.mxu0 %v4977
        %4991 = vmatprep.subr.bf16.mxu0 0
        %4992 = vmatpush1.bf16.msra.mxu0 %v4976
        %4993 = vmatprep.subr.bf16.mxu0 0
        %4994 = vmatpush1.bf16.msra.mxu0 %v4975
        %4995 = vmatprep.subr.bf16.mxu0 0
        %4996 = vmatpush1.bf16.msra.mxu0 %v4974
        %4997 = vmatprep.subr.bf16.mxu0 0
        %4998 = vmatpush1.bf16.msra.mxu0 %v4973
        %4999 = vmatprep.subr.bf16.mxu0 0
        %5000 = vmatpush1.bf16.msra.mxu0 %v4972
        %5001 = vmatprep.subr.bf16.mxu0 0
        %5002 = vmatpush1.bf16.msra.mxu0 %v4971
        %5003 = vmatprep.subr.bf16.mxu0 0
        %5004 = vmatpush2.bf16.msra.mxu0 0
        %5005 = vmatprep.subr.bf16.mxu0 0
        %5006 = vmatpush2.bf16.msra.mxu0 0
        %5007 = vmatprep.subr.bf16.mxu0 0
        %5008 = vmatpush2.bf16.msra.mxu0 0
        %5009 = vmatprep.subr.bf16.mxu0 0
        %5010 = vmatpush2.bf16.msra.mxu0 0
        %5011 = vmatprep.subr.bf16.mxu0 0
        %5012 = vmatpush2.bf16.msra.mxu0 0
        %5013 = vmatprep.subr.bf16.mxu0 0
        %5014 = vmatpush2.bf16.msra.mxu0 0
        %5015 = vmatprep.subr.bf16.mxu0 0
        %5016 = vmatpush2.bf16.msra.mxu0 0
        %5017 = vmatprep.subr.bf16.mxu0 0
        %5018 = vmatpush2.bf16.msra.mxu0 0
        %5019 = vmatprep.mubr.bf16.mxu0 0
        %5020 = vmatmul.mubr.bf16.gmra.mxu0 %v4907
        %v5021 = vpop.f32.mrf.mxu0
        %v5022 = vadd.f32 0.0, %v5021
        %v5023 = vpop.f32.mrf.mxu0
        %v5024 = vpop.f32.mrf.mxu0
        %v5025 = vadd.f32 0.0, %v5024
        %v5026 = vpop.f32.mrf.mxu0
        %5027 = vmatprep.mubr.bf16.mxu0 0
        %5028 = vmatmul.mubr.bf16.gmra.mxu0 %v4908
        %v5029 = vpop.f32.mrf.mxu0
        %v5030 = vadd.f32 0.0, %v5029
        %v5031 = vpop.f32.mrf.mxu0
        %v5032 = vpop.f32.mrf.mxu0
        %v5033 = vadd.f32 0.0, %v5032
        %v5034 = vpop.f32.mrf.mxu0
        %5035 = vmatprep.mubr.bf16.mxu0 0
        %5036 = vmatmul.mubr.bf16.gmra.mxu0 %v4909
        %v5037 = vpop.f32.mrf.mxu0
        %v5038 = vadd.f32 0.0, %v5037
        %v5039 = vpop.f32.mrf.mxu0
        %v5040 = vpop.f32.mrf.mxu0
        %v5041 = vadd.f32 0.0, %v5040
        %v5042 = vpop.f32.mrf.mxu0
        %5043 = vmatprep.mubr.bf16.mxu0 0
        %5044 = vmatmul.mubr.bf16.gmra.mxu0 %v4910
        %v5045 = vpop.f32.mrf.mxu0
        %v5046 = vadd.f32 0.0, %v5045
        %v5047 = vpop.f32.mrf.mxu0
        %v5048 = vpop.f32.mrf.mxu0
        %v5049 = vadd.f32 0.0, %v5048
        %v5050 = vpop.f32.mrf.mxu0
        %5051 = vmatprep.mubr.bf16.mxu0 0
        %5052 = vmatmul.mubr.bf16.gmra.mxu0 %v4911
        %v5053 = vpop.f32.mrf.mxu0
        %v5054 = vadd.f32 0.0, %v5053
        %v5055 = vpop.f32.mrf.mxu0
        %v5056 = vpop.f32.mrf.mxu0
        %v5057 = vadd.f32 0.0, %v5056
        %v5058 = vpop.f32.mrf.mxu0
        %5059 = vmatprep.mubr.bf16.mxu0 0
        %5060 = vmatmul.mubr.bf16.gmra.mxu0 %v4912
        %v5061 = vpop.f32.mrf.mxu0
        %v5062 = vadd.f32 0.0, %v5061
        %v5063 = vpop.f32.mrf.mxu0
        %v5064 = vpop.f32.mrf.mxu0
        %v5065 = vadd.f32 0.0, %v5064
        %v5066 = vpop.f32.mrf.mxu0
        %5067 = vmatprep.mubr.bf16.mxu0 0
        %5068 = vmatmul.mubr.bf16.gmra.mxu0 %v4913
        %v5069 = vpop.f32.mrf.mxu0
        %v5070 = vadd.f32 0.0, %v5069
        %v5071 = vpop.f32.mrf.mxu0
        %v5072 = vpop.f32.mrf.mxu0
        %v5073 = vadd.f32 0.0, %v5072
        %v5074 = vpop.f32.mrf.mxu0
        %5075 = vmatprep.mubr.bf16.mxu0 0
        %5076 = vmatmul.mubr.bf16.gmra.mxu0 %v4914
        %v5077 = vpop.f32.mrf.mxu0
        %v5078 = vadd.f32 0.0, %v5077
        %v5079 = vpop.f32.mrf.mxu0
        %v5080 = vpop.f32.mrf.mxu0
        %v5081 = vadd.f32 0.0, %v5080
        %v5082 = vpop.f32.mrf.mxu0
        %5083 = vmatprep.mubr.bf16.mxu0 0
        %5084 = vmatmul.mubr.bf16.gmra.mxu0 %v4915
        %v5085 = vpop.f32.mrf.mxu0
        %v5086 = vadd.f32 0.0, %v5085
        %v5087 = vpop.f32.mrf.mxu0
        %v5088 = vpop.f32.mrf.mxu0
        %v5089 = vadd.f32 0.0, %v5088
        %v5090 = vpop.f32.mrf.mxu0
        %5091 = vmatprep.mubr.bf16.mxu0 0
        %5092 = vmatmul.mubr.bf16.gmra.mxu0 %v4916
        %v5093 = vpop.f32.mrf.mxu0
        %v5094 = vadd.f32 0.0, %v5093
        %v5095 = vpop.f32.mrf.mxu0
        %v5096 = vpop.f32.mrf.mxu0
        %v5097 = vadd.f32 0.0, %v5096
        %v5098 = vpop.f32.mrf.mxu0
        %5099 = vmatprep.mubr.bf16.mxu0 0
        %5100 = vmatmul.mubr.bf16.gmra.mxu0 %v4917
        %v5101 = vpop.f32.mrf.mxu0
        %v5102 = vadd.f32 0.0, %v5101
        %v5103 = vpop.f32.mrf.mxu0
        %v5104 = vpop.f32.mrf.mxu0
        %v5105 = vadd.f32 0.0, %v5104
        %v5106 = vpop.f32.mrf.mxu0
        %5107 = vmatprep.mubr.bf16.mxu0 0
        %5108 = vmatmul.mubr.bf16.gmra.mxu0 %v4918
        %v5109 = vpop.f32.mrf.mxu0
        %v5110 = vadd.f32 0.0, %v5109
        %v5111 = vpop.f32.mrf.mxu0
        %v5112 = vpop.f32.mrf.mxu0
        %v5113 = vadd.f32 0.0, %v5112
        %v5114 = vpop.f32.mrf.mxu0
        %5115 = vmatprep.mubr.bf16.mxu0 0
        %5116 = vmatmul.mubr.bf16.gmra.mxu0 %v4919
        %v5117 = vpop.f32.mrf.mxu0
        %v5118 = vadd.f32 0.0, %v5117
        %v5119 = vpop.f32.mrf.mxu0
        %v5120 = vpop.f32.mrf.mxu0
        %v5121 = vadd.f32 0.0, %v5120
        %v5122 = vpop.f32.mrf.mxu0
        %5123 = vmatprep.mubr.bf16.mxu0 0
        %5124 = vmatmul.mubr.bf16.gmra.mxu0 %v4920
        %v5125 = vpop.f32.mrf.mxu0
        %v5126 = vadd.f32 0.0, %v5125
        %v5127 = vpop.f32.mrf.mxu0
        %v5128 = vpop.f32.mrf.mxu0
        %v5129 = vadd.f32 0.0, %v5128
        %v5130 = vpop.f32.mrf.mxu0
        %5131 = vmatprep.mubr.bf16.mxu0 0
        %5132 = vmatmul.mubr.bf16.gmra.mxu0 %v4921
        %v5133 = vpop.f32.mrf.mxu0
        %v5134 = vadd.f32 0.0, %v5133
        %v5135 = vpop.f32.mrf.mxu0
        %v5136 = vpop.f32.mrf.mxu0
        %v5137 = vadd.f32 0.0, %v5136
        %v5138 = vpop.f32.mrf.mxu0
        %5139 = vmatprep.mubr.bf16.mxu0 0
        %5140 = vmatmul.mubr.bf16.gmra.mxu0 %v4922
        %v5141 = vpop.f32.mrf.mxu0
        %v5142 = vadd.f32 0.0, %v5141
        %v5143 = vpop.f32.mrf.mxu0
        %v5144 = vpop.f32.mrf.mxu0
        %v5145 = vadd.f32 0.0, %v5144
        %v5146 = vpop.f32.mrf.mxu0
        %5147 = vdwg.mxu0
        %v5148 = vadd.f32 %v4442, %v5022
        %v5149 = vadd.f32 %v4443, %v5025
        %v5150 = vadd.f32 %v4444, %v5030
        %v5151 = vadd.f32 %v4445, %v5033
        %v5152 = vadd.f32 %v4446, %v5038
        %v5153 = vadd.f32 %v4447, %v5041
        %v5154 = vadd.f32 %v4448, %v5046
        %v5155 = vadd.f32 %v4449, %v5049
        %v5156 = vadd.f32 %v4450, %v5054
        %v5157 = vadd.f32 %v4451, %v5057
        %v5158 = vadd.f32 %v4452, %v5062
        %v5159 = vadd.f32 %v4453, %v5065
        %v5160 = vadd.f32 %v4454, %v5070
        %v5161 = vadd.f32 %v4455, %v5073
        %v5162 = vadd.f32 %v4456, %v5078
        %v5163 = vadd.f32 %v4457, %v5081
        %v5164 = vadd.f32 %v4458, %v5086
        %v5165 = vadd.f32 %v4459, %v5089
        %v5166 = vadd.f32 %v4460, %v5094
        %v5167 = vadd.f32 %v4461, %v5097
        %v5168 = vadd.f32 %v4462, %v5102
        %v5169 = vadd.f32 %v4463, %v5105
        %v5170 = vadd.f32 %v4464, %v5110
        %v5171 = vadd.f32 %v4465, %v5113
        %v5172 = vadd.f32 %v4466, %v5118
        %v5173 = vadd.f32 %v4467, %v5121
        %v5174 = vadd.f32 %v4468, %v5126
        %v5175 = vadd.f32 %v4469, %v5129
        %v5176 = vadd.f32 %v4470, %v5134
        %v5177 = vadd.f32 %v4471, %v5137
        %v5178 = vadd.f32 %v4472, %v5142
        %v5179 = vadd.f32 %v4473, %v5145
        %5180 = vst [vmem:[#allocation2] sm:$0xff] %v5148
        %5181 = vst [vmem:[#allocation2 + $0x8] sm:$0xff] %v5149
        %5182 = vst [vmem:[#allocation2 + $0x10] sm:$0xff] %v5150
        %5183 = vst [vmem:[#allocation2 + $0x18] sm:$0xff] %v5151
        %5184 = vst [vmem:[#allocation2 + $0x20] sm:$0xff] %v5152
        %5185 = vst [vmem:[#allocation2 + $0x28] sm:$0xff] %v5153
        %5186 = vst [vmem:[#allocation2 + $0x30] sm:$0xff] %v5154
        %5187 = vst [vmem:[#allocation2 + $0x38] sm:$0xff] %v5155
        %5188 = vst [vmem:[#allocation2 + $0x40] sm:$0xff] %v5156
        %5189 = vst [vmem:[#allocation2 + $0x48] sm:$0xff] %v5157
        %5190 = vst [vmem:[#allocation2 + $0x50] sm:$0xff] %v5158
        %5191 = vst [vmem:[#allocation2 + $0x58] sm:$0xff] %v5159
        %5192 = vst [vmem:[#allocation2 + $0x60] sm:$0xff] %v5160
        %5193 = vst [vmem:[#allocation2 + $0x68] sm:$0xff] %v5161
        %5194 = vst [vmem:[#allocation2 + $0x70] sm:$0xff] %v5162
        %5195 = vst [vmem:[#allocation2 + $0x78] sm:$0xff] %v5163
        %5196 = vst [vmem:[#allocation2 + $0x80] sm:$0xff] %v5164
        %5197 = vst [vmem:[#allocation2 + $0x88] sm:$0xff] %v5165
        %5198 = vst [vmem:[#allocation2 + $0x90] sm:$0xff] %v5166
        %5199 = vst [vmem:[#allocation2 + $0x98] sm:$0xff] %v5167
        %5200 = vst [vmem:[#allocation2 + $0xa0] sm:$0xff] %v5168
        %5201 = vst [vmem:[#allocation2 + $0xa8] sm:$0xff] %v5169
        %5202 = vst [vmem:[#allocation2 + $0xb0] sm:$0xff] %v5170
        %5203 = vst [vmem:[#allocation2 + $0xb8] sm:$0xff] %v5171
        %5204 = vst [vmem:[#allocation2 + $0xc0] sm:$0xff] %v5172
        %5205 = vst [vmem:[#allocation2 + $0xc8] sm:$0xff] %v5173
        %5206 = vst [vmem:[#allocation2 + $0xd0] sm:$0xff] %v5174
        %5207 = vst [vmem:[#allocation2 + $0xd8] sm:$0xff] %v5175
        %5208 = vst [vmem:[#allocation2 + $0xe0] sm:$0xff] %v5176
        %5209 = vst [vmem:[#allocation2 + $0xe8] sm:$0xff] %v5177
        %5210 = vst [vmem:[#allocation2 + $0xf0] sm:$0xff] %v5178
        %5211 = vst [vmem:[#allocation2 + $0xf8] sm:$0xff] %v5179
        %v5212 = vld [vmem:[%s3943] sm:$0xe]
        %v5213 = vld [vmem:[%s3943 + $0x4] sm:$0xf]
        %v5214 = vld [vmem:[%s3943 + $0x8] sm:$0x1]
        %v5215 = vld [vmem:[%s3943 + $0xc] sm:$0xe]
        %v5216 = vld [vmem:[%s3943 + $0x10] sm:$0xf]
        %v5217 = vld [vmem:[%s3943 + $0x14] sm:$0x1]
        %v5218 = vld [vmem:[%s3943 + $0x18] sm:$0xe]
        %v5219 = vld [vmem:[%s3943 + $0x1c] sm:$0xf]
        %v5220 = vld [vmem:[%s3943 + $0x20] sm:$0x1]
        %v5221 = vld [vmem:[%s3943 + $0x24] sm:$0xe]
        %v5222 = vld [vmem:[%s3943 + $0x28] sm:$0xf]
        %v5223 = vld [vmem:[%s3943 + $0x2c] sm:$0x1]
        %v5224 = vld [vmem:[%s3943 + $0x30] sm:$0xe]
        %v5225 = vld [vmem:[%s3943 + $0x34] sm:$0xf]
        %v5226 = vld [vmem:[%s3943 + $0x38] sm:$0x1]
        %v5227 = vld [vmem:[%s3943 + $0x3c] sm:$0xe]
        %v5228 = vld [vmem:[%s3943 + $0x40] sm:$0xf]
        %v5229 = vld [vmem:[%s3943 + $0x44] sm:$0x1]
        %v5230 = vld [vmem:[%s3943 + $0x48] sm:$0xe]
        %v5231 = vld [vmem:[%s3943 + $0x4c] sm:$0xf]
        %v5232 = vld [vmem:[%s3943 + $0x50] sm:$0x1]
        %v5233 = vld [vmem:[%s3943 + $0x54] sm:$0xe]
        %v5234 = vld [vmem:[%s3943 + $0x58] sm:$0xf]
        %v5235 = vld [vmem:[%s3943 + $0x5c] sm:$0x1]
        %v5236 = vld [vmem:[%s3943 + $0x60] sm:$0xe]
        %v5237 = vld [vmem:[%s3943 + $0x64] sm:$0xf]
        %v5238 = vld [vmem:[%s3943 + $0x68] sm:$0x1]
        %v5239 = vld [vmem:[%s3943 + $0x6c] sm:$0xe]
        %v5240 = vld [vmem:[%s3943 + $0x70] sm:$0xf]
        %v5241 = vld [vmem:[%s3943 + $0x74] sm:$0x1]
        %v5242 = vld [vmem:[%s3943 + $0x78] sm:$0xe]
        %v5243 = vld [vmem:[%s3943 + $0x7c] sm:$0xf]
        %v5244 = vld [vmem:[%s3943 + $0x80] sm:$0x1]
        %v5245 = vld [vmem:[%s3943 + $0x84] sm:$0xe]
        %v5246 = vld [vmem:[%s3943 + $0x88] sm:$0xf]
        %v5247 = vld [vmem:[%s3943 + $0x8c] sm:$0x1]
        %v5248 = vld [vmem:[%s3943 + $0x90] sm:$0xe]
        %v5249 = vld [vmem:[%s3943 + $0x94] sm:$0xf]
        %v5250 = vld [vmem:[%s3943 + $0x98] sm:$0x1]
        %v5251 = vld [vmem:[%s3943 + $0x9c] sm:$0xe]
        %v5252 = vld [vmem:[%s3943 + $0xa0] sm:$0xf]
        %v5253 = vld [vmem:[%s3943 + $0xa4] sm:$0x1]
        %v5254 = vld [vmem:[%s3943 + $0xa8] sm:$0xe]
        %v5255 = vld [vmem:[%s3943 + $0xac] sm:$0xf]
        %v5256 = vld [vmem:[%s3943 + $0xb0] sm:$0x1]
        %v5257 = vld [vmem:[%s3943 + $0xb4] sm:$0xe]
        %v5258 = vld [vmem:[%s3943 + $0xb8] sm:$0xf]
        %v5259 = vld [vmem:[%s3943 + $0xbc] sm:$0x1]
        %v5260 = vld [vmem:[#allocation2] sm:$0xff]
        %v5261 = vld [vmem:[#allocation2 + $0x8] sm:$0xff]
        %v5262 = vld [vmem:[#allocation2 + $0x10] sm:$0xff]
        %v5263 = vld [vmem:[#allocation2 + $0x18] sm:$0xff]
        %v5264 = vld [vmem:[#allocation2 + $0x20] sm:$0xff]
        %v5265 = vld [vmem:[#allocation2 + $0x28] sm:$0xff]
        %v5266 = vld [vmem:[#allocation2 + $0x30] sm:$0xff]
        %v5267 = vld [vmem:[#allocation2 + $0x38] sm:$0xff]
        %v5268 = vld [vmem:[#allocation2 + $0x40] sm:$0xff]
        %v5269 = vld [vmem:[#allocation2 + $0x48] sm:$0xff]
        %v5270 = vld [vmem:[#allocation2 + $0x50] sm:$0xff]
        %v5271 = vld [vmem:[#allocation2 + $0x58] sm:$0xff]
        %v5272 = vld [vmem:[#allocation2 + $0x60] sm:$0xff]
        %v5273 = vld [vmem:[#allocation2 + $0x68] sm:$0xff]
        %v5274 = vld [vmem:[#allocation2 + $0x70] sm:$0xff]
        %v5275 = vld [vmem:[#allocation2 + $0x78] sm:$0xff]
        %v5276 = vld [vmem:[#allocation2 + $0x80] sm:$0xff]
        %v5277 = vld [vmem:[#allocation2 + $0x88] sm:$0xff]
        %v5278 = vld [vmem:[#allocation2 + $0x90] sm:$0xff]
        %v5279 = vld [vmem:[#allocation2 + $0x98] sm:$0xff]
        %v5280 = vld [vmem:[#allocation2 + $0xa0] sm:$0xff]
        %v5281 = vld [vmem:[#allocation2 + $0xa8] sm:$0xff]
        %v5282 = vld [vmem:[#allocation2 + $0xb0] sm:$0xff]
        %v5283 = vld [vmem:[#allocation2 + $0xb8] sm:$0xff]
        %v5284 = vld [vmem:[#allocation2 + $0xc0] sm:$0xff]
        %v5285 = vld [vmem:[#allocation2 + $0xc8] sm:$0xff]
        %v5286 = vld [vmem:[#allocation2 + $0xd0] sm:$0xff]
        %v5287 = vld [vmem:[#allocation2 + $0xd8] sm:$0xff]
        %v5288 = vld [vmem:[#allocation2 + $0xe0] sm:$0xff]
        %v5289 = vld [vmem:[#allocation2 + $0xe8] sm:$0xff]
        %v5290 = vld [vmem:[#allocation2 + $0xf0] sm:$0xff]
        %v5291 = vld [vmem:[#allocation2 + $0xf8] sm:$0xff]
        %v5340 = vrot.slane %v5212, 5
        %v5341 = vrot.slane %v5340, 4
        %v5342 = vrot.slane %v5213, 5
        %v5343 = vsel %vm1613, %v5341, %v5342
        %v5344 = vrot.slane %v5342, 4
        %v5345 = vrot.slane %v5214, 5
        %v5346 = vsel %vm1613, %v5344, %v5345
        %v5347 = vrot.slane %v5215, 5
        %v5348 = vrot.slane %v5347, 4
        %v5349 = vrot.slane %v5216, 5
        %v5350 = vsel %vm1613, %v5348, %v5349
        %v5351 = vrot.slane %v5349, 4
        %v5352 = vrot.slane %v5217, 5
        %v5353 = vsel %vm1613, %v5351, %v5352
        %v5354 = vrot.slane %v5218, 5
        %v5355 = vrot.slane %v5354, 4
        %v5356 = vrot.slane %v5219, 5
        %v5357 = vsel %vm1613, %v5355, %v5356
        %v5358 = vrot.slane %v5356, 4
        %v5359 = vrot.slane %v5220, 5
        %v5360 = vsel %vm1613, %v5358, %v5359
        %v5361 = vrot.slane %v5221, 5
        %v5362 = vrot.slane %v5361, 4
        %v5363 = vrot.slane %v5222, 5
        %v5364 = vsel %vm1613, %v5362, %v5363
        %v5365 = vrot.slane %v5363, 4
        %v5366 = vrot.slane %v5223, 5
        %v5367 = vsel %vm1613, %v5365, %v5366
        %v5368 = vrot.slane %v5224, 5
        %v5369 = vrot.slane %v5368, 4
        %v5370 = vrot.slane %v5225, 5
        %v5371 = vsel %vm1613, %v5369, %v5370
        %v5372 = vrot.slane %v5370, 4
        %v5373 = vrot.slane %v5226, 5
        %v5374 = vsel %vm1613, %v5372, %v5373
        %v5375 = vrot.slane %v5227, 5
        %v5376 = vrot.slane %v5375, 4
        %v5377 = vrot.slane %v5228, 5
        %v5378 = vsel %vm1613, %v5376, %v5377
        %v5379 = vrot.slane %v5377, 4
        %v5380 = vrot.slane %v5229, 5
        %v5381 = vsel %vm1613, %v5379, %v5380
        %v5382 = vrot.slane %v5230, 5
        %v5383 = vrot.slane %v5382, 4
        %v5384 = vrot.slane %v5231, 5
        %v5385 = vsel %vm1613, %v5383, %v5384
        %v5386 = vrot.slane %v5384, 4
        %v5387 = vrot.slane %v5232, 5
        %v5388 = vsel %vm1613, %v5386, %v5387
        %v5389 = vrot.slane %v5233, 5
        %v5390 = vrot.slane %v5389, 4
        %v5391 = vrot.slane %v5234, 5
        %v5392 = vsel %vm1613, %v5390, %v5391
        %v5393 = vrot.slane %v5391, 4
        %v5394 = vrot.slane %v5235, 5
        %v5395 = vsel %vm1613, %v5393, %v5394
        %v5396 = vrot.slane %v5236, 5
        %v5397 = vrot.slane %v5396, 4
        %v5398 = vrot.slane %v5237, 5
        %v5399 = vsel %vm1613, %v5397, %v5398
        %v5400 = vrot.slane %v5398, 4
        %v5401 = vrot.slane %v5238, 5
        %v5402 = vsel %vm1613, %v5400, %v5401
        %v5403 = vrot.slane %v5239, 5
        %v5404 = vrot.slane %v5403, 4
        %v5405 = vrot.slane %v5240, 5
        %v5406 = vsel %vm1613, %v5404, %v5405
        %v5407 = vrot.slane %v5405, 4
        %v5408 = vrot.slane %v5241, 5
        %v5409 = vsel %vm1613, %v5407, %v5408
        %v5410 = vrot.slane %v5242, 5
        %v5411 = vrot.slane %v5410, 4
        %v5412 = vrot.slane %v5243, 5
        %v5413 = vsel %vm1613, %v5411, %v5412
        %v5414 = vrot.slane %v5412, 4
        %v5415 = vrot.slane %v5244, 5
        %v5416 = vsel %vm1613, %v5414, %v5415
        %v5417 = vrot.slane %v5245, 5
        %v5418 = vrot.slane %v5417, 4
        %v5419 = vrot.slane %v5246, 5
        %v5420 = vsel %vm1613, %v5418, %v5419
        %v5421 = vrot.slane %v5419, 4
        %v5422 = vrot.slane %v5247, 5
        %v5423 = vsel %vm1613, %v5421, %v5422
        %v5424 = vrot.slane %v5248, 5
        %v5425 = vrot.slane %v5424, 4
        %v5426 = vrot.slane %v5249, 5
        %v5427 = vsel %vm1613, %v5425, %v5426
        %v5428 = vrot.slane %v5426, 4
        %v5429 = vrot.slane %v5250, 5
        %v5430 = vsel %vm1613, %v5428, %v5429
        %v5431 = vrot.slane %v5251, 5
        %v5432 = vrot.slane %v5431, 4
        %v5433 = vrot.slane %v5252, 5
        %v5434 = vsel %vm1613, %v5432, %v5433
        %v5435 = vrot.slane %v5433, 4
        %v5436 = vrot.slane %v5253, 5
        %v5437 = vsel %vm1613, %v5435, %v5436
        %v5438 = vrot.slane %v5254, 5
        %v5439 = vrot.slane %v5438, 4
        %v5440 = vrot.slane %v5255, 5
        %v5441 = vsel %vm1613, %v5439, %v5440
        %v5442 = vrot.slane %v5440, 4
        %v5443 = vrot.slane %v5256, 5
        %v5444 = vsel %vm1613, %v5442, %v5443
        %v5445 = vrot.slane %v5257, 5
        %v5446 = vrot.slane %v5445, 4
        %v5447 = vrot.slane %v5258, 5
        %v5448 = vsel %vm1613, %v5446, %v5447
        %v5449 = vrot.slane %v5447, 4
        %v5450 = vrot.slane %v5259, 5
        %v5451 = vsel %vm1613, %v5449, %v5450
        %s5452 = scalar_lea.vmem %s1, 512
        %v5453 = vld [vmem:[%s5452] sm:$0xf]
        %v5454 = vld [vmem:[%s5452 + $0x4] sm:$0xf]
        %v5455 = vld [vmem:[%s5452 + $0x8] sm:$0xf]
        %v5456 = vld [vmem:[%s5452 + $0xc] sm:$0xf]
        %v5457 = vld [vmem:[%s5452 + $0x10] sm:$0xf]
        %v5458 = vld [vmem:[%s5452 + $0x14] sm:$0xf]
        %v5459 = vld [vmem:[%s5452 + $0x18] sm:$0xf]
        %v5460 = vld [vmem:[%s5452 + $0x1c] sm:$0xf]
        %v5461 = vld [vmem:[%s5452 + $0x20] sm:$0xf]
        %v5462 = vld [vmem:[%s5452 + $0x24] sm:$0xf]
        %v5463 = vld [vmem:[%s5452 + $0x28] sm:$0xf]
        %v5464 = vld [vmem:[%s5452 + $0x2c] sm:$0xf]
        %v5465 = vld [vmem:[%s5452 + $0x30] sm:$0xf]
        %v5466 = vld [vmem:[%s5452 + $0x34] sm:$0xf]
        %v5467 = vld [vmem:[%s5452 + $0x38] sm:$0xf]
        %v5468 = vld [vmem:[%s5452 + $0x3c] sm:$0xf]
        %v5469 = vunpack.c.l.b16 %v5343
        %v5470 = vunpack.c.l.b16 %v5346
        %v5471 = vunpack.c.l.b16 %v5350
        %v5472 = vunpack.c.l.b16 %v5353
        %v5473 = vunpack.c.l.b16 %v5357
        %v5474 = vunpack.c.l.b16 %v5360
        %v5475 = vunpack.c.l.b16 %v5364
        %v5476 = vunpack.c.l.b16 %v5367
        %v5477 = vunpack.c.l.b16 %v5371
        %v5478 = vunpack.c.l.b16 %v5374
        %v5479 = vunpack.c.l.b16 %v5378
        %v5480 = vunpack.c.l.b16 %v5381
        %v5481 = vunpack.c.l.b16 %v5385
        %v5482 = vunpack.c.l.b16 %v5388
        %v5483 = vunpack.c.l.b16 %v5392
        %v5484 = vunpack.c.l.b16 %v5395
        %v5485 = vunpack.c.l.b16 %v5399
        %v5486 = vunpack.c.l.b16 %v5402
        %v5487 = vunpack.c.l.b16 %v5406
        %v5488 = vunpack.c.l.b16 %v5409
        %v5489 = vunpack.c.l.b16 %v5413
        %v5490 = vunpack.c.l.b16 %v5416
        %v5491 = vunpack.c.l.b16 %v5420
        %v5492 = vunpack.c.l.b16 %v5423
        %v5493 = vunpack.c.l.b16 %v5427
        %v5494 = vunpack.c.l.b16 %v5430
        %v5495 = vunpack.c.l.b16 %v5434
        %v5496 = vunpack.c.l.b16 %v5437
        %v5497 = vunpack.c.l.b16 %v5441
        %v5498 = vunpack.c.l.b16 %v5444
        %v5499 = vunpack.c.l.b16 %v5448
        %v5500 = vunpack.c.l.b16 %v5451
        %v5501 = vpack.c.b16 %v5470, %v5469
        %v5502 = vpack.c.b16 %v5472, %v5471
        %v5503 = vpack.c.b16 %v5474, %v5473
        %v5504 = vpack.c.b16 %v5476, %v5475
        %v5505 = vpack.c.b16 %v5478, %v5477
        %v5506 = vpack.c.b16 %v5480, %v5479
        %v5507 = vpack.c.b16 %v5482, %v5481
        %v5508 = vpack.c.b16 %v5484, %v5483
        %v5509 = vpack.c.b16 %v5486, %v5485
        %v5510 = vpack.c.b16 %v5488, %v5487
        %v5511 = vpack.c.b16 %v5490, %v5489
        %v5512 = vpack.c.b16 %v5492, %v5491
        %v5513 = vpack.c.b16 %v5494, %v5493
        %v5514 = vpack.c.b16 %v5496, %v5495
        %v5515 = vpack.c.b16 %v5498, %v5497
        %v5516 = vpack.c.b16 %v5500, %v5499
        %v5549 = vunpack.c.l.b16 %v5453
        %v5550 = vunpack.c.l.b16 %v5454
        %v5551 = vunpack.c.l.b16 %v5455
        %v5552 = vunpack.c.l.b16 %v5456
        %v5553 = vunpack.c.l.b16 %v5457
        %v5554 = vunpack.c.l.b16 %v5458
        %v5555 = vunpack.c.l.b16 %v5459
        %v5556 = vunpack.c.l.b16 %v5460
        %v5557 = vunpack.c.l.b16 %v5461
        %v5558 = vunpack.c.l.b16 %v5462
        %v5559 = vunpack.c.l.b16 %v5463
        %v5560 = vunpack.c.l.b16 %v5464
        %v5561 = vunpack.c.l.b16 %v5465
        %v5562 = vunpack.c.l.b16 %v5466
        %v5563 = vunpack.c.l.b16 %v5467
        %v5564 = vunpack.c.l.b16 %v5468
        %v5565 = vpack.c.b16 %v5550, %v5549
        %v5566 = vpack.c.b16 %v5552, %v5551
        %v5567 = vpack.c.b16 %v5554, %v5553
        %v5568 = vpack.c.b16 %v5556, %v5555
        %v5569 = vpack.c.b16 %v5558, %v5557
        %v5570 = vpack.c.b16 %v5560, %v5559
        %v5571 = vpack.c.b16 %v5562, %v5561
        %v5572 = vpack.c.b16 %v5564, %v5563
        %5581 = vmatprep.subr.bf16.mxu0 0
        %5582 = vmatpush1.bf16.msra.mxu0 %v5572
        %5583 = vmatprep.subr.bf16.mxu0 0
        %5584 = vmatpush1.bf16.msra.mxu0 %v5571
        %5585 = vmatprep.subr.bf16.mxu0 0
        %5586 = vmatpush1.bf16.msra.mxu0 %v5570
        %5587 = vmatprep.subr.bf16.mxu0 0
        %5588 = vmatpush1.bf16.msra.mxu0 %v5569
        %5589 = vmatprep.subr.bf16.mxu0 0
        %5590 = vmatpush1.bf16.msra.mxu0 %v5568
        %5591 = vmatprep.subr.bf16.mxu0 0
        %5592 = vmatpush1.bf16.msra.mxu0 %v5567
        %5593 = vmatprep.subr.bf16.mxu0 0
        %5594 = vmatpush1.bf16.msra.mxu0 %v5566
        %5595 = vmatprep.subr.bf16.mxu0 0
        %5596 = vmatpush1.bf16.msra.mxu0 %v5565
        %5597 = vmatprep.subr.bf16.mxu0 0
        %5598 = vmatpush2.bf16.msra.mxu0 0
        %5599 = vmatprep.subr.bf16.mxu0 0
        %5600 = vmatpush2.bf16.msra.mxu0 0
        %5601 = vmatprep.subr.bf16.mxu0 0
        %5602 = vmatpush2.bf16.msra.mxu0 0
        %5603 = vmatprep.subr.bf16.mxu0 0
        %5604 = vmatpush2.bf16.msra.mxu0 0
        %5605 = vmatprep.subr.bf16.mxu0 0
        %5606 = vmatpush2.bf16.msra.mxu0 0
        %5607 = vmatprep.subr.bf16.mxu0 0
        %5608 = vmatpush2.bf16.msra.mxu0 0
        %5609 = vmatprep.subr.bf16.mxu0 0
        %5610 = vmatpush2.bf16.msra.mxu0 0
        %5611 = vmatprep.subr.bf16.mxu0 0
        %5612 = vmatpush2.bf16.msra.mxu0 0
        %5613 = vmatprep.mubr.bf16.mxu0 0
        %5614 = vmatmul.mubr.bf16.gmra.mxu0 %v5501
        %v5615 = vpop.f32.mrf.mxu0
        %v5616 = vadd.f32 0.0, %v5615
        %v5617 = vpop.f32.mrf.mxu0
        %v5618 = vpop.f32.mrf.mxu0
        %v5619 = vadd.f32 0.0, %v5618
        %v5620 = vpop.f32.mrf.mxu0
        %5621 = vmatprep.mubr.bf16.mxu0 0
        %5622 = vmatmul.mubr.bf16.gmra.mxu0 %v5502
        %v5623 = vpop.f32.mrf.mxu0
        %v5624 = vadd.f32 0.0, %v5623
        %v5625 = vpop.f32.mrf.mxu0
        %v5626 = vpop.f32.mrf.mxu0
        %v5627 = vadd.f32 0.0, %v5626
        %v5628 = vpop.f32.mrf.mxu0
        %5629 = vmatprep.mubr.bf16.mxu0 0
        %5630 = vmatmul.mubr.bf16.gmra.mxu0 %v5503
        %v5631 = vpop.f32.mrf.mxu0
        %v5632 = vadd.f32 0.0, %v5631
        %v5633 = vpop.f32.mrf.mxu0
        %v5634 = vpop.f32.mrf.mxu0
        %v5635 = vadd.f32 0.0, %v5634
        %v5636 = vpop.f32.mrf.mxu0
        %5637 = vmatprep.mubr.bf16.mxu0 0
        %5638 = vmatmul.mubr.bf16.gmra.mxu0 %v5504
        %v5639 = vpop.f32.mrf.mxu0
        %v5640 = vadd.f32 0.0, %v5639
        %v5641 = vpop.f32.mrf.mxu0
        %v5642 = vpop.f32.mrf.mxu0
        %v5643 = vadd.f32 0.0, %v5642
        %v5644 = vpop.f32.mrf.mxu0
        %5645 = vmatprep.mubr.bf16.mxu0 0
        %5646 = vmatmul.mubr.bf16.gmra.mxu0 %v5505
        %v5647 = vpop.f32.mrf.mxu0
        %v5648 = vadd.f32 0.0, %v5647
        %v5649 = vpop.f32.mrf.mxu0
        %v5650 = vpop.f32.mrf.mxu0
        %v5651 = vadd.f32 0.0, %v5650
        %v5652 = vpop.f32.mrf.mxu0
        %5653 = vmatprep.mubr.bf16.mxu0 0
        %5654 = vmatmul.mubr.bf16.gmra.mxu0 %v5506
        %v5655 = vpop.f32.mrf.mxu0
        %v5656 = vadd.f32 0.0, %v5655
        %v5657 = vpop.f32.mrf.mxu0
        %v5658 = vpop.f32.mrf.mxu0
        %v5659 = vadd.f32 0.0, %v5658
        %v5660 = vpop.f32.mrf.mxu0
        %5661 = vmatprep.mubr.bf16.mxu0 0
        %5662 = vmatmul.mubr.bf16.gmra.mxu0 %v5507
        %v5663 = vpop.f32.mrf.mxu0
        %v5664 = vadd.f32 0.0, %v5663
        %v5665 = vpop.f32.mrf.mxu0
        %v5666 = vpop.f32.mrf.mxu0
        %v5667 = vadd.f32 0.0, %v5666
        %v5668 = vpop.f32.mrf.mxu0
        %5669 = vmatprep.mubr.bf16.mxu0 0
        %5670 = vmatmul.mubr.bf16.gmra.mxu0 %v5508
        %v5671 = vpop.f32.mrf.mxu0
        %v5672 = vadd.f32 0.0, %v5671
        %v5673 = vpop.f32.mrf.mxu0
        %v5674 = vpop.f32.mrf.mxu0
        %v5675 = vadd.f32 0.0, %v5674
        %v5676 = vpop.f32.mrf.mxu0
        %5677 = vmatprep.mubr.bf16.mxu0 0
        %5678 = vmatmul.mubr.bf16.gmra.mxu0 %v5509
        %v5679 = vpop.f32.mrf.mxu0
        %v5680 = vadd.f32 0.0, %v5679
        %v5681 = vpop.f32.mrf.mxu0
        %v5682 = vpop.f32.mrf.mxu0
        %v5683 = vadd.f32 0.0, %v5682
        %v5684 = vpop.f32.mrf.mxu0
        %5685 = vmatprep.mubr.bf16.mxu0 0
        %5686 = vmatmul.mubr.bf16.gmra.mxu0 %v5510
        %v5687 = vpop.f32.mrf.mxu0
        %v5688 = vadd.f32 0.0, %v5687
        %v5689 = vpop.f32.mrf.mxu0
        %v5690 = vpop.f32.mrf.mxu0
        %v5691 = vadd.f32 0.0, %v5690
        %v5692 = vpop.f32.mrf.mxu0
        %5693 = vmatprep.mubr.bf16.mxu0 0
        %5694 = vmatmul.mubr.bf16.gmra.mxu0 %v5511
        %v5695 = vpop.f32.mrf.mxu0
        %v5696 = vadd.f32 0.0, %v5695
        %v5697 = vpop.f32.mrf.mxu0
        %v5698 = vpop.f32.mrf.mxu0
        %v5699 = vadd.f32 0.0, %v5698
        %v5700 = vpop.f32.mrf.mxu0
        %5701 = vmatprep.mubr.bf16.mxu0 0
        %5702 = vmatmul.mubr.bf16.gmra.mxu0 %v5512
        %v5703 = vpop.f32.mrf.mxu0
        %v5704 = vadd.f32 0.0, %v5703
        %v5705 = vpop.f32.mrf.mxu0
        %v5706 = vpop.f32.mrf.mxu0
        %v5707 = vadd.f32 0.0, %v5706
        %v5708 = vpop.f32.mrf.mxu0
        %5709 = vmatprep.mubr.bf16.mxu0 0
        %5710 = vmatmul.mubr.bf16.gmra.mxu0 %v5513
        %v5711 = vpop.f32.mrf.mxu0
        %v5712 = vadd.f32 0.0, %v5711
        %v5713 = vpop.f32.mrf.mxu0
        %v5714 = vpop.f32.mrf.mxu0
        %v5715 = vadd.f32 0.0, %v5714
        %v5716 = vpop.f32.mrf.mxu0
        %5717 = vmatprep.mubr.bf16.mxu0 0
        %5718 = vmatmul.mubr.bf16.gmra.mxu0 %v5514
        %v5719 = vpop.f32.mrf.mxu0
        %v5720 = vadd.f32 0.0, %v5719
        %v5721 = vpop.f32.mrf.mxu0
        %v5722 = vpop.f32.mrf.mxu0
        %v5723 = vadd.f32 0.0, %v5722
        %v5724 = vpop.f32.mrf.mxu0
        %5725 = vmatprep.mubr.bf16.mxu0 0
        %5726 = vmatmul.mubr.bf16.gmra.mxu0 %v5515
        %v5727 = vpop.f32.mrf.mxu0
        %v5728 = vadd.f32 0.0, %v5727
        %v5729 = vpop.f32.mrf.mxu0
        %v5730 = vpop.f32.mrf.mxu0
        %v5731 = vadd.f32 0.0, %v5730
        %v5732 = vpop.f32.mrf.mxu0
        %5733 = vmatprep.mubr.bf16.mxu0 0
        %5734 = vmatmul.mubr.bf16.gmra.mxu0 %v5516
        %v5735 = vpop.f32.mrf.mxu0
        %v5736 = vadd.f32 0.0, %v5735
        %v5737 = vpop.f32.mrf.mxu0
        %v5738 = vpop.f32.mrf.mxu0
        %v5739 = vadd.f32 0.0, %v5738
        %v5740 = vpop.f32.mrf.mxu0
        %5741 = vdwg.mxu0
        %v5742 = vadd.f32 %v5260, %v5616
        %v5743 = vadd.f32 %v5261, %v5619
        %v5744 = vadd.f32 %v5262, %v5624
        %v5745 = vadd.f32 %v5263, %v5627
        %v5746 = vadd.f32 %v5264, %v5632
        %v5747 = vadd.f32 %v5265, %v5635
        %v5748 = vadd.f32 %v5266, %v5640
        %v5749 = vadd.f32 %v5267, %v5643
        %v5750 = vadd.f32 %v5268, %v5648
        %v5751 = vadd.f32 %v5269, %v5651
        %v5752 = vadd.f32 %v5270, %v5656
        %v5753 = vadd.f32 %v5271, %v5659
        %v5754 = vadd.f32 %v5272, %v5664
        %v5755 = vadd.f32 %v5273, %v5667
        %v5756 = vadd.f32 %v5274, %v5672
        %v5757 = vadd.f32 %v5275, %v5675
        %v5758 = vadd.f32 %v5276, %v5680
        %v5759 = vadd.f32 %v5277, %v5683
        %v5760 = vadd.f32 %v5278, %v5688
        %v5761 = vadd.f32 %v5279, %v5691
        %v5762 = vadd.f32 %v5280, %v5696
        %v5763 = vadd.f32 %v5281, %v5699
        %v5764 = vadd.f32 %v5282, %v5704
        %v5765 = vadd.f32 %v5283, %v5707
        %v5766 = vadd.f32 %v5284, %v5712
        %v5767 = vadd.f32 %v5285, %v5715
        %v5768 = vadd.f32 %v5286, %v5720
        %v5769 = vadd.f32 %v5287, %v5723
        %v5770 = vadd.f32 %v5288, %v5728
        %v5771 = vadd.f32 %v5289, %v5731
        %v5772 = vadd.f32 %v5290, %v5736
        %v5773 = vadd.f32 %v5291, %v5739
        %5774 = vst [vmem:[#allocation2] sm:$0xff] %v5742
        %5775 = vst [vmem:[#allocation2 + $0x8] sm:$0xff] %v5743
        %5776 = vst [vmem:[#allocation2 + $0x10] sm:$0xff] %v5744
        %5777 = vst [vmem:[#allocation2 + $0x18] sm:$0xff] %v5745
        %5778 = vst [vmem:[#allocation2 + $0x20] sm:$0xff] %v5746
        %5779 = vst [vmem:[#allocation2 + $0x28] sm:$0xff] %v5747
        %5780 = vst [vmem:[#allocation2 + $0x30] sm:$0xff] %v5748
        %5781 = vst [vmem:[#allocation2 + $0x38] sm:$0xff] %v5749
        %5782 = vst [vmem:[#allocation2 + $0x40] sm:$0xff] %v5750
        %5783 = vst [vmem:[#allocation2 + $0x48] sm:$0xff] %v5751
        %5784 = vst [vmem:[#allocation2 + $0x50] sm:$0xff] %v5752
        %5785 = vst [vmem:[#allocation2 + $0x58] sm:$0xff] %v5753
        %5786 = vst [vmem:[#allocation2 + $0x60] sm:$0xff] %v5754
        %5787 = vst [vmem:[#allocation2 + $0x68] sm:$0xff] %v5755
        %5788 = vst [vmem:[#allocation2 + $0x70] sm:$0xff] %v5756
        %5789 = vst [vmem:[#allocation2 + $0x78] sm:$0xff] %v5757
        %5790 = vst [vmem:[#allocation2 + $0x80] sm:$0xff] %v5758
        %5791 = vst [vmem:[#allocation2 + $0x88] sm:$0xff] %v5759
        %5792 = vst [vmem:[#allocation2 + $0x90] sm:$0xff] %v5760
        %5793 = vst [vmem:[#allocation2 + $0x98] sm:$0xff] %v5761
        %5794 = vst [vmem:[#allocation2 + $0xa0] sm:$0xff] %v5762
        %5795 = vst [vmem:[#allocation2 + $0xa8] sm:$0xff] %v5763
        %5796 = vst [vmem:[#allocation2 + $0xb0] sm:$0xff] %v5764
        %5797 = vst [vmem:[#allocation2 + $0xb8] sm:$0xff] %v5765
        %5798 = vst [vmem:[#allocation2 + $0xc0] sm:$0xff] %v5766
        %5799 = vst [vmem:[#allocation2 + $0xc8] sm:$0xff] %v5767
        %5800 = vst [vmem:[#allocation2 + $0xd0] sm:$0xff] %v5768
        %5801 = vst [vmem:[#allocation2 + $0xd8] sm:$0xff] %v5769
        %5802 = vst [vmem:[#allocation2 + $0xe0] sm:$0xff] %v5770
        %5803 = vst [vmem:[#allocation2 + $0xe8] sm:$0xff] %v5771
        %5804 = vst [vmem:[#allocation2 + $0xf0] sm:$0xff] %v5772
        %5805 = vst [vmem:[#allocation2 + $0xf8] sm:$0xff] %v5773
        %v5806 = vld [vmem:[#allocation2] sm:$0xff]
        %v5807 = vld [vmem:[#allocation2 + $0x8] sm:$0xff]
        %v5808 = vld [vmem:[#allocation2 + $0x10] sm:$0xff]
        %v5809 = vld [vmem:[#allocation2 + $0x18] sm:$0xff]
        %v5810 = vld [vmem:[#allocation2 + $0x20] sm:$0xff]
        %v5811 = vld [vmem:[#allocation2 + $0x28] sm:$0xff]
        %v5812 = vld [vmem:[#allocation2 + $0x30] sm:$0xff]
        %v5813 = vld [vmem:[#allocation2 + $0x38] sm:$0xff]
        %v5814 = vld [vmem:[#allocation2 + $0x40] sm:$0xff]
        %v5815 = vld [vmem:[#allocation2 + $0x48] sm:$0xff]
        %v5816 = vld [vmem:[#allocation2 + $0x50] sm:$0xff]
        %v5817 = vld [vmem:[#allocation2 + $0x58] sm:$0xff]
        %v5818 = vld [vmem:[#allocation2 + $0x60] sm:$0xff]
        %v5819 = vld [vmem:[#allocation2 + $0x68] sm:$0xff]
        %v5820 = vld [vmem:[#allocation2 + $0x70] sm:$0xff]
        %v5821 = vld [vmem:[#allocation2 + $0x78] sm:$0xff]
        %v5822 = vld [vmem:[#allocation2 + $0x80] sm:$0xff]
        %v5823 = vld [vmem:[#allocation2 + $0x88] sm:$0xff]
        %v5824 = vld [vmem:[#allocation2 + $0x90] sm:$0xff]
        %v5825 = vld [vmem:[#allocation2 + $0x98] sm:$0xff]
        %v5826 = vld [vmem:[#allocation2 + $0xa0] sm:$0xff]
        %v5827 = vld [vmem:[#allocation2 + $0xa8] sm:$0xff]
        %v5828 = vld [vmem:[#allocation2 + $0xb0] sm:$0xff]
        %v5829 = vld [vmem:[#allocation2 + $0xb8] sm:$0xff]
        %v5830 = vld [vmem:[#allocation2 + $0xc0] sm:$0xff]
        %v5831 = vld [vmem:[#allocation2 + $0xc8] sm:$0xff]
        %v5832 = vld [vmem:[#allocation2 + $0xd0] sm:$0xff]
        %v5833 = vld [vmem:[#allocation2 + $0xd8] sm:$0xff]
        %v5834 = vld [vmem:[#allocation2 + $0xe0] sm:$0xff]
        %v5835 = vld [vmem:[#allocation2 + $0xe8] sm:$0xff]
        %v5836 = vld [vmem:[#allocation2 + $0xf0] sm:$0xff]
        %v5837 = vld [vmem:[#allocation2 + $0xf8] sm:$0xff]
        %v5838 = vpack.c.bf16 %v5807, %v5806
        %v5839 = vpack.c.bf16 %v5809, %v5808
        %v5840 = vpack.c.bf16 %v5811, %v5810
        %v5841 = vpack.c.bf16 %v5813, %v5812
        %v5842 = vpack.c.bf16 %v5815, %v5814
        %v5843 = vpack.c.bf16 %v5817, %v5816
        %v5844 = vpack.c.bf16 %v5819, %v5818
        %v5845 = vpack.c.bf16 %v5821, %v5820
        %v5846 = vpack.c.bf16 %v5823, %v5822
        %v5847 = vpack.c.bf16 %v5825, %v5824
        %v5848 = vpack.c.bf16 %v5827, %v5826
        %v5849 = vpack.c.bf16 %v5829, %v5828
        %v5850 = vpack.c.bf16 %v5831, %v5830
        %v5851 = vpack.c.bf16 %v5833, %v5832
        %v5852 = vpack.c.bf16 %v5835, %v5834
        %v5853 = vpack.c.bf16 %v5837, %v5836
        %v5870 = vunpack.c.l.b16 %v5838
        %v5871 = vunpack.c.h.b16 %v5838
        %v5872 = vunpack.c.l.b16 %v5839
        %v5873 = vunpack.c.h.b16 %v5839
        %v5874 = vunpack.c.l.b16 %v5840
        %v5875 = vunpack.c.h.b16 %v5840
        %v5876 = vunpack.c.l.b16 %v5841
        %v5877 = vunpack.c.h.b16 %v5841
        %v5878 = vunpack.c.l.b16 %v5842
        %v5879 = vunpack.c.h.b16 %v5842
        %v5880 = vunpack.c.l.b16 %v5843
        %v5881 = vunpack.c.h.b16 %v5843
        %v5882 = vunpack.c.l.b16 %v5844
        %v5883 = vunpack.c.h.b16 %v5844
        %v5884 = vunpack.c.l.b16 %v5845
        %v5885 = vunpack.c.h.b16 %v5845
        %v5886 = vunpack.c.l.b16 %v5846
        %v5887 = vunpack.c.h.b16 %v5846
        %v5888 = vunpack.c.l.b16 %v5847
        %v5889 = vunpack.c.h.b16 %v5847
        %v5890 = vunpack.c.l.b16 %v5848
        %v5891 = vunpack.c.h.b16 %v5848
        %v5892 = vunpack.c.l.b16 %v5849
        %v5893 = vunpack.c.h.b16 %v5849
        %v5894 = vunpack.c.l.b16 %v5850
        %v5895 = vunpack.c.h.b16 %v5850
        %v5896 = vunpack.c.l.b16 %v5851
        %v5897 = vunpack.c.h.b16 %v5851
        %v5898 = vunpack.c.l.b16 %v5852
        %v5899 = vunpack.c.h.b16 %v5852
        %v5900 = vunpack.c.l.b16 %v5853
        %v5901 = vunpack.c.h.b16 %v5853
        %v5902 = vpack.c.b16 %v5870, %v5870
        %v5903 = vpack.c.b16 %v5871, %v5871
        %v5904 = vpack.c.b16 %v5872, %v5872
        %v5905 = vpack.c.b16 %v5873, %v5873
        %v5906 = vpack.c.b16 %v5874, %v5874
        %v5907 = vpack.c.b16 %v5875, %v5875
        %v5908 = vpack.c.b16 %v5876, %v5876
        %v5909 = vpack.c.b16 %v5877, %v5877
        %v5910 = vpack.c.b16 %v5878, %v5878
        %v5911 = vpack.c.b16 %v5879, %v5879
        %v5912 = vpack.c.b16 %v5880, %v5880
        %v5913 = vpack.c.b16 %v5881, %v5881
        %v5914 = vpack.c.b16 %v5882, %v5882
        %v5915 = vpack.c.b16 %v5883, %v5883
        %v5916 = vpack.c.b16 %v5884, %v5884
        %v5917 = vpack.c.b16 %v5885, %v5885
        %v5918 = vpack.c.b16 %v5886, %v5886
        %v5919 = vpack.c.b16 %v5887, %v5887
        %v5920 = vpack.c.b16 %v5888, %v5888
        %v5921 = vpack.c.b16 %v5889, %v5889
        %v5922 = vpack.c.b16 %v5890, %v5890
        %v5923 = vpack.c.b16 %v5891, %v5891
        %v5924 = vpack.c.b16 %v5892, %v5892
        %v5925 = vpack.c.b16 %v5893, %v5893
        %v5926 = vpack.c.b16 %v5894, %v5894
        %v5927 = vpack.c.b16 %v5895, %v5895
        %v5928 = vpack.c.b16 %v5896, %v5896
        %v5929 = vpack.c.b16 %v5897, %v5897
        %v5930 = vpack.c.b16 %v5898, %v5898
        %v5931 = vpack.c.b16 %v5899, %v5899
        %v5932 = vpack.c.b16 %v5900, %v5900
        %v5933 = vpack.c.b16 %v5901, %v5901
        %5966 = vst [vmem:[%s167] sm:$0xf] %v5902
        %5967 = vst [vmem:[%s167 + $0x4] sm:$0xf] %v5903
        %5968 = vst [vmem:[%s167 + $0x8] sm:$0xf] %v5904
        %5969 = vst [vmem:[%s167 + $0xc] sm:$0xf] %v5905
        %5970 = vst [vmem:[%s167 + $0x10] sm:$0xf] %v5906
        %5971 = vst [vmem:[%s167 + $0x14] sm:$0xf] %v5907
        %5972 = vst [vmem:[%s167 + $0x18] sm:$0xf] %v5908
        %5973 = vst [vmem:[%s167 + $0x1c] sm:$0xf] %v5909
        %5974 = vst [vmem:[%s167 + $0x20] sm:$0xf] %v5910
        %5975 = vst [vmem:[%s167 + $0x24] sm:$0xf] %v5911
        %5976 = vst [vmem:[%s167 + $0x28] sm:$0xf] %v5912
        %5977 = vst [vmem:[%s167 + $0x2c] sm:$0xf] %v5913
        %5978 = vst [vmem:[%s167 + $0x30] sm:$0xf] %v5914
        %5979 = vst [vmem:[%s167 + $0x34] sm:$0xf] %v5915
        %5980 = vst [vmem:[%s167 + $0x38] sm:$0xf] %v5916
        %5981 = vst [vmem:[%s167 + $0x3c] sm:$0xf] %v5917
        %5982 = vst [vmem:[%s167 + $0x40] sm:$0xf] %v5918
        %5983 = vst [vmem:[%s167 + $0x44] sm:$0xf] %v5919
        %5984 = vst [vmem:[%s167 + $0x48] sm:$0xf] %v5920
        %5985 = vst [vmem:[%s167 + $0x4c] sm:$0xf] %v5921
        %5986 = vst [vmem:[%s167 + $0x50] sm:$0xf] %v5922
        %5987 = vst [vmem:[%s167 + $0x54] sm:$0xf] %v5923
        %5988 = vst [vmem:[%s167 + $0x58] sm:$0xf] %v5924
        %5989 = vst [vmem:[%s167 + $0x5c] sm:$0xf] %v5925
        %5990 = vst [vmem:[%s167 + $0x60] sm:$0xf] %v5926
        %5991 = vst [vmem:[%s167 + $0x64] sm:$0xf] %v5927
        %5992 = vst [vmem:[%s167 + $0x68] sm:$0xf] %v5928
        %5993 = vst [vmem:[%s167 + $0x6c] sm:$0xf] %v5929
        %5994 = vst [vmem:[%s167 + $0x70] sm:$0xf] %v5930
        %5995 = vst [vmem:[%s167 + $0x74] sm:$0xf] %v5931
        %5996 = vst [vmem:[%s167 + $0x78] sm:$0xf] %v5932
        %5997 = vst [vmem:[%s167 + $0x7c] sm:$0xf] %v5933
        %v5998 = vadd.f32 %v5806, %v5807
        %v5999 = vadd.f32 %v5998, %v5808
        %v6000 = vadd.f32 %v5999, %v5809
        %v6001 = vadd.f32 %v6000, %v5810
        %v6002 = vadd.f32 %v6001, %v5811
        %v6003 = vadd.f32 %v6002, %v5812
        %v6004 = vadd.f32 %v6003, %v5813
        %v6005 = vadd.f32 %v6004, %v5814
        %v6006 = vadd.f32 %v6005, %v5815
        %v6007 = vadd.f32 %v6006, %v5816
        %v6008 = vadd.f32 %v6007, %v5817
        %v6009 = vadd.f32 %v6008, %v5818
        %v6010 = vadd.f32 %v6009, %v5819
        %v6011 = vadd.f32 %v6010, %v5820
        %v6012 = vadd.f32 %v6011, %v5821
        %v6013 = vadd.f32 %v6012, %v5822
        %v6014 = vadd.f32 %v6013, %v5823
        %v6015 = vadd.f32 %v6014, %v5824
        %v6016 = vadd.f32 %v6015, %v5825
        %v6017 = vadd.f32 %v6016, %v5826
        %v6018 = vadd.f32 %v6017, %v5827
        %v6019 = vadd.f32 %v6018, %v5828
        %v6020 = vadd.f32 %v6019, %v5829
        %v6021 = vadd.f32 %v6020, %v5830
        %v6022 = vadd.f32 %v6021, %v5831
        %v6023 = vadd.f32 %v6022, %v5832
        %v6024 = vadd.f32 %v6023, %v5833
        %v6025 = vadd.f32 %v6024, %v5834
        %v6026 = vadd.f32 %v6025, %v5835
        %v6027 = vadd.f32 %v6026, %v5836
        %v6028 = vadd.f32 %v6027, %v5837
        %v6029 = vrot.slane %v6028, 4
        %v6030 = vadd.f32 %v6028, %v6029
        %v6031 = vrot.slane %v6030, 2
        %v6032 = vadd.f32 %v6030, %v6031
        %v6033 = vrot.slane %v6032, 1
        %v6034 = vadd.f32 %v6032, %v6033
        %6035 = vst [vmem:[%s174] sm:$0x1] %v6034
        %v6036 = vmul.f32 %v5806, %v5806
        %v6037 = vmul.f32 %v5807, %v5807
        %v6038 = vmul.f32 %v5808, %v5808
        %v6039 = vmul.f32 %v5809, %v5809
        %v6040 = vmul.f32 %v5810, %v5810
        %v6041 = vmul.f32 %v5811, %v5811
        %v6042 = vmul.f32 %v5812, %v5812
        %v6043 = vmul.f32 %v5813, %v5813
        %v6044 = vmul.f32 %v5814, %v5814
        %v6045 = vmul.f32 %v5815, %v5815
        %v6046 = vmul.f32 %v5816, %v5816
        %v6047 = vmul.f32 %v5817, %v5817
        %v6048 = vmul.f32 %v5818, %v5818
        %v6049 = vmul.f32 %v5819, %v5819
        %v6050 = vmul.f32 %v5820, %v5820
        %v6051 = vmul.f32 %v5821, %v5821
        %v6052 = vmul.f32 %v5822, %v5822
        %v6053 = vmul.f32 %v5823, %v5823
        %v6054 = vmul.f32 %v5824, %v5824
        %v6055 = vmul.f32 %v5825, %v5825
        %v6056 = vmul.f32 %v5826, %v5826
        %v6057 = vmul.f32 %v5827, %v5827
        %v6058 = vmul.f32 %v5828, %v5828
        %v6059 = vmul.f32 %v5829, %v5829
        %v6060 = vmul.f32 %v5830, %v5830
        %v6061 = vmul.f32 %v5831, %v5831
        %v6062 = vmul.f32 %v5832, %v5832
        %v6063 = vmul.f32 %v5833, %v5833
        %v6064 = vmul.f32 %v5834, %v5834
        %v6065 = vmul.f32 %v5835, %v5835
        %v6066 = vmul.f32 %v5836, %v5836
        %v6067 = vmul.f32 %v5837, %v5837
        %v6068 = vadd.f32 %v6036, %v6037
        %v6069 = vadd.f32 %v6068, %v6038
        %v6070 = vadd.f32 %v6069, %v6039
        %v6071 = vadd.f32 %v6070, %v6040
        %v6072 = vadd.f32 %v6071, %v6041
        %v6073 = vadd.f32 %v6072, %v6042
        %v6074 = vadd.f32 %v6073, %v6043
        %v6075 = vadd.f32 %v6074, %v6044
        %v6076 = vadd.f32 %v6075, %v6045
        %v6077 = vadd.f32 %v6076, %v6046
        %v6078 = vadd.f32 %v6077, %v6047
        %v6079 = vadd.f32 %v6078, %v6048
        %v6080 = vadd.f32 %v6079, %v6049
        %v6081 = vadd.f32 %v6080, %v6050
        %v6082 = vadd.f32 %v6081, %v6051
        %v6083 = vadd.f32 %v6082, %v6052
        %v6084 = vadd.f32 %v6083, %v6053
        %v6085 = vadd.f32 %v6084, %v6054
        %v6086 = vadd.f32 %v6085, %v6055
        %v6087 = vadd.f32 %v6086, %v6056
        %v6088 = vadd.f32 %v6087, %v6057
        %v6089 = vadd.f32 %v6088, %v6058
        %v6090 = vadd.f32 %v6089, %v6059
        %v6091 = vadd.f32 %v6090, %v6060
        %v6092 = vadd.f32 %v6091, %v6061
        %v6093 = vadd.f32 %v6092, %v6062
        %v6094 = vadd.f32 %v6093, %v6063
        %v6095 = vadd.f32 %v6094, %v6064
        %v6096 = vadd.f32 %v6095, %v6065
        %v6097 = vadd.f32 %v6096, %v6066
        %v6098 = vadd.f32 %v6097, %v6067
        %v6099 = vrot.slane %v6098, 4
        %v6100 = vadd.f32 %v6098, %v6099
        %v6101 = vrot.slane %v6100, 2
        %v6102 = vadd.f32 %v6100, %v6101
        %v6103 = vrot.slane %v6102, 1
        %v6104 = vadd.f32 %v6102, %v6103
        %6105 = vst [vmem:[%s174 + $0x1] sm:$0x1] %v6104
        %s6106 = sand.u32 %s76, 1
        %s6107 = scalar_lea.sflag [#allocation4], %s6106
        %s6108 = sand.u32 %s76, 1
        %s6109 = smul.addr %s6108, 128
        %s6110 = scalar_lea.vmem [#allocation3], %s6109
        %s6111 = sand.u32 %s102, 1
        %s6112 = scalar_lea.sflag [#allocation6], %s6111
        %s6113 = sand.u32 %s102, 1
        %s6114 = smul.addr %s6113, 8
        %s6115 = scalar_lea.vmem [#allocation5], %s6114
        // Predicated region
        $region29: #{tpu_custom_call.1} parent=27 // pred_check
          %p6116 = pneg %p86
        $region30: #{tpu_custom_call.1} parent=27 // pred_check_branch
          %6118 = sbr.rel (%p6116) target = $region32
        $region31: #{tpu_custom_call.1} parent=27 // pred_region
          %s6120 = ssub.s32 2048, 2048
          %6121 = vsyncadd %s6107, %s6120
          %s6122 = smul.addr %s21, 32
          %s6123 = smul.addr %s6122, 64
          %s6124 = scalar_lea.hbm %s2, %s6123
          %s6125 = sshll.u32 %s6110, 4
          %s6126 = int_to_ptr.vmem [resolvable:$true] %s6125
          %6131 = dma.vmem_to_hbm [thread:$0]  %s6126, 2048, %s6124, %s6107, 64, 64, 4
        $region32: #{tpu_custom_call.1} parent=27 // pred_fallthru
          _
        // Predicated region
        $region33: #{tpu_custom_call.1} parent=27 // pred_check
          %p6132 = pneg %p112
        $region34: #{tpu_custom_call.1} parent=27 // pred_check_branch
          %6134 = sbr.rel (%p6132) target = $region36
        $region35: #{tpu_custom_call.1} parent=27 // pred_region
          %s6136 = ssub.s32 128, 128
          %6137 = vsyncadd %s6112, %s6136
          %s6138 = smul.addr %s21, 128
          %s6139 = scalar_lea.hbm %s3, %s6138
          %s6141 = sshll.u32 %s6115, 4
          %s6142 = int_to_ptr.vmem [resolvable:$true] %s6141
          %6144 = dma.vmem_to_hbm [thread:$0]  %s6142, 128, %s6139, %s6112
        $region36: #{tpu_custom_call.1} parent=27 // pred_fallthru
          _
      $region28: #{tpu_custom_call.1} parent=5 // pred_fallthru
        _
      %p6145 = scmp.le.s32.totalorder 2, %s16
      // Predicated region
      $region37: #{tpu_custom_call.1} parent=5 // pred_check
        %p6146 = pneg %p6145
      $region38: #{tpu_custom_call.1} parent=5 // pred_check_branch
        %6148 = sbr.rel (%p6146) target = $region40
      $region39: #{tpu_custom_call.1} parent=5 // pred_region
        %s6149 = ssub.s32 %s16, 2
        // Predicated region
        $region41: #{tpu_custom_call.1} parent=39 // pred_check
          %p6150 = pneg %p92
        $region42: #{tpu_custom_call.1} parent=39 // pred_check_branch
          %6152 = sbr.rel (%p6150) target = $region44
        $region43: #{tpu_custom_call.1} parent=39 // pred_region
          %s6153 = sand.u32 %s77, 1
          %s6154 = scalar_lea.sflag [#allocation4], %s6153
          %s6155 = sand.u32 %s77, 1
          %s6156 = smul.addr %s6155, 128
          %s6157 = scalar_lea.vmem [#allocation3], %s6156
          %6158 = dma.done %s6154, 2048
        $region44: #{tpu_custom_call.1} parent=39 // pred_fallthru
          _
        // Predicated region
        $region45: #{tpu_custom_call.1} parent=39 // pred_check
          %p6159 = pneg %p118
        $region46: #{tpu_custom_call.1} parent=39 // pred_check_branch
          %6161 = sbr.rel (%p6159) target = $region48
        $region47: #{tpu_custom_call.1} parent=39 // pred_region
          %s6162 = sand.u32 %s103, 1
          %s6163 = scalar_lea.sflag [#allocation6], %s6162
          %s6164 = sand.u32 %s103, 1
          %s6165 = smul.addr %s6164, 8
          %s6166 = scalar_lea.vmem [#allocation5], %s6165
          %6167 = dma.done %s6163, 128
        $region48: #{tpu_custom_call.1} parent=39 // pred_fallthru
          _
      $region40: #{tpu_custom_call.1} parent=5 // pred_fallthru
        _
    $region6: #{tpu_custom_call.1} parent=1 // loop_footer
      %s20 = sadd.s32 1, %s16
    $region7: #{tpu_custom_call.1} parent=1 // loop_footer_branch
      %15 = sbr.rel target = $region3
    $region8: #{tpu_custom_call.1} parent=1 // loop_exit
      _
    %6168 = vsyncpa [#allocation4], 1
    %s6169 = scalar_lea.sflag [#allocation4], 1
    %6170 = vsyncpa %s6169, 1
    %6171 = vsyncpa [#allocation6], 1
    %s6172 = scalar_lea.sflag [#allocation6], 1
    %6173 = vsyncpa %s6172, 1

</llo_original>
